<compile_context>
chip_gen: v6e
topology: v6e:2x2x1
jax: 0.10.0
libtpu: 0.0.40
codegen_flags: <defaults>
</compile_context>

<pallas_src>
import functools

import jax
import jax.numpy as jnp
from jax.experimental import pallas as pl
from jax.experimental.pallas import tpu as pltpu

_LANE = 128
_TILE_M = 512            # adj row-block: big enough to amortize grid-step overhead,
                         # and Np >= 1024 still gives >= 2 parallel blocks for v7x's 2 TCs
_MiB = 1024 * 1024


def _round_up(x, m):
    return (x + m - 1) // m * m


def padded_nodes(n):
    """Node count rounded up so the SpMM grid tiles evenly."""
    return _round_up(max(n, _TILE_M), _TILE_M)


def _vmem_capacity_bytes():
    try:
        cap = getattr(pltpu.get_tpu_info(), "vmem_capacity_bytes", None)
        if cap:
            return int(cap)
    except Exception:
        pass
    return 64 * _MiB     # conservative default (v7x per-TensorCore physical VMEM)


# Scoped-VMEM budget we plan against and request (headroom left for the compiler).
_VMEM_BUDGET = int(_vmem_capacity_bytes() * 0.7)


def _pick_tile_k(np_nodes):
    """Largest reduction tile that divides Np and keeps 2x adj buffers small."""
    for tk in (2048, 1024, 512):
        if np_nodes % tk == 0 and 2 * _TILE_M * tk * 2 <= _VMEM_BUDGET // 4:
            return tk
    return _TILE_M


def _pick_dense_rows(np_nodes, k_dim, n_dim):
    """Largest row tile for the x@W1 matmul that divides Np and fits VMEM."""
    for rows in (4096, 2048, 1024, 512):
        if np_nodes % rows != 0:
            continue
        need = 2 * rows * k_dim * 2 + 2 * rows * n_dim * 2 + 2 * k_dim * n_dim * 2
        if need <= _VMEM_BUDGET // 2:
            return rows
    return _TILE_M


def _support_resident(np_nodes, hp, cp, tile_k):
    """Can the full support matrix [Np, Hp] (bf16) stay VMEM-resident?"""
    fixed = (2 * _TILE_M * tile_k * 2                 # double-buffered adj tiles
             + _TILE_M * hp * 4                       # f32 accumulator scratch
             + 2 * _TILE_M * max(hp * 2, cp * 4)      # double-buffered output tile
             + 2 * hp * cp * 4                        # resident W2 (layer 2)
             + 4 * _MiB)                              # headroom
    # assume the resident block is still double-buffered by the pipeline (worst case)
    return fixed + 2 * np_nodes * hp * 2 <= _VMEM_BUDGET


# ---------------------------------------------------------------------------
# kernel 1: dense support matmul  out[i-block] = x[i-block] @ w   (bf16 x bf16 -> f32)
# ---------------------------------------------------------------------------
def _dense_matmul_kernel(x_ref, w_ref, out_ref):
    out_ref[...] = jnp.dot(
        x_ref[...], w_ref[...], preferred_element_type=jnp.float32
    ).astype(out_ref.dtype)


def _dense_matmul(x_bf16, w_bf16):
    m, k = x_bf16.shape
    n = w_bf16.shape[1]
    rows = _pick_dense_rows(m, k, n)
    return pl.pallas_call(
        _dense_matmul_kernel,
        out_shape=jax.ShapeDtypeStruct((m, n), jnp.bfloat16),
        grid=(m // rows,),
        in_specs=[
            pl.BlockSpec((rows, k), lambda i: (i, 0)),
            pl.BlockSpec((k, n), lambda i: (0, 0)),      # W resident
        ],
        out_specs=pl.BlockSpec((rows, n), lambda i: (i, 0)),
        compiler_params=pltpu.CompilerParams(
            dimension_semantics=("parallel",),
            vmem_limit_bytes=_VMEM_BUDGET,
        ),
    )(x_bf16, w_bf16)


# ---------------------------------------------------------------------------
# shared reduction body:  acc += adj_tile @ s_block    (f32 accumulate)
# ---------------------------------------------------------------------------
def _accumulate(adj_ref, s_ref, acc_ref, *, tile_k, resident):
    k = pl.program_id(1)

    @pl.when(k == 0)
    def _():
        acc_ref[...] = jnp.zeros_like(acc_ref)

    if resident:
        k0 = pl.multiple_of(k * tile_k, tile_k)
        s_blk = s_ref[pl.ds(k0, tile_k), :]
    else:
        s_blk = s_ref[...]
    acc_ref[...] += jnp.dot(adj_ref[...], s_blk, preferred_element_type=jnp.float32)


# ---------------------------------------------------------------------------
# kernel 2 (layer 1): out = relu(adj @ s1 + b1)
# ---------------------------------------------------------------------------
def _spmm_relu_kernel(adj_ref, s_ref, b_ref, out_ref, acc_ref, *, tile_k, resident):
    _accumulate(adj_ref, s_ref, acc_ref, tile_k=tile_k, resident=resident)

    @pl.when(pl.program_id(1) == pl.num_programs(1) - 1)
    def _():
        out_ref[...] = jnp.maximum(acc_ref[...] + b_ref[...], 0.0).astype(out_ref.dtype)


def _spmm_relu(adj_p, s1, b1_p, *, tile_k, resident):
    np_nodes = adj_p.shape[0]
    hp = s1.shape[1]
    if resident:
        s_spec = pl.BlockSpec((np_nodes, hp), lambda i, k: (0, 0))      # resident support
    else:
        s_spec = pl.BlockSpec((tile_k, hp), lambda i, k: (k, 0))        # streamed fallback
    kernel = functools.partial(_spmm_relu_kernel, tile_k=tile_k, resident=resident)
    return pl.pallas_call(
        kernel,
        out_shape=jax.ShapeDtypeStruct((np_nodes, hp), jnp.bfloat16),
        grid=(np_nodes // _TILE_M, np_nodes // tile_k),
        in_specs=[
            pl.BlockSpec((_TILE_M, tile_k), lambda i, k: (i, k)),       # adj tile (bf16)
            s_spec,
            pl.BlockSpec((1, hp), lambda i, k: (0, 0)),                 # bias (resident)
        ],
        out_specs=pl.BlockSpec((_TILE_M, hp), lambda i, k: (i, 0)),
        scratch_shapes=[pltpu.VMEM((_TILE_M, hp), jnp.float32)],
        compiler_params=pltpu.CompilerParams(
            dimension_semantics=("parallel", "arbitrary"),
            vmem_limit_bytes=_VMEM_BUDGET,
        ),
    )(adj_p, s1, b1_p)


# ---------------------------------------------------------------------------
# kernel 3 (layer 2, fused): out = log_softmax((adj @ h) @ W2 + b2)
#   accumulate t = adj @ h in f32 scratch; at k == last apply W2, bias, softmax.
# ---------------------------------------------------------------------------
def _spmm_fc_logsoftmax_kernel(adj_ref, h_ref, w2_ref, b2_ref, out_ref, acc_ref,
                               *, tile_k, resident, valid_cols):
    _accumulate(adj_ref, h_ref, acc_ref, tile_k=tile_k, resident=resident)

    @pl.when(pl.program_id(1) == pl.num_programs(1) - 1)
    def _():
        logits = jnp.dot(
            acc_ref[...], w2_ref[...], preferred_element_type=jnp.float32
        ) + b2_ref[...]
        # log_softmax over the first `valid_cols` columns (rest is lane padding)
        col = jax.lax.broadcasted_iota(jnp.int32, logits.shape, 1)
        logits = jnp.where(col < valid_cols, logits, jnp.float32(-1e30))
        m = jnp.max(logits, axis=-1, keepdims=True)
        z = logits - m
        lse = jnp.log(jnp.sum(jnp.exp(z), axis=-1, keepdims=True))
        out_ref[...] = (z - lse).astype(out_ref.dtype)


def _spmm_fc_logsoftmax(adj_p, h, w2_p, b2_p, *, tile_k, resident, valid_cols):
    np_nodes = adj_p.shape[0]
    hp = h.shape[1]
    cp = w2_p.shape[1]
    if resident:
        h_spec = pl.BlockSpec((np_nodes, hp), lambda i, k: (0, 0))
    else:
        h_spec = pl.BlockSpec((tile_k, hp), lambda i, k: (k, 0))
    kernel = functools.partial(
        _spmm_fc_logsoftmax_kernel, tile_k=tile_k, resident=resident,
        valid_cols=valid_cols)
    return pl.pallas_call(
        kernel,
        out_shape=jax.ShapeDtypeStruct((np_nodes, cp), jnp.float32),
        grid=(np_nodes // _TILE_M, np_nodes // tile_k),
        in_specs=[
            pl.BlockSpec((_TILE_M, tile_k), lambda i, k: (i, k)),       # adj tile (bf16)
            h_spec,
            pl.BlockSpec((hp, cp), lambda i, k: (0, 0)),                # W2 (resident)
            pl.BlockSpec((1, cp), lambda i, k: (0, 0)),                 # b2 (resident)
        ],
        out_specs=pl.BlockSpec((_TILE_M, cp), lambda i, k: (i, 0)),
        scratch_shapes=[pltpu.VMEM((_TILE_M, hp), jnp.float32)],
        compiler_params=pltpu.CompilerParams(
            dimension_semantics=("parallel", "arbitrary"),
            vmem_limit_bytes=_VMEM_BUDGET,
        ),
    )(adj_p, h, w2_p, b2_p)


# ---------------------------------------------------------------------------
# graph preparation (hoisted out of the per-call path: do this ONCE per graph)
# ---------------------------------------------------------------------------
def prepare_adj(adj, n_pad):
    """Pad + cast the (row-normalized) adjacency to bf16 once, outside the forward."""
    n = adj.shape[0]
    return jnp.pad(adj.astype(jnp.bfloat16), ((0, n_pad - n), (0, n_pad - n)))


# ---------------------------------------------------------------------------
# forward
# ---------------------------------------------------------------------------
@jax.jit
def gcn_rand_labeled_forward(x_in, adj_p, w1, b1, w2, b2):
    """x_in: [N, Fin] features already concatenated with the label one-hots.
    adj_p: [Np, Np] bf16, already padded via prepare_adj (Np = padded_nodes(N))."""
    n, fin = x_in.shape
    np_nodes = adj_p.shape[0]
    h_dim = w1.shape[1]
    c_dim = w2.shape[1]
    fp = _round_up(fin, _LANE)
    hp = _round_up(h_dim, _LANE)
    cp = _round_up(c_dim, _LANE)

    tile_k = _pick_tile_k(np_nodes)
    resident = _support_resident(np_nodes, hp, cp, tile_k)

    # pad small per-call tensors to tiled / lane-dense shapes
    x_p = jnp.pad(x_in.astype(jnp.bfloat16), ((0, np_nodes - n), (0, fp - fin)))
    w1_p = jnp.pad(w1.astype(jnp.bfloat16), ((0, fp - fin), (0, hp - h_dim)))
    b1_p = jnp.pad(b1.reshape(1, h_dim).astype(jnp.float32), ((0, 0), (0, hp - h_dim)))
    w2_p = jnp.pad(w2.astype(jnp.float32), ((0, hp - h_dim), (0, cp - c_dim)))
    b2_p = jnp.pad(b2.reshape(1, c_dim).astype(jnp.float32), ((0, 0), (0, cp - c_dim)))

    # --- layer 1: support matmul + GraphConvolution + ReLU ---------------------
    s1 = _dense_matmul(x_p, w1_p)                                        # [Np, Hp] bf16
    h = _spmm_relu(adj_p, s1, b1_p, tile_k=tile_k, resident=resident)    # [Np, Hp] bf16
    # TODO(synk): training-mode stochastic dropout not reproduced (eval-mode identity).

    # --- layer 2: GraphConvolution with fused W2 + bias + log_softmax ----------
    out = _spmm_fc_logsoftmax(adj_p, h, w2_p, b2_p, tile_k=tile_k,
                              resident=resident, valid_cols=c_dim)       # [Np, Cp] f32
    return out[:n, :c_dim]


def build_feats_pretrain(labels, idx_labeled, nnode, nclass):
    """Replicates the torch pre_train feature construction (plain-JAX glue)."""
    feats_idx = jnp.full((nnode,), nclass + 2, dtype=jnp.int32)
    feats_idx = feats_idx.at[idx_labeled].set(labels[idx_labeled])
    # F.one_hot infers num_classes = max+1 = nclass+3, then slice [:, :nclass]
    onehot = jax.nn.one_hot(feats_idx, nclass + 3, dtype=jnp.float32)[:, :nclass]
    return onehot  # [N, C]; zeros for unlabeled nodes


def _reference(x_in, adj, w1, b1, w2, b2):
    h = jnp.maximum(adj @ (x_in @ w1) + b1, 0.0)
    logits = adj @ (h @ w2) + b2
    return jax.nn.log_softmax(logits, axis=1)


if __name__ == "__main__":
    key = jax.random.PRNGKey(0)

    # small, forward-consistent shapes
    nnode = 16        # N nodes
    nfeat_raw = 8     # raw node-feature dim
    nclass = 4        # labels.max()+1 == nclass, so gc1 in-dim = nfeat_raw + nclass
    nhid = 32

    k_x, k_adj, k_lab, k_w1, k_b1, k_w2, k_b2 = jax.random.split(key, 7)

    x = jax.random.normal(k_x, (nnode, nfeat_raw), dtype=jnp.float32)

    # symmetric row-normalized adjacency with self-loops
    a = (jax.random.uniform(k_adj, (nnode, nnode)) > 0.7).astype(jnp.float32)
    a = jnp.maximum(a, a.T) + jnp.eye(nnode, dtype=jnp.float32)
    adj = a / jnp.sum(a, axis=1, keepdims=True)

    labels = jax.random.randint(k_lab, (nnode,), 0, nclass, dtype=jnp.int32)
    idx_labeled = jnp.arange(0, nnode, 2, dtype=jnp.int32)  # half the nodes labeled

    # GraphConvolution params: uniform(-stdv, stdv), stdv = 1/sqrt(out_features)
    nfeat = nfeat_raw + nclass  # nfeat += labels.max()+1 (non-baseline branch)
    stdv1 = 1.0 / jnp.sqrt(jnp.float32(nhid))
    stdv2 = 1.0 / jnp.sqrt(jnp.float32(nclass))
    w1 = jax.random.uniform(k_w1, (nfeat, nhid), jnp.float32, -stdv1, stdv1)
    b1 = jax.random.uniform(k_b1, (1, nhid), jnp.float32, -stdv1, stdv1)
    w2 = jax.random.uniform(k_w2, (nhid, nclass), jnp.float32, -stdv2, stdv2)
    b2 = jax.random.uniform(k_b2, (1, nclass), jnp.float32, -stdv2, stdv2)

    # glue: feats construction + concat (pre_train path, rand_nums = 1)
    feats = build_feats_pretrain(labels, idx_labeled, nnode, nclass)    # [N, C]
    x_concat = jnp.concatenate([x, feats], axis=1)                       # [N, nfeat]

    # hoisted: pad + bf16-cast the adjacency once per graph, outside the forward
    adj_p = prepare_adj(adj, padded_nodes(nnode))

    out = gcn_rand_labeled_forward(x_concat, adj_p, w1, b1, w2, b2)
    jax.block_until_ready(out)

    # sanity 1: rows of log_softmax exponentiate to the probability simplex
    row_sums = jnp.sum(jnp.exp(out), axis=1)
    assert out.shape == (nnode, nclass)
    assert bool(jnp.all(jnp.abs(row_sums - 1.0) < 1e-4))

    # sanity 2: matches the plain-JAX f32 reference (loose tol: adj/supports are bf16)
    ref = _reference(x_concat, adj, w1, b1, w2, b2)
    assert bool(jnp.max(jnp.abs(out - ref)) < 5e-2)

    print("KERNEL_OK")
</pallas_src>

<mosaic_0001>
module attributes {stable_mosaic.version = 11 : i64} {
  func.func @_dense_matmul_kernel(%arg0: i32, %arg1: memref<512x128xbf16, #tpu.memory_space<vmem>>, %arg2: memref<128x128xbf16, #tpu.memory_space<vmem>>, %arg3: memref<512x128xbf16, #tpu.memory_space<vmem>>) attributes {dimension_semantics = [#tpu.dimension_semantics<parallel>], iteration_bounds = array<i64: 1>, scalar_prefetch = 0 : i64, scratch_operands = 0 : i64, tpu.core_type = #tpu.core_type<tc>, window_params = [{transform_indices = @transform_0, window_bounds = array<i64: 512, 128>}, {pipeline_mode = #tpu.pipeline_mode<synchronous>, transform_indices = @transform_1, window_bounds = array<i64: 128, 128>}, {transform_indices = @transform_2, window_bounds = array<i64: 512, 128>}]} {
    %c0 = arith.constant 0 : index
    %c0_0 = arith.constant 0 : index
    %0 = vector.load %arg1[%c0, %c0_0] : memref<512x128xbf16, #tpu.memory_space<vmem>>, vector<512x128xbf16>
    %c0_1 = arith.constant 0 : index
    %c0_2 = arith.constant 0 : index
    %1 = vector.load %arg2[%c0_1, %c0_2] : memref<128x128xbf16, #tpu.memory_space<vmem>>, vector<128x128xbf16>
    %cst = arith.constant dense<0.000000e+00> : vector<512x128xf32>
    %2 = tpu.matmul %0, %1, %cst {dimension_numbers = #tpu.dot_dimension_numbers<[1], [0], [0], [1], [0, 0, 1, 1], [], []>} : vector<512x128xbf16>, vector<128x128xbf16>, vector<512x128xf32> -> vector<512x128xf32>
    %3 = arith.truncf %2 : vector<512x128xf32> to vector<512x128xbf16>
    %c0_3 = arith.constant 0 : index
    %c0_4 = arith.constant 0 : index
    %4 = vector.load %arg3[%c0_3, %c0_4] : memref<512x128xbf16, #tpu.memory_space<vmem>>, vector<512x128xbf16>
    tpu.vector_store %arg3[%c0_3, %c0_4], %3 {strides = array<i32>} : memref<512x128xbf16, #tpu.memory_space<vmem>>, vector<512x128xbf16>,
    return
  }
  func.func @transform_0(%arg0: i32) -> (i32, i32) {
    %c0_i32 = arith.constant 0 : i32
    %c0_i32_0 = arith.constant 0 : i32
    return %arg0, %c0_i32 : i32, i32
  }
  func.func @transform_1(%arg0: i32) -> (i32, i32) {
    %c0_i32 = arith.constant 0 : i32
    %c0_i32_0 = arith.constant 0 : i32
    %c0_i32_1 = arith.constant 0 : i32
    return %c0_i32, %c0_i32_0 : i32, i32
  }
  func.func @transform_2(%arg0: i32) -> (i32, i32) {
    %c0_i32 = arith.constant 0 : i32
    %c0_i32_0 = arith.constant 0 : i32
    return %arg0, %c0_i32 : i32, i32
  }
}

module attributes {stable_mosaic.version = 11 : i64} {
  func.func @_spmm_relu_kernel(%arg0: i32, %arg1: i32, %arg2: memref<512x512xbf16, #tpu.memory_space<vmem>>, %arg3: memref<512x128xbf16, #tpu.memory_space<vmem>>, %arg4: memref<1x128xf32, #tpu.memory_space<vmem>>, %arg5: memref<512x128xbf16, #tpu.memory_space<vmem>>, %arg6: memref<512x128xf32, #tpu.memory_space<vmem>>) attributes {dimension_semantics = [#tpu.dimension_semantics<parallel>, #tpu.dimension_semantics<arbitrary>], iteration_bounds = array<i64: 1, 1>, scalar_prefetch = 0 : i64, scratch_operands = 1 : i64, tpu.core_type = #tpu.core_type<tc>, window_params = [{transform_indices = @transform_0, window_bounds = array<i64: 512, 512>}, {pipeline_mode = #tpu.pipeline_mode<synchronous>, transform_indices = @transform_1, window_bounds = array<i64: 512, 128>}, {pipeline_mode = #tpu.pipeline_mode<synchronous>, transform_indices = @transform_2, window_bounds = array<i64: 1, 128>}, {transform_indices = @transform_3, window_bounds = array<i64: 512, 128>}]} {
    %c0_i32 = arith.constant 0 : i32
    %0 = arith.cmpi eq, %arg1, %c0_i32 : i32
    %1 = arith.extui %0 : i1 to i32
    %c0_i32_0 = arith.constant 0 : i32
    %2 = arith.cmpi ne, %1, %c0_i32_0 : i32
    scf.if %2 {
      %cst_9 = arith.constant 0.000000e+00 : f32
      %15 = vector.broadcast %cst_9 : f32 to vector<512x128xf32>
      %c0_10 = arith.constant 0 : index
      %c0_11 = arith.constant 0 : index
      %16 = vector.load %arg6[%c0_10, %c0_11] : memref<512x128xf32, #tpu.memory_space<vmem>>, vector<512x128xf32>
      tpu.vector_store %arg6[%c0_10, %c0_11], %15 {strides = array<i32>} : memref<512x128xf32, #tpu.memory_space<vmem>>, vector<512x128xf32>,
    } else {
    }
    %c512_i32 = arith.constant 512 : i32
    %3 = arith.muli %arg1, %c512_i32 : i32
    %4 = tpu.assume_multiple %3, 512 : i32
    %5 = arith.index_cast %4 : i32 to index
    %c0 = arith.constant 0 : index
    %6 = vector.load %arg3[%5, %c0] : memref<512x128xbf16, #tpu.memory_space<vmem>>, vector<512x128xbf16>
    %c0_1 = arith.constant 0 : index
    %c0_2 = arith.constant 0 : index
    %7 = vector.load %arg6[%c0_1, %c0_2] : memref<512x128xf32, #tpu.memory_space<vmem>>, vector<512x128xf32>
    %c0_3 = arith.constant 0 : index
    %c0_4 = arith.constant 0 : index
    %8 = vector.load %arg2[%c0_3, %c0_4] : memref<512x512xbf16, #tpu.memory_space<vmem>>, vector<512x512xbf16>
    %cst = arith.constant dense<0.000000e+00> : vector<512x128xf32>
    %9 = tpu.matmul %8, %6, %cst {dimension_numbers = #tpu.dot_dimension_numbers<[1], [0], [0], [1], [0, 0, 1, 1], [], []>} : vector<512x512xbf16>, vector<512x128xbf16>, vector<512x128xf32> -> vector<512x128xf32>
    %10 = arith.addf %7, %9 : vector<512x128xf32>
    %c0_5 = arith.constant 0 : index
    %c0_6 = arith.constant 0 : index
    %11 = vector.load %arg6[%c0_5, %c0_6] : memref<512x128xf32, #tpu.memory_space<vmem>>, vector<512x128xf32>
    tpu.vector_store %arg6[%c0_5, %c0_6], %10 {strides = array<i32>} : memref<512x128xf32, #tpu.memory_space<vmem>>, vector<512x128xf32>,
    %c0_i32_7 = arith.constant 0 : i32
    %12 = arith.cmpi eq, %arg1, %c0_i32_7 : i32
    %13 = arith.extui %12 : i1 to i32
    %c0_i32_8 = arith.constant 0 : i32
    %14 = arith.cmpi ne, %13, %c0_i32_8 : i32
    scf.if %14 {
      %c0_9 = arith.constant 0 : index
      %c0_10 = arith.constant 0 : index
      %15 = vector.load %arg6[%c0_9, %c0_10] : memref<512x128xf32, #tpu.memory_space<vmem>>, vector<512x128xf32>
      %c0_11 = arith.constant 0 : index
      %c0_12 = arith.constant 0 : index
      %16 = vector.load %arg4[%c0_11, %c0_12] : memref<1x128xf32, #tpu.memory_space<vmem>>, vector<1x128xf32>
      %17 = vector.broadcast %16 : vector<1x128xf32> to vector<512x128xf32>
      %18 = arith.addf %15, %17 : vector<512x128xf32>
      %cst_13 = arith.constant 0.000000e+00 : f32
      %19 = vector.broadcast %cst_13 : f32 to vector<512x128xf32>
      %20 = arith.maximumf %18, %19 : vector<512x128xf32>
      %21 = arith.truncf %20 : vector<512x128xf32> to vector<512x128xbf16>
      %c0_14 = arith.constant 0 : index
      %c0_15 = arith.constant 0 : index
      %22 = vector.load %arg5[%c0_14, %c0_15] : memref<512x128xbf16, #tpu.memory_space<vmem>>, vector<512x128xbf16>
      tpu.vector_store %arg5[%c0_14, %c0_15], %21 {strides = array<i32>} : memref<512x128xbf16, #tpu.memory_space<vmem>>, vector<512x128xbf16>,
    } else {
    }
    return
  }
  func.func @transform_0(%arg0: i32, %arg1: i32) -> (i32, i32) {
    %c0_i32 = arith.constant 0 : i32
    return %arg0, %arg1 : i32, i32
  }
  func.func @transform_1(%arg0: i32, %arg1: i32) -> (i32, i32) {
    %c0_i32 = arith.constant 0 : i32
    %c0_i32_0 = arith.constant 0 : i32
    %c0_i32_1 = arith.constant 0 : i32
    return %c0_i32, %c0_i32_0 : i32, i32
  }
  func.func @transform_2(%arg0: i32, %arg1: i32) -> (i32, i32) {
    %c0_i32 = arith.constant 0 : i32
    %c0_i32_0 = arith.constant 0 : i32
    %c0_i32_1 = arith.constant 0 : i32
    return %c0_i32, %c0_i32_0 : i32, i32
  }
  func.func @transform_3(%arg0: i32, %arg1: i32) -> (i32, i32) {
    %c0_i32 = arith.constant 0 : i32
    %c0_i32_0 = arith.constant 0 : i32
    return %arg0, %c0_i32 : i32, i32
  }
}

module attributes {stable_mosaic.version = 11 : i64} {
  func.func @_spmm_fc_logsoftmax_kernel(%arg0: i32, %arg1: i32, %arg2: memref<512x512xbf16, #tpu.memory_space<vmem>>, %arg3: memref<512x128xbf16, #tpu.memory_space<vmem>>, %arg4: memref<128x128xf32, #tpu.memory_space<vmem>>, %arg5: memref<1x128xf32, #tpu.memory_space<vmem>>, %arg6: memref<512x128xf32, #tpu.memory_space<vmem>>, %arg7: memref<512x128xf32, #tpu.memory_space<vmem>>) attributes {dimension_semantics = [#tpu.dimension_semantics<parallel>, #tpu.dimension_semantics<arbitrary>], iteration_bounds = array<i64: 1, 1>, scalar_prefetch = 0 : i64, scratch_operands = 1 : i64, tpu.core_type = #tpu.core_type<tc>, window_params = [{transform_indices = @transform_0, window_bounds = array<i64: 512, 512>}, {pipeline_mode = #tpu.pipeline_mode<synchronous>, transform_indices = @transform_1, window_bounds = array<i64: 512, 128>}, {pipeline_mode = #tpu.pipeline_mode<synchronous>, transform_indices = @transform_2, window_bounds = array<i64: 128, 128>}, {pipeline_mode = #tpu.pipeline_mode<synchronous>, transform_indices = @transform_3, window_bounds = array<i64: 1, 128>}, {transform_indices = @transform_4, window_bounds = array<i64: 512, 128>}]} {
    %c0_i32 = arith.constant 0 : i32
    %0 = arith.cmpi eq, %arg1, %c0_i32 : i32
    %1 = arith.extui %0 : i1 to i32
    %c0_i32_0 = arith.constant 0 : i32
    %2 = arith.cmpi ne, %1, %c0_i32_0 : i32
    scf.if %2 {
      %cst_9 = arith.constant 0.000000e+00 : f32
      %15 = vector.broadcast %cst_9 : f32 to vector<512x128xf32>
      %c0_10 = arith.constant 0 : index
      %c0_11 = arith.constant 0 : index
      %16 = vector.load %arg7[%c0_10, %c0_11] : memref<512x128xf32, #tpu.memory_space<vmem>>, vector<512x128xf32>
      tpu.vector_store %arg7[%c0_10, %c0_11], %15 {strides = array<i32>} : memref<512x128xf32, #tpu.memory_space<vmem>>, vector<512x128xf32>,
    } else {
    }
    %c512_i32 = arith.constant 512 : i32
    %3 = arith.muli %arg1, %c512_i32 : i32
    %4 = tpu.assume_multiple %3, 512 : i32
    %5 = arith.index_cast %4 : i32 to index
    %c0 = arith.constant 0 : index
    %6 = vector.load %arg3[%5, %c0] : memref<512x128xbf16, #tpu.memory_space<vmem>>, vector<512x128xbf16>
    %c0_1 = arith.constant 0 : index
    %c0_2 = arith.constant 0 : index
    %7 = vector.load %arg7[%c0_1, %c0_2] : memref<512x128xf32, #tpu.memory_space<vmem>>, vector<512x128xf32>
    %c0_3 = arith.constant 0 : index
    %c0_4 = arith.constant 0 : index
    %8 = vector.load %arg2[%c0_3, %c0_4] : memref<512x512xbf16, #tpu.memory_space<vmem>>, vector<512x512xbf16>
    %cst = arith.constant dense<0.000000e+00> : vector<512x128xf32>
    %9 = tpu.matmul %8, %6, %cst {dimension_numbers = #tpu.dot_dimension_numbers<[1], [0], [0], [1], [0, 0, 1, 1], [], []>} : vector<512x512xbf16>, vector<512x128xbf16>, vector<512x128xf32> -> vector<512x128xf32>
    %10 = arith.addf %7, %9 : vector<512x128xf32>
    %c0_5 = arith.constant 0 : index
    %c0_6 = arith.constant 0 : index
    %11 = vector.load %arg7[%c0_5, %c0_6] : memref<512x128xf32, #tpu.memory_space<vmem>>, vector<512x128xf32>
    tpu.vector_store %arg7[%c0_5, %c0_6], %10 {strides = array<i32>} : memref<512x128xf32, #tpu.memory_space<vmem>>, vector<512x128xf32>,
    %c0_i32_7 = arith.constant 0 : i32
    %12 = arith.cmpi eq, %arg1, %c0_i32_7 : i32
    %13 = arith.extui %12 : i1 to i32
    %c0_i32_8 = arith.constant 0 : i32
    %14 = arith.cmpi ne, %13, %c0_i32_8 : i32
    scf.if %14 {
      %c0_9 = arith.constant 0 : index
      %c0_10 = arith.constant 0 : index
      %15 = vector.load %arg7[%c0_9, %c0_10] : memref<512x128xf32, #tpu.memory_space<vmem>>, vector<512x128xf32>
      %c0_11 = arith.constant 0 : index
      %c0_12 = arith.constant 0 : index
      %16 = vector.load %arg4[%c0_11, %c0_12] : memref<128x128xf32, #tpu.memory_space<vmem>>, vector<128x128xf32>
      %cst_13 = arith.constant dense<0.000000e+00> : vector<512x128xf32>
      %17 = tpu.matmul %15, %16, %cst_13 {dimension_numbers = #tpu.dot_dimension_numbers<[1], [0], [0], [1], [0, 0, 1, 1], [], []>} : vector<512x128xf32>, vector<128x128xf32>, vector<512x128xf32> -> vector<512x128xf32>
      %c0_14 = arith.constant 0 : index
      %c0_15 = arith.constant 0 : index
      %18 = vector.load %arg5[%c0_14, %c0_15] : memref<1x128xf32, #tpu.memory_space<vmem>>, vector<1x128xf32>
      %19 = vector.broadcast %18 : vector<1x128xf32> to vector<512x128xf32>
      %20 = arith.addf %17, %19 : vector<512x128xf32>
      %21 = tpu.iota {dimensions = array<i32: 1>} : vector<512x128xi32>
      %c4_i32 = arith.constant 4 : i32
      %22 = vector.broadcast %c4_i32 : i32 to vector<512x128xi32>
      %23 = arith.cmpi slt, %21, %22 : vector<512x128xi32>
      %cst_16 = arith.constant -1.000000e+30 : f32
      %24 = vector.broadcast %cst_16 : f32 to vector<512x128xf32>
      %25 = arith.select %23, %20, %24 : vector<512x128xi1>, vector<512x128xf32>
      %cst_17 = arith.constant dense<0xFF800000> : vector<512xf32>
      %26 = vector.multi_reduction <maximumf>, %25, %cst_17 [1] : vector<512x128xf32> to vector<512xf32>
      %27 = vector.shape_cast %26 : vector<512xf32> to vector<512x1xf32>
      %28 = vector.broadcast %27 : vector<512x1xf32> to vector<512x128xf32>
      %29 = arith.subf %25, %28 : vector<512x128xf32>
      %30 = math.exp %29 : vector<512x128xf32>
      %cst_18 = arith.constant dense<0.000000e+00> : vector<512xf32>
      %31 = vector.multi_reduction <add>, %30, %cst_18 [1] : vector<512x128xf32> to vector<512xf32>
      %32 = vector.shape_cast %31 : vector<512xf32> to vector<512x1xf32>
      %33 = math.log %32 : vector<512x1xf32>
      %34 = vector.broadcast %33 : vector<512x1xf32> to vector<512x128xf32>
      %35 = arith.subf %29, %34 : vector<512x128xf32>
      %c0_19 = arith.constant 0 : index
      %c0_20 = arith.constant 0 : index
      %36 = vector.load %arg6[%c0_19, %c0_20] : memref<512x128xf32, #tpu.memory_space<vmem>>, vector<512x128xf32>
      tpu.vector_store %arg6[%c0_19, %c0_20], %35 {strides = array<i32>} : memref<512x128xf32, #tpu.memory_space<vmem>>, vector<512x128xf32>,
    } else {
    }
    return
  }
  func.func @transform_0(%arg0: i32, %arg1: i32) -> (i32, i32) {
    %c0_i32 = arith.constant 0 : i32
    return %arg0, %arg1 : i32, i32
  }
  func.func @transform_1(%arg0: i32, %arg1: i32) -> (i32, i32) {
    %c0_i32 = arith.constant 0 : i32
    %c0_i32_0 = arith.constant 0 : i32
    %c0_i32_1 = arith.constant 0 : i32
    return %c0_i32, %c0_i32_0 : i32, i32
  }
  func.func @transform_2(%arg0: i32, %arg1: i32) -> (i32, i32) {
    %c0_i32 = arith.constant 0 : i32
    %c0_i32_0 = arith.constant 0 : i32
    %c0_i32_1 = arith.constant 0 : i32
    return %c0_i32, %c0_i32_0 : i32, i32
  }
  func.func @transform_3(%arg0: i32, %arg1: i32) -> (i32, i32) {
    %c0_i32 = arith.constant 0 : i32
    %c0_i32_0 = arith.constant 0 : i32
    %c0_i32_1 = arith.constant 0 : i32
    return %c0_i32, %c0_i32_0 : i32, i32
  }
  func.func @transform_4(%arg0: i32, %arg1: i32) -> (i32, i32) {
    %c0_i32 = arith.constant 0 : i32
    %c0_i32_0 = arith.constant 0 : i32
    return %arg0, %c0_i32 : i32, i32
  }
}

</mosaic_0001>

<llo_original>
// kernel: gcn_rand_labeled_forward.3
$region0: #{gcn_rand_labeled_forward.3}
  #allocation0 [shape = 'u32[]', space=smem, size = 0x4, offset = 0x4, fixed_abs, tag = 'smem constant byte address 0x4 - core index']
  #allocation1 [shape = 'u32[144,128]{1,0:T(1,128)}', space=vmem, size = 0x12000, scoped, tag = 'internal scratch']
  %s0 = inlined_call_operand.vmem [shape: bf16[512,128], index: 0, kind: input, shape index: {}]
  %s1 = inlined_call_operand.vmem [shape: bf16[128,128], index: 1, kind: input, shape index: {}]
  %s2 = inlined_call_operand.vmem [shape: bf16[512,128], index: 2, kind: output, shape index: {}]
  %s3 = sld [smem:[#allocation0]]
  $region18: #{gcn_rand_labeled_forward.3} parent=0
    _
  %s5 = ssub.s32 1, %s3
  %s6 = scalar_select 0, %s5, %s3
  // Predicated region
  $region2: #{gcn_rand_labeled_forward.3} parent=0 // pred_check
    _
  $region3: #{gcn_rand_labeled_forward.3} parent=0 // pred_check_branch
    %8 = sbr.rel (0) target = $region5
  $region4: #{gcn_rand_labeled_forward.3} parent=0 // pred_region
    _
  $region5: #{gcn_rand_labeled_forward.3} parent=0 // pred_fallthru
    _
  // Predicated region
  $region6: #{gcn_rand_labeled_forward.3} parent=0 // pred_check
    _
  $region7: #{gcn_rand_labeled_forward.3} parent=0 // pred_check_branch
    %10 = sbr.rel (0) target = $region9
  $region8: #{gcn_rand_labeled_forward.3} parent=0 // pred_region
    _
  $region9: #{gcn_rand_labeled_forward.3} parent=0 // pred_fallthru
    _
  %v12 = vld [vmem:[%s0] sm:$0xf]
  %v13 = vld [vmem:[%s0 + $0x4] sm:$0xf]
  %v14 = vld [vmem:[%s0 + $0x8] sm:$0xf]
  %v15 = vld [vmem:[%s0 + $0xc] sm:$0xf]
  %v16 = vld [vmem:[%s0 + $0x10] sm:$0xf]
  %v17 = vld [vmem:[%s0 + $0x14] sm:$0xf]
  %v18 = vld [vmem:[%s0 + $0x18] sm:$0xf]
  %v19 = vld [vmem:[%s0 + $0x1c] sm:$0xf]
  %v20 = vld [vmem:[%s0 + $0x20] sm:$0xf]
  %v21 = vld [vmem:[%s0 + $0x24] sm:$0xf]
  %v22 = vld [vmem:[%s0 + $0x28] sm:$0xf]
  %v23 = vld [vmem:[%s0 + $0x2c] sm:$0xf]
  %v24 = vld [vmem:[%s0 + $0x30] sm:$0xf]
  %v25 = vld [vmem:[%s0 + $0x34] sm:$0xf]
  %v26 = vld [vmem:[%s0 + $0x38] sm:$0xf]
  %v27 = vld [vmem:[%s0 + $0x3c] sm:$0xf]
  %v28 = vld [vmem:[%s0 + $0x40] sm:$0xf]
  %v29 = vld [vmem:[%s0 + $0x44] sm:$0xf]
  %v30 = vld [vmem:[%s0 + $0x48] sm:$0xf]
  %v31 = vld [vmem:[%s0 + $0x4c] sm:$0xf]
  %v32 = vld [vmem:[%s0 + $0x50] sm:$0xf]
  %v33 = vld [vmem:[%s0 + $0x54] sm:$0xf]
  %v34 = vld [vmem:[%s0 + $0x58] sm:$0xf]
  %v35 = vld [vmem:[%s0 + $0x5c] sm:$0xf]
  %v36 = vld [vmem:[%s0 + $0x60] sm:$0xf]
  %v37 = vld [vmem:[%s0 + $0x64] sm:$0xf]
  %v38 = vld [vmem:[%s0 + $0x68] sm:$0xf]
  %v39 = vld [vmem:[%s0 + $0x6c] sm:$0xf]
  %v40 = vld [vmem:[%s0 + $0x70] sm:$0xf]
  %v41 = vld [vmem:[%s0 + $0x74] sm:$0xf]
  %v42 = vld [vmem:[%s0 + $0x78] sm:$0xf]
  %v43 = vld [vmem:[%s0 + $0x7c] sm:$0xf]
  %v44 = vld [vmem:[%s0 + $0x80] sm:$0xf]
  %v45 = vld [vmem:[%s0 + $0x84] sm:$0xf]
  %v46 = vld [vmem:[%s0 + $0x88] sm:$0xf]
  %v47 = vld [vmem:[%s0 + $0x8c] sm:$0xf]
  %v48 = vld [vmem:[%s0 + $0x90] sm:$0xf]
  %v49 = vld [vmem:[%s0 + $0x94] sm:$0xf]
  %v50 = vld [vmem:[%s0 + $0x98] sm:$0xf]
  %v51 = vld [vmem:[%s0 + $0x9c] sm:$0xf]
  %v52 = vld [vmem:[%s0 + $0xa0] sm:$0xf]
  %v53 = vld [vmem:[%s0 + $0xa4] sm:$0xf]
  %v54 = vld [vmem:[%s0 + $0xa8] sm:$0xf]
  %v55 = vld [vmem:[%s0 + $0xac] sm:$0xf]
  %v56 = vld [vmem:[%s0 + $0xb0] sm:$0xf]
  %v57 = vld [vmem:[%s0 + $0xb4] sm:$0xf]
  %v58 = vld [vmem:[%s0 + $0xb8] sm:$0xf]
  %v59 = vld [vmem:[%s0 + $0xbc] sm:$0xf]
  %v60 = vld [vmem:[%s0 + $0xc0] sm:$0xf]
  %v61 = vld [vmem:[%s0 + $0xc4] sm:$0xf]
  %v62 = vld [vmem:[%s0 + $0xc8] sm:$0xf]
  %v63 = vld [vmem:[%s0 + $0xcc] sm:$0xf]
  %v64 = vld [vmem:[%s0 + $0xd0] sm:$0xf]
  %v65 = vld [vmem:[%s0 + $0xd4] sm:$0xf]
  %v66 = vld [vmem:[%s0 + $0xd8] sm:$0xf]
  %v67 = vld [vmem:[%s0 + $0xdc] sm:$0xf]
  %v68 = vld [vmem:[%s0 + $0xe0] sm:$0xf]
  %v69 = vld [vmem:[%s0 + $0xe4] sm:$0xf]
  %v70 = vld [vmem:[%s0 + $0xe8] sm:$0xf]
  %v71 = vld [vmem:[%s0 + $0xec] sm:$0xf]
  %v72 = vld [vmem:[%s0 + $0xf0] sm:$0xf]
  %v73 = vld [vmem:[%s0 + $0xf4] sm:$0xf]
  %v74 = vld [vmem:[%s0 + $0xf8] sm:$0xf]
  %v75 = vld [vmem:[%s0 + $0xfc] sm:$0xf]
  %v76 = vld [vmem:[%s1] sm:$0xf]
  %v77 = vld [vmem:[%s1 + $0x4] sm:$0xf]
  %v78 = vld [vmem:[%s1 + $0x8] sm:$0xf]
  %v79 = vld [vmem:[%s1 + $0xc] sm:$0xf]
  %v80 = vld [vmem:[%s1 + $0x10] sm:$0xf]
  %v81 = vld [vmem:[%s1 + $0x14] sm:$0xf]
  %v82 = vld [vmem:[%s1 + $0x18] sm:$0xf]
  %v83 = vld [vmem:[%s1 + $0x1c] sm:$0xf]
  %v84 = vld [vmem:[%s1 + $0x20] sm:$0xf]
  %v85 = vld [vmem:[%s1 + $0x24] sm:$0xf]
  %v86 = vld [vmem:[%s1 + $0x28] sm:$0xf]
  %v87 = vld [vmem:[%s1 + $0x2c] sm:$0xf]
  %v88 = vld [vmem:[%s1 + $0x30] sm:$0xf]
  %v89 = vld [vmem:[%s1 + $0x34] sm:$0xf]
  %v90 = vld [vmem:[%s1 + $0x38] sm:$0xf]
  %v91 = vld [vmem:[%s1 + $0x3c] sm:$0xf]
  %v156 = vunpack.c.l.b16 %v12
  %v157 = vunpack.c.l.b16 %v13
  %v158 = vunpack.c.l.b16 %v14
  %v159 = vunpack.c.l.b16 %v15
  %v160 = vunpack.c.l.b16 %v16
  %v161 = vunpack.c.l.b16 %v17
  %v162 = vunpack.c.l.b16 %v18
  %v163 = vunpack.c.l.b16 %v19
  %v164 = vunpack.c.l.b16 %v20
  %v165 = vunpack.c.l.b16 %v21
  %v166 = vunpack.c.l.b16 %v22
  %v167 = vunpack.c.l.b16 %v23
  %v168 = vunpack.c.l.b16 %v24
  %v169 = vunpack.c.l.b16 %v25
  %v170 = vunpack.c.l.b16 %v26
  %v171 = vunpack.c.l.b16 %v27
  %v172 = vunpack.c.l.b16 %v28
  %v173 = vunpack.c.l.b16 %v29
  %v174 = vunpack.c.l.b16 %v30
  %v175 = vunpack.c.l.b16 %v31
  %v176 = vunpack.c.l.b16 %v32
  %v177 = vunpack.c.l.b16 %v33
  %v178 = vunpack.c.l.b16 %v34
  %v179 = vunpack.c.l.b16 %v35
  %v180 = vunpack.c.l.b16 %v36
  %v181 = vunpack.c.l.b16 %v37
  %v182 = vunpack.c.l.b16 %v38
  %v183 = vunpack.c.l.b16 %v39
  %v184 = vunpack.c.l.b16 %v40
  %v185 = vunpack.c.l.b16 %v41
  %v186 = vunpack.c.l.b16 %v42
  %v187 = vunpack.c.l.b16 %v43
  %v188 = vunpack.c.l.b16 %v44
  %v189 = vunpack.c.l.b16 %v45
  %v190 = vunpack.c.l.b16 %v46
  %v191 = vunpack.c.l.b16 %v47
  %v192 = vunpack.c.l.b16 %v48
  %v193 = vunpack.c.l.b16 %v49
  %v194 = vunpack.c.l.b16 %v50
  %v195 = vunpack.c.l.b16 %v51
  %v196 = vunpack.c.l.b16 %v52
  %v197 = vunpack.c.l.b16 %v53
  %v198 = vunpack.c.l.b16 %v54
  %v199 = vunpack.c.l.b16 %v55
  %v200 = vunpack.c.l.b16 %v56
  %v201 = vunpack.c.l.b16 %v57
  %v202 = vunpack.c.l.b16 %v58
  %v203 = vunpack.c.l.b16 %v59
  %v204 = vunpack.c.l.b16 %v60
  %v205 = vunpack.c.l.b16 %v61
  %v206 = vunpack.c.l.b16 %v62
  %v207 = vunpack.c.l.b16 %v63
  %v208 = vunpack.c.l.b16 %v64
  %v209 = vunpack.c.l.b16 %v65
  %v210 = vunpack.c.l.b16 %v66
  %v211 = vunpack.c.l.b16 %v67
  %v212 = vunpack.c.l.b16 %v68
  %v213 = vunpack.c.l.b16 %v69
  %v214 = vunpack.c.l.b16 %v70
  %v215 = vunpack.c.l.b16 %v71
  %v216 = vunpack.c.l.b16 %v72
  %v217 = vunpack.c.l.b16 %v73
  %v218 = vunpack.c.l.b16 %v74
  %v219 = vunpack.c.l.b16 %v75
  %v220 = vpack.c.b16 %v157, %v156
  %v221 = vpack.c.b16 %v159, %v158
  %v222 = vpack.c.b16 %v161, %v160
  %v223 = vpack.c.b16 %v163, %v162
  %v224 = vpack.c.b16 %v165, %v164
  %v225 = vpack.c.b16 %v167, %v166
  %v226 = vpack.c.b16 %v169, %v168
  %v227 = vpack.c.b16 %v171, %v170
  %v228 = vpack.c.b16 %v173, %v172
  %v229 = vpack.c.b16 %v175, %v174
  %v230 = vpack.c.b16 %v177, %v176
  %v231 = vpack.c.b16 %v179, %v178
  %v232 = vpack.c.b16 %v181, %v180
  %v233 = vpack.c.b16 %v183, %v182
  %v234 = vpack.c.b16 %v185, %v184
  %v235 = vpack.c.b16 %v187, %v186
  %v236 = vpack.c.b16 %v189, %v188
  %v237 = vpack.c.b16 %v191, %v190
  %v238 = vpack.c.b16 %v193, %v192
  %v239 = vpack.c.b16 %v195, %v194
  %v240 = vpack.c.b16 %v197, %v196
  %v241 = vpack.c.b16 %v199, %v198
  %v242 = vpack.c.b16 %v201, %v200
  %v243 = vpack.c.b16 %v203, %v202
  %v244 = vpack.c.b16 %v205, %v204
  %v245 = vpack.c.b16 %v207, %v206
  %v246 = vpack.c.b16 %v209, %v208
  %v247 = vpack.c.b16 %v211, %v210
  %v248 = vpack.c.b16 %v213, %v212
  %v249 = vpack.c.b16 %v215, %v214
  %v250 = vpack.c.b16 %v217, %v216
  %v251 = vpack.c.b16 %v219, %v218
  %v300 = vunpack.c.l.b16 %v76
  %v301 = vunpack.c.l.b16 %v77
  %v302 = vunpack.c.l.b16 %v78
  %v303 = vunpack.c.l.b16 %v79
  %v304 = vunpack.c.l.b16 %v80
  %v305 = vunpack.c.l.b16 %v81
  %v306 = vunpack.c.l.b16 %v82
  %v307 = vunpack.c.l.b16 %v83
  %v308 = vunpack.c.l.b16 %v84
  %v309 = vunpack.c.l.b16 %v85
  %v310 = vunpack.c.l.b16 %v86
  %v311 = vunpack.c.l.b16 %v87
  %v312 = vunpack.c.l.b16 %v88
  %v313 = vunpack.c.l.b16 %v89
  %v314 = vunpack.c.l.b16 %v90
  %v315 = vunpack.c.l.b16 %v91
  %v316 = vpack.c.b16 %v301, %v300
  %v317 = vpack.c.b16 %v303, %v302
  %v318 = vpack.c.b16 %v305, %v304
  %v319 = vpack.c.b16 %v307, %v306
  %v320 = vpack.c.b16 %v309, %v308
  %v321 = vpack.c.b16 %v311, %v310
  %v322 = vpack.c.b16 %v313, %v312
  %v323 = vpack.c.b16 %v315, %v314
  %332 = vmatprep.subr.bf16.mxu0 0
  %333 = vmatpush1.bf16.msra.mxu0 %v323
  %334 = vmatprep.subr.bf16.mxu0 0
  %335 = vmatpush1.bf16.msra.mxu0 %v322
  %336 = vmatprep.subr.bf16.mxu0 0
  %337 = vmatpush1.bf16.msra.mxu0 %v321
  %338 = vmatprep.subr.bf16.mxu0 0
  %339 = vmatpush1.bf16.msra.mxu0 %v320
  %340 = vmatprep.subr.bf16.mxu0 0
  %341 = vmatpush1.bf16.msra.mxu0 %v319
  %342 = vmatprep.subr.bf16.mxu0 0
  %343 = vmatpush1.bf16.msra.mxu0 %v318
  %344 = vmatprep.subr.bf16.mxu0 0
  %345 = vmatpush1.bf16.msra.mxu0 %v317
  %346 = vmatprep.subr.bf16.mxu0 0
  %347 = vmatpush1.bf16.msra.mxu0 %v316
  %348 = vmatprep.subr.bf16.mxu0 0
  %349 = vmatpush2.bf16.msra.mxu0 0
  %350 = vmatprep.subr.bf16.mxu0 0
  %351 = vmatpush2.bf16.msra.mxu0 0
  %352 = vmatprep.subr.bf16.mxu0 0
  %353 = vmatpush2.bf16.msra.mxu0 0
  %354 = vmatprep.subr.bf16.mxu0 0
  %355 = vmatpush2.bf16.msra.mxu0 0
  %356 = vmatprep.subr.bf16.mxu0 0
  %357 = vmatpush2.bf16.msra.mxu0 0
  %358 = vmatprep.subr.bf16.mxu0 0
  %359 = vmatpush2.bf16.msra.mxu0 0
  %360 = vmatprep.subr.bf16.mxu0 0
  %361 = vmatpush2.bf16.msra.mxu0 0
  %362 = vmatprep.subr.bf16.mxu0 0
  %363 = vmatpush2.bf16.msra.mxu0 0
  %364 = vmatprep.mubr.bf16.mxu0 0
  %365 = vmatmul.mubr.bf16.gmra.mxu0 %v220
  %v366 = vpop.f32.mrf.mxu0
  %v367 = vadd.f32 0.0, %v366
  %v368 = vpop.f32.mrf.mxu0
  %v369 = vpop.f32.mrf.mxu0
  %v370 = vadd.f32 0.0, %v369
  %v371 = vpop.f32.mrf.mxu0
  %372 = vmatprep.mubr.bf16.mxu0 0
  %373 = vmatmul.mubr.bf16.gmra.mxu0 %v221
  %v374 = vpop.f32.mrf.mxu0
  %v375 = vadd.f32 0.0, %v374
  %v376 = vpop.f32.mrf.mxu0
  %v377 = vpop.f32.mrf.mxu0
  %v378 = vadd.f32 0.0, %v377
  %v379 = vpop.f32.mrf.mxu0
  %380 = vmatprep.mubr.bf16.mxu0 0
  %381 = vmatmul.mubr.bf16.gmra.mxu0 %v222
  %v382 = vpop.f32.mrf.mxu0
  %v383 = vadd.f32 0.0, %v382
  %v384 = vpop.f32.mrf.mxu0
  %v385 = vpop.f32.mrf.mxu0
  %v386 = vadd.f32 0.0, %v385
  %v387 = vpop.f32.mrf.mxu0
  %388 = vmatprep.mubr.bf16.mxu0 0
  %389 = vmatmul.mubr.bf16.gmra.mxu0 %v223
  %v390 = vpop.f32.mrf.mxu0
  %v391 = vadd.f32 0.0, %v390
  %v392 = vpop.f32.mrf.mxu0
  %v393 = vpop.f32.mrf.mxu0
  %v394 = vadd.f32 0.0, %v393
  %v395 = vpop.f32.mrf.mxu0
  %396 = vmatprep.mubr.bf16.mxu0 0
  %397 = vmatmul.mubr.bf16.gmra.mxu0 %v224
  %v398 = vpop.f32.mrf.mxu0
  %v399 = vadd.f32 0.0, %v398
  %v400 = vpop.f32.mrf.mxu0
  %v401 = vpop.f32.mrf.mxu0
  %v402 = vadd.f32 0.0, %v401
  %v403 = vpop.f32.mrf.mxu0
  %404 = vmatprep.mubr.bf16.mxu0 0
  %405 = vmatmul.mubr.bf16.gmra.mxu0 %v225
  %v406 = vpop.f32.mrf.mxu0
  %v407 = vadd.f32 0.0, %v406
  %v408 = vpop.f32.mrf.mxu0
  %v409 = vpop.f32.mrf.mxu0
  %v410 = vadd.f32 0.0, %v409
  %v411 = vpop.f32.mrf.mxu0
  %412 = vmatprep.mubr.bf16.mxu0 0
  %413 = vmatmul.mubr.bf16.gmra.mxu0 %v226
  %v414 = vpop.f32.mrf.mxu0
  %v415 = vadd.f32 0.0, %v414
  %v416 = vpop.f32.mrf.mxu0
  %v417 = vpop.f32.mrf.mxu0
  %v418 = vadd.f32 0.0, %v417
  %v419 = vpop.f32.mrf.mxu0
  %420 = vmatprep.mubr.bf16.mxu0 0
  %421 = vmatmul.mubr.bf16.gmra.mxu0 %v227
  %v422 = vpop.f32.mrf.mxu0
  %v423 = vadd.f32 0.0, %v422
  %v424 = vpop.f32.mrf.mxu0
  %v425 = vpop.f32.mrf.mxu0
  %v426 = vadd.f32 0.0, %v425
  %v427 = vpop.f32.mrf.mxu0
  %428 = vmatprep.mubr.bf16.mxu0 0
  %429 = vmatmul.mubr.bf16.gmra.mxu0 %v228
  %v430 = vpop.f32.mrf.mxu0
  %v431 = vadd.f32 0.0, %v430
  %v432 = vpop.f32.mrf.mxu0
  %v433 = vpop.f32.mrf.mxu0
  %v434 = vadd.f32 0.0, %v433
  %v435 = vpop.f32.mrf.mxu0
  %436 = vmatprep.mubr.bf16.mxu0 0
  %437 = vmatmul.mubr.bf16.gmra.mxu0 %v229
  %v438 = vpop.f32.mrf.mxu0
  %v439 = vadd.f32 0.0, %v438
  %v440 = vpop.f32.mrf.mxu0
  %v441 = vpop.f32.mrf.mxu0
  %v442 = vadd.f32 0.0, %v441
  %v443 = vpop.f32.mrf.mxu0
  %444 = vmatprep.mubr.bf16.mxu0 0
  %445 = vmatmul.mubr.bf16.gmra.mxu0 %v230
  %v446 = vpop.f32.mrf.mxu0
  %v447 = vadd.f32 0.0, %v446
  %v448 = vpop.f32.mrf.mxu0
  %v449 = vpop.f32.mrf.mxu0
  %v450 = vadd.f32 0.0, %v449
  %v451 = vpop.f32.mrf.mxu0
  %452 = vmatprep.mubr.bf16.mxu0 0
  %453 = vmatmul.mubr.bf16.gmra.mxu0 %v231
  %v454 = vpop.f32.mrf.mxu0
  %v455 = vadd.f32 0.0, %v454
  %v456 = vpop.f32.mrf.mxu0
  %v457 = vpop.f32.mrf.mxu0
  %v458 = vadd.f32 0.0, %v457
  %v459 = vpop.f32.mrf.mxu0
  %460 = vmatprep.mubr.bf16.mxu0 0
  %461 = vmatmul.mubr.bf16.gmra.mxu0 %v232
  %v462 = vpop.f32.mrf.mxu0
  %v463 = vadd.f32 0.0, %v462
  %v464 = vpop.f32.mrf.mxu0
  %v465 = vpop.f32.mrf.mxu0
  %v466 = vadd.f32 0.0, %v465
  %v467 = vpop.f32.mrf.mxu0
  %468 = vmatprep.mubr.bf16.mxu0 0
  %469 = vmatmul.mubr.bf16.gmra.mxu0 %v233
  %v470 = vpop.f32.mrf.mxu0
  %v471 = vadd.f32 0.0, %v470
  %v472 = vpop.f32.mrf.mxu0
  %v473 = vpop.f32.mrf.mxu0
  %v474 = vadd.f32 0.0, %v473
  %v475 = vpop.f32.mrf.mxu0
  %476 = vmatprep.mubr.bf16.mxu0 0
  %477 = vmatmul.mubr.bf16.gmra.mxu0 %v234
  %v478 = vpop.f32.mrf.mxu0
  %v479 = vadd.f32 0.0, %v478
  %v480 = vpop.f32.mrf.mxu0
  %v481 = vpop.f32.mrf.mxu0
  %v482 = vadd.f32 0.0, %v481
  %v483 = vpop.f32.mrf.mxu0
  %484 = vmatprep.mubr.bf16.mxu0 0
  %485 = vmatmul.mubr.bf16.gmra.mxu0 %v235
  %v486 = vpop.f32.mrf.mxu0
  %v487 = vadd.f32 0.0, %v486
  %v488 = vpop.f32.mrf.mxu0
  %v489 = vpop.f32.mrf.mxu0
  %v490 = vadd.f32 0.0, %v489
  %v491 = vpop.f32.mrf.mxu0
  %492 = vmatprep.mubr.bf16.mxu0 0
  %493 = vmatmul.mubr.bf16.gmra.mxu0 %v236
  %v494 = vpop.f32.mrf.mxu0
  %v495 = vadd.f32 0.0, %v494
  %v496 = vpop.f32.mrf.mxu0
  %v497 = vpop.f32.mrf.mxu0
  %v498 = vadd.f32 0.0, %v497
  %v499 = vpop.f32.mrf.mxu0
  %500 = vmatprep.mubr.bf16.mxu0 0
  %501 = vmatmul.mubr.bf16.gmra.mxu0 %v237
  %v502 = vpop.f32.mrf.mxu0
  %v503 = vadd.f32 0.0, %v502
  %v504 = vpop.f32.mrf.mxu0
  %v505 = vpop.f32.mrf.mxu0
  %v506 = vadd.f32 0.0, %v505
  %v507 = vpop.f32.mrf.mxu0
  %508 = vmatprep.mubr.bf16.mxu0 0
  %509 = vmatmul.mubr.bf16.gmra.mxu0 %v238
  %v510 = vpop.f32.mrf.mxu0
  %v511 = vadd.f32 0.0, %v510
  %v512 = vpop.f32.mrf.mxu0
  %v513 = vpop.f32.mrf.mxu0
  %v514 = vadd.f32 0.0, %v513
  %v515 = vpop.f32.mrf.mxu0
  %516 = vmatprep.mubr.bf16.mxu0 0
  %517 = vmatmul.mubr.bf16.gmra.mxu0 %v239
  %v518 = vpop.f32.mrf.mxu0
  %v519 = vadd.f32 0.0, %v518
  %v520 = vpop.f32.mrf.mxu0
  %v521 = vpop.f32.mrf.mxu0
  %v522 = vadd.f32 0.0, %v521
  %v523 = vpop.f32.mrf.mxu0
  %524 = vmatprep.mubr.bf16.mxu0 0
  %525 = vmatmul.mubr.bf16.gmra.mxu0 %v240
  %v526 = vpop.f32.mrf.mxu0
  %v527 = vadd.f32 0.0, %v526
  %v528 = vpop.f32.mrf.mxu0
  %v529 = vpop.f32.mrf.mxu0
  %v530 = vadd.f32 0.0, %v529
  %v531 = vpop.f32.mrf.mxu0
  %532 = vmatprep.mubr.bf16.mxu0 0
  %533 = vmatmul.mubr.bf16.gmra.mxu0 %v241
  %v534 = vpop.f32.mrf.mxu0
  %v535 = vadd.f32 0.0, %v534
  %v536 = vpop.f32.mrf.mxu0
  %v537 = vpop.f32.mrf.mxu0
  %v538 = vadd.f32 0.0, %v537
  %v539 = vpop.f32.mrf.mxu0
  %540 = vmatprep.mubr.bf16.mxu0 0
  %541 = vmatmul.mubr.bf16.gmra.mxu0 %v242
  %v542 = vpop.f32.mrf.mxu0
  %v543 = vadd.f32 0.0, %v542
  %v544 = vpop.f32.mrf.mxu0
  %v545 = vpop.f32.mrf.mxu0
  %v546 = vadd.f32 0.0, %v545
  %v547 = vpop.f32.mrf.mxu0
  %548 = vmatprep.mubr.bf16.mxu0 0
  %549 = vmatmul.mubr.bf16.gmra.mxu0 %v243
  %v550 = vpop.f32.mrf.mxu0
  %v551 = vadd.f32 0.0, %v550
  %v552 = vpop.f32.mrf.mxu0
  %v553 = vpop.f32.mrf.mxu0
  %v554 = vadd.f32 0.0, %v553
  %v555 = vpop.f32.mrf.mxu0
  %556 = vmatprep.mubr.bf16.mxu0 0
  %557 = vmatmul.mubr.bf16.gmra.mxu0 %v244
  %v558 = vpop.f32.mrf.mxu0
  %v559 = vadd.f32 0.0, %v558
  %v560 = vpop.f32.mrf.mxu0
  %v561 = vpop.f32.mrf.mxu0
  %v562 = vadd.f32 0.0, %v561
  %v563 = vpop.f32.mrf.mxu0
  %564 = vmatprep.mubr.bf16.mxu0 0
  %565 = vmatmul.mubr.bf16.gmra.mxu0 %v245
  %v566 = vpop.f32.mrf.mxu0
  %v567 = vadd.f32 0.0, %v566
  %v568 = vpop.f32.mrf.mxu0
  %v569 = vpop.f32.mrf.mxu0
  %v570 = vadd.f32 0.0, %v569
  %v571 = vpop.f32.mrf.mxu0
  %572 = vmatprep.mubr.bf16.mxu0 0
  %573 = vmatmul.mubr.bf16.gmra.mxu0 %v246
  %v574 = vpop.f32.mrf.mxu0
  %v575 = vadd.f32 0.0, %v574
  %v576 = vpop.f32.mrf.mxu0
  %v577 = vpop.f32.mrf.mxu0
  %v578 = vadd.f32 0.0, %v577
  %v579 = vpop.f32.mrf.mxu0
  %580 = vmatprep.mubr.bf16.mxu0 0
  %581 = vmatmul.mubr.bf16.gmra.mxu0 %v247
  %v582 = vpop.f32.mrf.mxu0
  %v583 = vadd.f32 0.0, %v582
  %v584 = vpop.f32.mrf.mxu0
  %v585 = vpop.f32.mrf.mxu0
  %v586 = vadd.f32 0.0, %v585
  %v587 = vpop.f32.mrf.mxu0
  %588 = vmatprep.mubr.bf16.mxu0 0
  %589 = vmatmul.mubr.bf16.gmra.mxu0 %v248
  %v590 = vpop.f32.mrf.mxu0
  %v591 = vadd.f32 0.0, %v590
  %v592 = vpop.f32.mrf.mxu0
  %v593 = vpop.f32.mrf.mxu0
  %v594 = vadd.f32 0.0, %v593
  %v595 = vpop.f32.mrf.mxu0
  %596 = vmatprep.mubr.bf16.mxu0 0
  %597 = vmatmul.mubr.bf16.gmra.mxu0 %v249
  %v598 = vpop.f32.mrf.mxu0
  %v599 = vadd.f32 0.0, %v598
  %v600 = vpop.f32.mrf.mxu0
  %v601 = vpop.f32.mrf.mxu0
  %v602 = vadd.f32 0.0, %v601
  %v603 = vpop.f32.mrf.mxu0
  %604 = vmatprep.mubr.bf16.mxu0 0
  %605 = vmatmul.mubr.bf16.gmra.mxu0 %v250
  %v606 = vpop.f32.mrf.mxu0
  %v607 = vadd.f32 0.0, %v606
  %v608 = vpop.f32.mrf.mxu0
  %v609 = vpop.f32.mrf.mxu0
  %v610 = vadd.f32 0.0, %v609
  %v611 = vpop.f32.mrf.mxu0
  %612 = vmatprep.mubr.bf16.mxu0 0
  %613 = vmatmul.mubr.bf16.gmra.mxu0 %v251
  %v614 = vpop.f32.mrf.mxu0
  %v615 = vadd.f32 0.0, %v614
  %v616 = vpop.f32.mrf.mxu0
  %v617 = vpop.f32.mrf.mxu0
  %v618 = vadd.f32 0.0, %v617
  %v619 = vpop.f32.mrf.mxu0
  %620 = vdwg.mxu0
  %v621 = vpack.c.bf16 %v370, %v367
  %v622 = vpack.c.bf16 %v378, %v375
  %v623 = vpack.c.bf16 %v386, %v383
  %v624 = vpack.c.bf16 %v394, %v391
  %v625 = vpack.c.bf16 %v402, %v399
  %v626 = vpack.c.bf16 %v410, %v407
  %v627 = vpack.c.bf16 %v418, %v415
  %v628 = vpack.c.bf16 %v426, %v423
  %v629 = vpack.c.bf16 %v434, %v431
  %v630 = vpack.c.bf16 %v442, %v439
  %v631 = vpack.c.bf16 %v450, %v447
  %v632 = vpack.c.bf16 %v458, %v455
  %v633 = vpack.c.bf16 %v466, %v463
  %v634 = vpack.c.bf16 %v474, %v471
  %v635 = vpack.c.bf16 %v482, %v479
  %v636 = vpack.c.bf16 %v490, %v487
  %v637 = vpack.c.bf16 %v498, %v495
  %v638 = vpack.c.bf16 %v506, %v503
  %v639 = vpack.c.bf16 %v514, %v511
  %v640 = vpack.c.bf16 %v522, %v519
  %v641 = vpack.c.bf16 %v530, %v527
  %v642 = vpack.c.bf16 %v538, %v535
  %v643 = vpack.c.bf16 %v546, %v543
  %v644 = vpack.c.bf16 %v554, %v551
  %v645 = vpack.c.bf16 %v562, %v559
  %v646 = vpack.c.bf16 %v570, %v567
  %v647 = vpack.c.bf16 %v578, %v575
  %v648 = vpack.c.bf16 %v586, %v583
  %v649 = vpack.c.bf16 %v594, %v591
  %v650 = vpack.c.bf16 %v602, %v599
  %v651 = vpack.c.bf16 %v610, %v607
  %v652 = vpack.c.bf16 %v618, %v615
  %v685 = vunpack.c.l.b16 %v621
  %v686 = vunpack.c.h.b16 %v621
  %v687 = vunpack.c.l.b16 %v622
  %v688 = vunpack.c.h.b16 %v622
  %v689 = vunpack.c.l.b16 %v623
  %v690 = vunpack.c.h.b16 %v623
  %v691 = vunpack.c.l.b16 %v624
  %v692 = vunpack.c.h.b16 %v624
  %v693 = vunpack.c.l.b16 %v625
  %v694 = vunpack.c.h.b16 %v625
  %v695 = vunpack.c.l.b16 %v626
  %v696 = vunpack.c.h.b16 %v626
  %v697 = vunpack.c.l.b16 %v627
  %v698 = vunpack.c.h.b16 %v627
  %v699 = vunpack.c.l.b16 %v628
  %v700 = vunpack.c.h.b16 %v628
  %v701 = vunpack.c.l.b16 %v629
  %v702 = vunpack.c.h.b16 %v629
  %v703 = vunpack.c.l.b16 %v630
  %v704 = vunpack.c.h.b16 %v630
  %v705 = vunpack.c.l.b16 %v631
  %v706 = vunpack.c.h.b16 %v631
  %v707 = vunpack.c.l.b16 %v632
  %v708 = vunpack.c.h.b16 %v632
  %v709 = vunpack.c.l.b16 %v633
  %v710 = vunpack.c.h.b16 %v633
  %v711 = vunpack.c.l.b16 %v634
  %v712 = vunpack.c.h.b16 %v634
  %v713 = vunpack.c.l.b16 %v635
  %v714 = vunpack.c.h.b16 %v635
  %v715 = vunpack.c.l.b16 %v636
  %v716 = vunpack.c.h.b16 %v636
  %v717 = vunpack.c.l.b16 %v637
  %v718 = vunpack.c.h.b16 %v637
  %v719 = vunpack.c.l.b16 %v638
  %v720 = vunpack.c.h.b16 %v638
  %v721 = vunpack.c.l.b16 %v639
  %v722 = vunpack.c.h.b16 %v639
  %v723 = vunpack.c.l.b16 %v640
  %v724 = vunpack.c.h.b16 %v640
  %v725 = vunpack.c.l.b16 %v641
  %v726 = vunpack.c.h.b16 %v641
  %v727 = vunpack.c.l.b16 %v642
  %v728 = vunpack.c.h.b16 %v642
  %v729 = vunpack.c.l.b16 %v643
  %v730 = vunpack.c.h.b16 %v643
  %v731 = vunpack.c.l.b16 %v644
  %v732 = vunpack.c.h.b16 %v644
  %v733 = vunpack.c.l.b16 %v645
  %v734 = vunpack.c.h.b16 %v645
  %v735 = vunpack.c.l.b16 %v646
  %v736 = vunpack.c.h.b16 %v646
  %v737 = vunpack.c.l.b16 %v647
  %v738 = vunpack.c.h.b16 %v647
  %v739 = vunpack.c.l.b16 %v648
  %v740 = vunpack.c.h.b16 %v648
  %v741 = vunpack.c.l.b16 %v649
  %v742 = vunpack.c.h.b16 %v649
  %v743 = vunpack.c.l.b16 %v650
  %v744 = vunpack.c.h.b16 %v650
  %v745 = vunpack.c.l.b16 %v651
  %v746 = vunpack.c.h.b16 %v651
  %v747 = vunpack.c.l.b16 %v652
  %v748 = vunpack.c.h.b16 %v652
  %v749 = vpack.c.b16 %v685, %v685
  %v750 = vpack.c.b16 %v686, %v686
  %v751 = vpack.c.b16 %v687, %v687
  %v752 = vpack.c.b16 %v688, %v688
  %v753 = vpack.c.b16 %v689, %v689
  %v754 = vpack.c.b16 %v690, %v690
  %v755 = vpack.c.b16 %v691, %v691
  %v756 = vpack.c.b16 %v692, %v692
  %v757 = vpack.c.b16 %v693, %v693
  %v758 = vpack.c.b16 %v694, %v694
  %v759 = vpack.c.b16 %v695, %v695
  %v760 = vpack.c.b16 %v696, %v696
  %v761 = vpack.c.b16 %v697, %v697
  %v762 = vpack.c.b16 %v698, %v698
  %v763 = vpack.c.b16 %v699, %v699
  %v764 = vpack.c.b16 %v700, %v700
  %v765 = vpack.c.b16 %v701, %v701
  %v766 = vpack.c.b16 %v702, %v702
  %v767 = vpack.c.b16 %v703, %v703
  %v768 = vpack.c.b16 %v704, %v704
  %v769 = vpack.c.b16 %v705, %v705
  %v770 = vpack.c.b16 %v706, %v706
  %v771 = vpack.c.b16 %v707, %v707
  %v772 = vpack.c.b16 %v708, %v708
  %v773 = vpack.c.b16 %v709, %v709
  %v774 = vpack.c.b16 %v710, %v710
  %v775 = vpack.c.b16 %v711, %v711
  %v776 = vpack.c.b16 %v712, %v712
  %v777 = vpack.c.b16 %v713, %v713
  %v778 = vpack.c.b16 %v714, %v714
  %v779 = vpack.c.b16 %v715, %v715
  %v780 = vpack.c.b16 %v716, %v716
  %v781 = vpack.c.b16 %v717, %v717
  %v782 = vpack.c.b16 %v718, %v718
  %v783 = vpack.c.b16 %v719, %v719
  %v784 = vpack.c.b16 %v720, %v720
  %v785 = vpack.c.b16 %v721, %v721
  %v786 = vpack.c.b16 %v722, %v722
  %v787 = vpack.c.b16 %v723, %v723
  %v788 = vpack.c.b16 %v724, %v724
  %v789 = vpack.c.b16 %v725, %v725
  %v790 = vpack.c.b16 %v726, %v726
  %v791 = vpack.c.b16 %v727, %v727
  %v792 = vpack.c.b16 %v728, %v728
  %v793 = vpack.c.b16 %v729, %v729
  %v794 = vpack.c.b16 %v730, %v730
  %v795 = vpack.c.b16 %v731, %v731
  %v796 = vpack.c.b16 %v732, %v732
  %v797 = vpack.c.b16 %v733, %v733
  %v798 = vpack.c.b16 %v734, %v734
  %v799 = vpack.c.b16 %v735, %v735
  %v800 = vpack.c.b16 %v736, %v736
  %v801 = vpack.c.b16 %v737, %v737
  %v802 = vpack.c.b16 %v738, %v738
  %v803 = vpack.c.b16 %v739, %v739
  %v804 = vpack.c.b16 %v740, %v740
  %v805 = vpack.c.b16 %v741, %v741
  %v806 = vpack.c.b16 %v742, %v742
  %v807 = vpack.c.b16 %v743, %v743
  %v808 = vpack.c.b16 %v744, %v744
  %v809 = vpack.c.b16 %v745, %v745
  %v810 = vpack.c.b16 %v746, %v746
  %v811 = vpack.c.b16 %v747, %v747
  %v812 = vpack.c.b16 %v748, %v748
  %877 = vst [vmem:[%s2] sm:$0xf] %v749
  %878 = vst [vmem:[%s2 + $0x4] sm:$0xf] %v750
  %879 = vst [vmem:[%s2 + $0x8] sm:$0xf] %v751
  %880 = vst [vmem:[%s2 + $0xc] sm:$0xf] %v752
  %881 = vst [vmem:[%s2 + $0x10] sm:$0xf] %v753
  %882 = vst [vmem:[%s2 + $0x14] sm:$0xf] %v754
  %883 = vst [vmem:[%s2 + $0x18] sm:$0xf] %v755
  %884 = vst [vmem:[%s2 + $0x1c] sm:$0xf] %v756
  %885 = vst [vmem:[%s2 + $0x20] sm:$0xf] %v757
  %886 = vst [vmem:[%s2 + $0x24] sm:$0xf] %v758
  %887 = vst [vmem:[%s2 + $0x28] sm:$0xf] %v759
  %888 = vst [vmem:[%s2 + $0x2c] sm:$0xf] %v760
  %889 = vst [vmem:[%s2 + $0x30] sm:$0xf] %v761
  %890 = vst [vmem:[%s2 + $0x34] sm:$0xf] %v762
  %891 = vst [vmem:[%s2 + $0x38] sm:$0xf] %v763
  %892 = vst [vmem:[%s2 + $0x3c] sm:$0xf] %v764
  %893 = vst [vmem:[%s2 + $0x40] sm:$0xf] %v765
  %894 = vst [vmem:[%s2 + $0x44] sm:$0xf] %v766
  %895 = vst [vmem:[%s2 + $0x48] sm:$0xf] %v767
  %896 = vst [vmem:[%s2 + $0x4c] sm:$0xf] %v768
  %897 = vst [vmem:[%s2 + $0x50] sm:$0xf] %v769
  %898 = vst [vmem:[%s2 + $0x54] sm:$0xf] %v770
  %899 = vst [vmem:[%s2 + $0x58] sm:$0xf] %v771
  %900 = vst [vmem:[%s2 + $0x5c] sm:$0xf] %v772
  %901 = vst [vmem:[%s2 + $0x60] sm:$0xf] %v773
  %902 = vst [vmem:[%s2 + $0x64] sm:$0xf] %v774
  %903 = vst [vmem:[%s2 + $0x68] sm:$0xf] %v775
  %904 = vst [vmem:[%s2 + $0x6c] sm:$0xf] %v776
  %905 = vst [vmem:[%s2 + $0x70] sm:$0xf] %v777
  %906 = vst [vmem:[%s2 + $0x74] sm:$0xf] %v778
  %907 = vst [vmem:[%s2 + $0x78] sm:$0xf] %v779
  %908 = vst [vmem:[%s2 + $0x7c] sm:$0xf] %v780
  %909 = vst [vmem:[%s2 + $0x80] sm:$0xf] %v781
  %910 = vst [vmem:[%s2 + $0x84] sm:$0xf] %v782
  %911 = vst [vmem:[%s2 + $0x88] sm:$0xf] %v783
  %912 = vst [vmem:[%s2 + $0x8c] sm:$0xf] %v784
  %913 = vst [vmem:[%s2 + $0x90] sm:$0xf] %v785
  %914 = vst [vmem:[%s2 + $0x94] sm:$0xf] %v786
  %915 = vst [vmem:[%s2 + $0x98] sm:$0xf] %v787
  %916 = vst [vmem:[%s2 + $0x9c] sm:$0xf] %v788
  %917 = vst [vmem:[%s2 + $0xa0] sm:$0xf] %v789
  %918 = vst [vmem:[%s2 + $0xa4] sm:$0xf] %v790
  %919 = vst [vmem:[%s2 + $0xa8] sm:$0xf] %v791
  %920 = vst [vmem:[%s2 + $0xac] sm:$0xf] %v792
  %921 = vst [vmem:[%s2 + $0xb0] sm:$0xf] %v793
  %922 = vst [vmem:[%s2 + $0xb4] sm:$0xf] %v794
  %923 = vst [vmem:[%s2 + $0xb8] sm:$0xf] %v795
  %924 = vst [vmem:[%s2 + $0xbc] sm:$0xf] %v796
  %925 = vst [vmem:[%s2 + $0xc0] sm:$0xf] %v797
  %926 = vst [vmem:[%s2 + $0xc4] sm:$0xf] %v798
  %927 = vst [vmem:[%s2 + $0xc8] sm:$0xf] %v799
  %928 = vst [vmem:[%s2 + $0xcc] sm:$0xf] %v800
  %929 = vst [vmem:[%s2 + $0xd0] sm:$0xf] %v801
  %930 = vst [vmem:[%s2 + $0xd4] sm:$0xf] %v802
  %931 = vst [vmem:[%s2 + $0xd8] sm:$0xf] %v803
  %932 = vst [vmem:[%s2 + $0xdc] sm:$0xf] %v804
  %933 = vst [vmem:[%s2 + $0xe0] sm:$0xf] %v805
  %934 = vst [vmem:[%s2 + $0xe4] sm:$0xf] %v806
  %935 = vst [vmem:[%s2 + $0xe8] sm:$0xf] %v807
  %936 = vst [vmem:[%s2 + $0xec] sm:$0xf] %v808
  %937 = vst [vmem:[%s2 + $0xf0] sm:$0xf] %v809
  %938 = vst [vmem:[%s2 + $0xf4] sm:$0xf] %v810
  %939 = vst [vmem:[%s2 + $0xf8] sm:$0xf] %v811
  %940 = vst [vmem:[%s2 + $0xfc] sm:$0xf] %v812
  // Predicated region
  $region10: #{gcn_rand_labeled_forward.3} parent=0 // pred_check
    _
  $region11: #{gcn_rand_labeled_forward.3} parent=0 // pred_check_branch
    %942 = sbr.rel (0) target = $region13
  $region12: #{gcn_rand_labeled_forward.3} parent=0 // pred_region
    _
  $region13: #{gcn_rand_labeled_forward.3} parent=0 // pred_fallthru
    _
  // Predicated region
  $region14: #{gcn_rand_labeled_forward.3} parent=0 // pred_check
    _
  $region15: #{gcn_rand_labeled_forward.3} parent=0 // pred_check_branch
    %944 = sbr.rel (0) target = $region17
  $region16: #{gcn_rand_labeled_forward.3} parent=0 // pred_region
    _
  $region17: #{gcn_rand_labeled_forward.3} parent=0 // pred_fallthru
    _

// kernel: gcn_rand_labeled_forward.4
$region0: #{gcn_rand_labeled_forward.4}
  #allocation0 [shape = 'u32[]', space=smem, size = 0x4, offset = 0x4, fixed_abs, tag = 'smem constant byte address 0x4 - core index']
  #allocation1 [shape = 'u32[144,128]{1,0:T(1,128)}', space=vmem, size = 0x12000, scoped, tag = 'internal scratch']
  #allocation2 [shape = 'f32[512,128]{1,0:T(8,128)}', space=vmem, size = 0x40000, scoped, tag = 'scratch operand']
  %s0 = inlined_call_operand.vmem [shape: bf16[512,512], index: 0, kind: input, shape index: {}]
  %s1 = inlined_call_operand.vmem [shape: bf16[512,128], index: 1, kind: input, shape index: {}]
  %s2 = inlined_call_operand.vmem [shape: f32[1,128], index: 2, kind: input, shape index: {}]
  %s3 = inlined_call_operand.vmem [shape: bf16[512,128], index: 3, kind: output, shape index: {}]
  %s4 = sld [smem:[#allocation0]]
  $region30: #{gcn_rand_labeled_forward.4} parent=0
    _
  %s6 = ssub.s32 1, %s4
  %s7 = scalar_select 0, %s6, %s4
  // Predicated region
  $region2: #{gcn_rand_labeled_forward.4} parent=0 // pred_check
    _
  $region3: #{gcn_rand_labeled_forward.4} parent=0 // pred_check_branch
    %9 = sbr.rel (0) target = $region5
  $region4: #{gcn_rand_labeled_forward.4} parent=0 // pred_region
    _
  $region5: #{gcn_rand_labeled_forward.4} parent=0 // pred_fallthru
    _
  // Predicated region
  $region6: #{gcn_rand_labeled_forward.4} parent=0 // pred_check
    _
  $region7: #{gcn_rand_labeled_forward.4} parent=0 // pred_check_branch
    %11 = sbr.rel (0) target = $region9
  $region8: #{gcn_rand_labeled_forward.4} parent=0 // pred_region
    _
  $region9: #{gcn_rand_labeled_forward.4} parent=0 // pred_fallthru
    _
  // Predicated region
  $region10: #{gcn_rand_labeled_forward.4} parent=0 // pred_check
    _
  $region11: #{gcn_rand_labeled_forward.4} parent=0 // pred_check_branch
    %13 = sbr.rel (0) target = $region13
  $region12: #{gcn_rand_labeled_forward.4} parent=0 // pred_region
    _
  $region13: #{gcn_rand_labeled_forward.4} parent=0 // pred_fallthru
    _
  %p15 = scmp.eq.s32.totalorder 0, 0
  // Predicated region
  $region14: #{gcn_rand_labeled_forward.4} parent=0 // pred_check
    %p16 = pneg %p15
  $region15: #{gcn_rand_labeled_forward.4} parent=0 // pred_check_branch
    %18 = sbr.rel (%p16) target = $region17
  $region16: #{gcn_rand_labeled_forward.4} parent=0 // pred_region
    %19 = vst [vmem:[#allocation2] sm:$0xff] 0.0
    %20 = vst [vmem:[#allocation2 + $0x8] sm:$0xff] 0.0
    %21 = vst [vmem:[#allocation2 + $0x10] sm:$0xff] 0.0
    %22 = vst [vmem:[#allocation2 + $0x18] sm:$0xff] 0.0
    %23 = vst [vmem:[#allocation2 + $0x20] sm:$0xff] 0.0
    %24 = vst [vmem:[#allocation2 + $0x28] sm:$0xff] 0.0
    %25 = vst [vmem:[#allocation2 + $0x30] sm:$0xff] 0.0
    %26 = vst [vmem:[#allocation2 + $0x38] sm:$0xff] 0.0
    %27 = vst [vmem:[#allocation2 + $0x40] sm:$0xff] 0.0
    %28 = vst [vmem:[#allocation2 + $0x48] sm:$0xff] 0.0
    %29 = vst [vmem:[#allocation2 + $0x50] sm:$0xff] 0.0
    %30 = vst [vmem:[#allocation2 + $0x58] sm:$0xff] 0.0
    %31 = vst [vmem:[#allocation2 + $0x60] sm:$0xff] 0.0
    %32 = vst [vmem:[#allocation2 + $0x68] sm:$0xff] 0.0
    %33 = vst [vmem:[#allocation2 + $0x70] sm:$0xff] 0.0
    %34 = vst [vmem:[#allocation2 + $0x78] sm:$0xff] 0.0
    %35 = vst [vmem:[#allocation2 + $0x80] sm:$0xff] 0.0
    %36 = vst [vmem:[#allocation2 + $0x88] sm:$0xff] 0.0
    %37 = vst [vmem:[#allocation2 + $0x90] sm:$0xff] 0.0
    %38 = vst [vmem:[#allocation2 + $0x98] sm:$0xff] 0.0
    %39 = vst [vmem:[#allocation2 + $0xa0] sm:$0xff] 0.0
    %40 = vst [vmem:[#allocation2 + $0xa8] sm:$0xff] 0.0
    %41 = vst [vmem:[#allocation2 + $0xb0] sm:$0xff] 0.0
    %42 = vst [vmem:[#allocation2 + $0xb8] sm:$0xff] 0.0
    %43 = vst [vmem:[#allocation2 + $0xc0] sm:$0xff] 0.0
    %44 = vst [vmem:[#allocation2 + $0xc8] sm:$0xff] 0.0
    %45 = vst [vmem:[#allocation2 + $0xd0] sm:$0xff] 0.0
    %46 = vst [vmem:[#allocation2 + $0xd8] sm:$0xff] 0.0
    %47 = vst [vmem:[#allocation2 + $0xe0] sm:$0xff] 0.0
    %48 = vst [vmem:[#allocation2 + $0xe8] sm:$0xff] 0.0
    %49 = vst [vmem:[#allocation2 + $0xf0] sm:$0xff] 0.0
    %50 = vst [vmem:[#allocation2 + $0xf8] sm:$0xff] 0.0
    %51 = vst [vmem:[#allocation2 + $0x100] sm:$0xff] 0.0
    %52 = vst [vmem:[#allocation2 + $0x108] sm:$0xff] 0.0
    %53 = vst [vmem:[#allocation2 + $0x110] sm:$0xff] 0.0
    %54 = vst [vmem:[#allocation2 + $0x118] sm:$0xff] 0.0
    %55 = vst [vmem:[#allocation2 + $0x120] sm:$0xff] 0.0
    %56 = vst [vmem:[#allocation2 + $0x128] sm:$0xff] 0.0
    %57 = vst [vmem:[#allocation2 + $0x130] sm:$0xff] 0.0
    %58 = vst [vmem:[#allocation2 + $0x138] sm:$0xff] 0.0
    %59 = vst [vmem:[#allocation2 + $0x140] sm:$0xff] 0.0
    %60 = vst [vmem:[#allocation2 + $0x148] sm:$0xff] 0.0
    %61 = vst [vmem:[#allocation2 + $0x150] sm:$0xff] 0.0
    %62 = vst [vmem:[#allocation2 + $0x158] sm:$0xff] 0.0
    %63 = vst [vmem:[#allocation2 + $0x160] sm:$0xff] 0.0
    %64 = vst [vmem:[#allocation2 + $0x168] sm:$0xff] 0.0
    %65 = vst [vmem:[#allocation2 + $0x170] sm:$0xff] 0.0
    %66 = vst [vmem:[#allocation2 + $0x178] sm:$0xff] 0.0
    %67 = vst [vmem:[#allocation2 + $0x180] sm:$0xff] 0.0
    %68 = vst [vmem:[#allocation2 + $0x188] sm:$0xff] 0.0
    %69 = vst [vmem:[#allocation2 + $0x190] sm:$0xff] 0.0
    %70 = vst [vmem:[#allocation2 + $0x198] sm:$0xff] 0.0
    %71 = vst [vmem:[#allocation2 + $0x1a0] sm:$0xff] 0.0
    %72 = vst [vmem:[#allocation2 + $0x1a8] sm:$0xff] 0.0
    %73 = vst [vmem:[#allocation2 + $0x1b0] sm:$0xff] 0.0
    %74 = vst [vmem:[#allocation2 + $0x1b8] sm:$0xff] 0.0
    %75 = vst [vmem:[#allocation2 + $0x1c0] sm:$0xff] 0.0
    %76 = vst [vmem:[#allocation2 + $0x1c8] sm:$0xff] 0.0
    %77 = vst [vmem:[#allocation2 + $0x1d0] sm:$0xff] 0.0
    %78 = vst [vmem:[#allocation2 + $0x1d8] sm:$0xff] 0.0
    %79 = vst [vmem:[#allocation2 + $0x1e0] sm:$0xff] 0.0
    %80 = vst [vmem:[#allocation2 + $0x1e8] sm:$0xff] 0.0
    %81 = vst [vmem:[#allocation2 + $0x1f0] sm:$0xff] 0.0
    %82 = vst [vmem:[#allocation2 + $0x1f8] sm:$0xff] 0.0
  $region17: #{gcn_rand_labeled_forward.4} parent=0 // pred_fallthru
    _
  %s83 = smul.u32 0, 512
  %s84 = sshra.s32 %s83, 3
  %s85 = sand.u32 %s83, 7
  %s86 = smul.addr %s84, 4
  %s87 = scalar_lea.vmem %s1, %s86
  %v88 = vld [vmem:[%s87] sm:$0xf]
  %v89 = vld [vmem:[%s87 + $0x4] sm:$0xf]
  %v90 = vld [vmem:[%s87 + $0x8] sm:$0xf]
  %v91 = vld [vmem:[%s87 + $0xc] sm:$0xf]
  %v92 = vld [vmem:[%s87 + $0x10] sm:$0xf]
  %v93 = vld [vmem:[%s87 + $0x14] sm:$0xf]
  %v94 = vld [vmem:[%s87 + $0x18] sm:$0xf]
  %v95 = vld [vmem:[%s87 + $0x1c] sm:$0xf]
  %v96 = vld [vmem:[%s87 + $0x20] sm:$0xf]
  %v97 = vld [vmem:[%s87 + $0x24] sm:$0xf]
  %v98 = vld [vmem:[%s87 + $0x28] sm:$0xf]
  %v99 = vld [vmem:[%s87 + $0x2c] sm:$0xf]
  %v100 = vld [vmem:[%s87 + $0x30] sm:$0xf]
  %v101 = vld [vmem:[%s87 + $0x34] sm:$0xf]
  %v102 = vld [vmem:[%s87 + $0x38] sm:$0xf]
  %v103 = vld [vmem:[%s87 + $0x3c] sm:$0xf]
  %v104 = vld [vmem:[%s87 + $0x40] sm:$0xf]
  %v105 = vld [vmem:[%s87 + $0x44] sm:$0xf]
  %v106 = vld [vmem:[%s87 + $0x48] sm:$0xf]
  %v107 = vld [vmem:[%s87 + $0x4c] sm:$0xf]
  %v108 = vld [vmem:[%s87 + $0x50] sm:$0xf]
  %v109 = vld [vmem:[%s87 + $0x54] sm:$0xf]
  %v110 = vld [vmem:[%s87 + $0x58] sm:$0xf]
  %v111 = vld [vmem:[%s87 + $0x5c] sm:$0xf]
  %v112 = vld [vmem:[%s87 + $0x60] sm:$0xf]
  %v113 = vld [vmem:[%s87 + $0x64] sm:$0xf]
  %v114 = vld [vmem:[%s87 + $0x68] sm:$0xf]
  %v115 = vld [vmem:[%s87 + $0x6c] sm:$0xf]
  %v116 = vld [vmem:[%s87 + $0x70] sm:$0xf]
  %v117 = vld [vmem:[%s87 + $0x74] sm:$0xf]
  %v118 = vld [vmem:[%s87 + $0x78] sm:$0xf]
  %v119 = vld [vmem:[%s87 + $0x7c] sm:$0xf]
  %v120 = vld [vmem:[%s87 + $0x80] sm:$0xf]
  %v121 = vld [vmem:[%s87 + $0x84] sm:$0xf]
  %v122 = vld [vmem:[%s87 + $0x88] sm:$0xf]
  %v123 = vld [vmem:[%s87 + $0x8c] sm:$0xf]
  %v124 = vld [vmem:[%s87 + $0x90] sm:$0xf]
  %v125 = vld [vmem:[%s87 + $0x94] sm:$0xf]
  %v126 = vld [vmem:[%s87 + $0x98] sm:$0xf]
  %v127 = vld [vmem:[%s87 + $0x9c] sm:$0xf]
  %v128 = vld [vmem:[%s87 + $0xa0] sm:$0xf]
  %v129 = vld [vmem:[%s87 + $0xa4] sm:$0xf]
  %v130 = vld [vmem:[%s87 + $0xa8] sm:$0xf]
  %v131 = vld [vmem:[%s87 + $0xac] sm:$0xf]
  %v132 = vld [vmem:[%s87 + $0xb0] sm:$0xf]
  %v133 = vld [vmem:[%s87 + $0xb4] sm:$0xf]
  %v134 = vld [vmem:[%s87 + $0xb8] sm:$0xf]
  %v135 = vld [vmem:[%s87 + $0xbc] sm:$0xf]
  %v136 = vld [vmem:[%s87 + $0xc0] sm:$0xf]
  %v137 = vld [vmem:[%s87 + $0xc4] sm:$0xf]
  %v138 = vld [vmem:[%s87 + $0xc8] sm:$0xf]
  %v139 = vld [vmem:[%s87 + $0xcc] sm:$0xf]
  %v140 = vld [vmem:[%s87 + $0xd0] sm:$0xf]
  %v141 = vld [vmem:[%s87 + $0xd4] sm:$0xf]
  %v142 = vld [vmem:[%s87 + $0xd8] sm:$0xf]
  %v143 = vld [vmem:[%s87 + $0xdc] sm:$0xf]
  %v144 = vld [vmem:[%s87 + $0xe0] sm:$0xf]
  %v145 = vld [vmem:[%s87 + $0xe4] sm:$0xf]
  %v146 = vld [vmem:[%s87 + $0xe8] sm:$0xf]
  %v147 = vld [vmem:[%s87 + $0xec] sm:$0xf]
  %v148 = vld [vmem:[%s87 + $0xf0] sm:$0xf]
  %v149 = vld [vmem:[%s87 + $0xf4] sm:$0xf]
  %v150 = vld [vmem:[%s87 + $0xf8] sm:$0xf]
  %v151 = vld [vmem:[%s87 + $0xfc] sm:$0xf]
  %v152 = vld [vmem:[#allocation2] sm:$0xff]
  %v153 = vld [vmem:[#allocation2 + $0x8] sm:$0xff]
  %v154 = vld [vmem:[#allocation2 + $0x10] sm:$0xff]
  %v155 = vld [vmem:[#allocation2 + $0x18] sm:$0xff]
  %v156 = vld [vmem:[#allocation2 + $0x20] sm:$0xff]
  %v157 = vld [vmem:[#allocation2 + $0x28] sm:$0xff]
  %v158 = vld [vmem:[#allocation2 + $0x30] sm:$0xff]
  %v159 = vld [vmem:[#allocation2 + $0x38] sm:$0xff]
  %v160 = vld [vmem:[#allocation2 + $0x40] sm:$0xff]
  %v161 = vld [vmem:[#allocation2 + $0x48] sm:$0xff]
  %v162 = vld [vmem:[#allocation2 + $0x50] sm:$0xff]
  %v163 = vld [vmem:[#allocation2 + $0x58] sm:$0xff]
  %v164 = vld [vmem:[#allocation2 + $0x60] sm:$0xff]
  %v165 = vld [vmem:[#allocation2 + $0x68] sm:$0xff]
  %v166 = vld [vmem:[#allocation2 + $0x70] sm:$0xff]
  %v167 = vld [vmem:[#allocation2 + $0x78] sm:$0xff]
  %v168 = vld [vmem:[#allocation2 + $0x80] sm:$0xff]
  %v169 = vld [vmem:[#allocation2 + $0x88] sm:$0xff]
  %v170 = vld [vmem:[#allocation2 + $0x90] sm:$0xff]
  %v171 = vld [vmem:[#allocation2 + $0x98] sm:$0xff]
  %v172 = vld [vmem:[#allocation2 + $0xa0] sm:$0xff]
  %v173 = vld [vmem:[#allocation2 + $0xa8] sm:$0xff]
  %v174 = vld [vmem:[#allocation2 + $0xb0] sm:$0xff]
  %v175 = vld [vmem:[#allocation2 + $0xb8] sm:$0xff]
  %v176 = vld [vmem:[#allocation2 + $0xc0] sm:$0xff]
  %v177 = vld [vmem:[#allocation2 + $0xc8] sm:$0xff]
  %v178 = vld [vmem:[#allocation2 + $0xd0] sm:$0xff]
  %v179 = vld [vmem:[#allocation2 + $0xd8] sm:$0xff]
  %v180 = vld [vmem:[#allocation2 + $0xe0] sm:$0xff]
  %v181 = vld [vmem:[#allocation2 + $0xe8] sm:$0xff]
  %v182 = vld [vmem:[#allocation2 + $0xf0] sm:$0xff]
  %v183 = vld [vmem:[#allocation2 + $0xf8] sm:$0xff]
  %v184 = vld [vmem:[#allocation2 + $0x100] sm:$0xff]
  %v185 = vld [vmem:[#allocation2 + $0x108] sm:$0xff]
  %v186 = vld [vmem:[#allocation2 + $0x110] sm:$0xff]
  %v187 = vld [vmem:[#allocation2 + $0x118] sm:$0xff]
  %v188 = vld [vmem:[#allocation2 + $0x120] sm:$0xff]
  %v189 = vld [vmem:[#allocation2 + $0x128] sm:$0xff]
  %v190 = vld [vmem:[#allocation2 + $0x130] sm:$0xff]
  %v191 = vld [vmem:[#allocation2 + $0x138] sm:$0xff]
  %v192 = vld [vmem:[#allocation2 + $0x140] sm:$0xff]
  %v193 = vld [vmem:[#allocation2 + $0x148] sm:$0xff]
  %v194 = vld [vmem:[#allocation2 + $0x150] sm:$0xff]
  %v195 = vld [vmem:[#allocation2 + $0x158] sm:$0xff]
  %v196 = vld [vmem:[#allocation2 + $0x160] sm:$0xff]
  %v197 = vld [vmem:[#allocation2 + $0x168] sm:$0xff]
  %v198 = vld [vmem:[#allocation2 + $0x170] sm:$0xff]
  %v199 = vld [vmem:[#allocation2 + $0x178] sm:$0xff]
  %v200 = vld [vmem:[#allocation2 + $0x180] sm:$0xff]
  %v201 = vld [vmem:[#allocation2 + $0x188] sm:$0xff]
  %v202 = vld [vmem:[#allocation2 + $0x190] sm:$0xff]
  %v203 = vld [vmem:[#allocation2 + $0x198] sm:$0xff]
  %v204 = vld [vmem:[#allocation2 + $0x1a0] sm:$0xff]
  %v205 = vld [vmem:[#allocation2 + $0x1a8] sm:$0xff]
  %v206 = vld [vmem:[#allocation2 + $0x1b0] sm:$0xff]
  %v207 = vld [vmem:[#allocation2 + $0x1b8] sm:$0xff]
  %v208 = vld [vmem:[#allocation2 + $0x1c0] sm:$0xff]
  %v209 = vld [vmem:[#allocation2 + $0x1c8] sm:$0xff]
  %v210 = vld [vmem:[#allocation2 + $0x1d0] sm:$0xff]
  %v211 = vld [vmem:[#allocation2 + $0x1d8] sm:$0xff]
  %v212 = vld [vmem:[#allocation2 + $0x1e0] sm:$0xff]
  %v213 = vld [vmem:[#allocation2 + $0x1e8] sm:$0xff]
  %v214 = vld [vmem:[#allocation2 + $0x1f0] sm:$0xff]
  %v215 = vld [vmem:[#allocation2 + $0x1f8] sm:$0xff]
  %v216 = vld [vmem:[%s0] sm:$0xff]
  %v217 = vld [vmem:[%s0 + $0x8] sm:$0xff]
  %v218 = vld [vmem:[%s0 + $0x10] sm:$0xff]
  %v219 = vld [vmem:[%s0 + $0x18] sm:$0xff]
  %v220 = vld [vmem:[%s0 + $0x20] sm:$0xff]
  %v221 = vld [vmem:[%s0 + $0x28] sm:$0xff]
  %v222 = vld [vmem:[%s0 + $0x30] sm:$0xff]
  %v223 = vld [vmem:[%s0 + $0x38] sm:$0xff]
  %v224 = vld [vmem:[%s0 + $0x40] sm:$0xff]
  %v225 = vld [vmem:[%s0 + $0x48] sm:$0xff]
  %v226 = vld [vmem:[%s0 + $0x50] sm:$0xff]
  %v227 = vld [vmem:[%s0 + $0x58] sm:$0xff]
  %v228 = vld [vmem:[%s0 + $0x60] sm:$0xff]
  %v229 = vld [vmem:[%s0 + $0x68] sm:$0xff]
  %v230 = vld [vmem:[%s0 + $0x70] sm:$0xff]
  %v231 = vld [vmem:[%s0 + $0x78] sm:$0xff]
  %v232 = vld [vmem:[%s0 + $0x80] sm:$0xff]
  %v233 = vld [vmem:[%s0 + $0x88] sm:$0xff]
  %v234 = vld [vmem:[%s0 + $0x90] sm:$0xff]
  %v235 = vld [vmem:[%s0 + $0x98] sm:$0xff]
  %v236 = vld [vmem:[%s0 + $0xa0] sm:$0xff]
  %v237 = vld [vmem:[%s0 + $0xa8] sm:$0xff]
  %v238 = vld [vmem:[%s0 + $0xb0] sm:$0xff]
  %v239 = vld [vmem:[%s0 + $0xb8] sm:$0xff]
  %v240 = vld [vmem:[%s0 + $0xc0] sm:$0xff]
  %v241 = vld [vmem:[%s0 + $0xc8] sm:$0xff]
  %v242 = vld [vmem:[%s0 + $0xd0] sm:$0xff]
  %v243 = vld [vmem:[%s0 + $0xd8] sm:$0xff]
  %v244 = vld [vmem:[%s0 + $0xe0] sm:$0xff]
  %v245 = vld [vmem:[%s0 + $0xe8] sm:$0xff]
  %v246 = vld [vmem:[%s0 + $0xf0] sm:$0xff]
  %v247 = vld [vmem:[%s0 + $0xf8] sm:$0xff]
  %v248 = vld [vmem:[%s0 + $0x100] sm:$0xff]
  %v249 = vld [vmem:[%s0 + $0x108] sm:$0xff]
  %v250 = vld [vmem:[%s0 + $0x110] sm:$0xff]
  %v251 = vld [vmem:[%s0 + $0x118] sm:$0xff]
  %v252 = vld [vmem:[%s0 + $0x120] sm:$0xff]
  %v253 = vld [vmem:[%s0 + $0x128] sm:$0xff]
  %v254 = vld [vmem:[%s0 + $0x130] sm:$0xff]
  %v255 = vld [vmem:[%s0 + $0x138] sm:$0xff]
  %v256 = vld [vmem:[%s0 + $0x140] sm:$0xff]
  %v257 = vld [vmem:[%s0 + $0x148] sm:$0xff]
  %v258 = vld [vmem:[%s0 + $0x150] sm:$0xff]
  %v259 = vld [vmem:[%s0 + $0x158] sm:$0xff]
  %v260 = vld [vmem:[%s0 + $0x160] sm:$0xff]
  %v261 = vld [vmem:[%s0 + $0x168] sm:$0xff]
  %v262 = vld [vmem:[%s0 + $0x170] sm:$0xff]
  %v263 = vld [vmem:[%s0 + $0x178] sm:$0xff]
  %v264 = vld [vmem:[%s0 + $0x180] sm:$0xff]
  %v265 = vld [vmem:[%s0 + $0x188] sm:$0xff]
  %v266 = vld [vmem:[%s0 + $0x190] sm:$0xff]
  %v267 = vld [vmem:[%s0 + $0x198] sm:$0xff]
  %v268 = vld [vmem:[%s0 + $0x1a0] sm:$0xff]
  %v269 = vld [vmem:[%s0 + $0x1a8] sm:$0xff]
  %v270 = vld [vmem:[%s0 + $0x1b0] sm:$0xff]
  %v271 = vld [vmem:[%s0 + $0x1b8] sm:$0xff]
  %v272 = vld [vmem:[%s0 + $0x1c0] sm:$0xff]
  %v273 = vld [vmem:[%s0 + $0x1c8] sm:$0xff]
  %v274 = vld [vmem:[%s0 + $0x1d0] sm:$0xff]
  %v275 = vld [vmem:[%s0 + $0x1d8] sm:$0xff]
  %v276 = vld [vmem:[%s0 + $0x1e0] sm:$0xff]
  %v277 = vld [vmem:[%s0 + $0x1e8] sm:$0xff]
  %v278 = vld [vmem:[%s0 + $0x1f0] sm:$0xff]
  %v279 = vld [vmem:[%s0 + $0x1f8] sm:$0xff]
  %v280 = vld [vmem:[%s0 + $0x200] sm:$0xff]
  %v281 = vld [vmem:[%s0 + $0x208] sm:$0xff]
  %v282 = vld [vmem:[%s0 + $0x210] sm:$0xff]
  %v283 = vld [vmem:[%s0 + $0x218] sm:$0xff]
  %v284 = vld [vmem:[%s0 + $0x220] sm:$0xff]
  %v285 = vld [vmem:[%s0 + $0x228] sm:$0xff]
  %v286 = vld [vmem:[%s0 + $0x230] sm:$0xff]
  %v287 = vld [vmem:[%s0 + $0x238] sm:$0xff]
  %v288 = vld [vmem:[%s0 + $0x240] sm:$0xff]
  %v289 = vld [vmem:[%s0 + $0x248] sm:$0xff]
  %v290 = vld [vmem:[%s0 + $0x250] sm:$0xff]
  %v291 = vld [vmem:[%s0 + $0x258] sm:$0xff]
  %v292 = vld [vmem:[%s0 + $0x260] sm:$0xff]
  %v293 = vld [vmem:[%s0 + $0x268] sm:$0xff]
  %v294 = vld [vmem:[%s0 + $0x270] sm:$0xff]
  %v295 = vld [vmem:[%s0 + $0x278] sm:$0xff]
  %v296 = vld [vmem:[%s0 + $0x280] sm:$0xff]
  %v297 = vld [vmem:[%s0 + $0x288] sm:$0xff]
  %v298 = vld [vmem:[%s0 + $0x290] sm:$0xff]
  %v299 = vld [vmem:[%s0 + $0x298] sm:$0xff]
  %v300 = vld [vmem:[%s0 + $0x2a0] sm:$0xff]
  %v301 = vld [vmem:[%s0 + $0x2a8] sm:$0xff]
  %v302 = vld [vmem:[%s0 + $0x2b0] sm:$0xff]
  %v303 = vld [vmem:[%s0 + $0x2b8] sm:$0xff]
  %v304 = vld [vmem:[%s0 + $0x2c0] sm:$0xff]
  %v305 = vld [vmem:[%s0 + $0x2c8] sm:$0xff]
  %v306 = vld [vmem:[%s0 + $0x2d0] sm:$0xff]
  %v307 = vld [vmem:[%s0 + $0x2d8] sm:$0xff]
  %v308 = vld [vmem:[%s0 + $0x2e0] sm:$0xff]
  %v309 = vld [vmem:[%s0 + $0x2e8] sm:$0xff]
  %v310 = vld [vmem:[%s0 + $0x2f0] sm:$0xff]
  %v311 = vld [vmem:[%s0 + $0x2f8] sm:$0xff]
  %v312 = vld [vmem:[%s0 + $0x300] sm:$0xff]
  %v313 = vld [vmem:[%s0 + $0x308] sm:$0xff]
  %v314 = vld [vmem:[%s0 + $0x310] sm:$0xff]
  %v315 = vld [vmem:[%s0 + $0x318] sm:$0xff]
  %v316 = vld [vmem:[%s0 + $0x320] sm:$0xff]
  %v317 = vld [vmem:[%s0 + $0x328] sm:$0xff]
  %v318 = vld [vmem:[%s0 + $0x330] sm:$0xff]
  %v319 = vld [vmem:[%s0 + $0x338] sm:$0xff]
  %v320 = vld [vmem:[%s0 + $0x340] sm:$0xff]
  %v321 = vld [vmem:[%s0 + $0x348] sm:$0xff]
  %v322 = vld [vmem:[%s0 + $0x350] sm:$0xff]
  %v323 = vld [vmem:[%s0 + $0x358] sm:$0xff]
  %v324 = vld [vmem:[%s0 + $0x360] sm:$0xff]
  %v325 = vld [vmem:[%s0 + $0x368] sm:$0xff]
  %v326 = vld [vmem:[%s0 + $0x370] sm:$0xff]
  %v327 = vld [vmem:[%s0 + $0x378] sm:$0xff]
  %v328 = vld [vmem:[%s0 + $0x380] sm:$0xff]
  %v329 = vld [vmem:[%s0 + $0x388] sm:$0xff]
  %v330 = vld [vmem:[%s0 + $0x390] sm:$0xff]
  %v331 = vld [vmem:[%s0 + $0x398] sm:$0xff]
  %v332 = vld [vmem:[%s0 + $0x3a0] sm:$0xff]
  %v333 = vld [vmem:[%s0 + $0x3a8] sm:$0xff]
  %v334 = vld [vmem:[%s0 + $0x3b0] sm:$0xff]
  %v335 = vld [vmem:[%s0 + $0x3b8] sm:$0xff]
  %v336 = vld [vmem:[%s0 + $0x3c0] sm:$0xff]
  %v337 = vld [vmem:[%s0 + $0x3c8] sm:$0xff]
  %v338 = vld [vmem:[%s0 + $0x3d0] sm:$0xff]
  %v339 = vld [vmem:[%s0 + $0x3d8] sm:$0xff]
  %v340 = vld [vmem:[%s0 + $0x3e0] sm:$0xff]
  %v341 = vld [vmem:[%s0 + $0x3e8] sm:$0xff]
  %v342 = vld [vmem:[%s0 + $0x3f0] sm:$0xff]
  %v343 = vld [vmem:[%s0 + $0x3f8] sm:$0xff]
  %v472 = vunpack.c.l.b16 %v216
  %v473 = vunpack.c.h.b16 %v216
  %v474 = vunpack.c.l.b16 %v217
  %v475 = vunpack.c.h.b16 %v217
  %v476 = vunpack.c.l.b16 %v218
  %v477 = vunpack.c.h.b16 %v218
  %v478 = vunpack.c.l.b16 %v219
  %v479 = vunpack.c.h.b16 %v219
  %v480 = vunpack.c.l.b16 %v220
  %v481 = vunpack.c.h.b16 %v220
  %v482 = vunpack.c.l.b16 %v221
  %v483 = vunpack.c.h.b16 %v221
  %v484 = vunpack.c.l.b16 %v222
  %v485 = vunpack.c.h.b16 %v222
  %v486 = vunpack.c.l.b16 %v223
  %v487 = vunpack.c.h.b16 %v223
  %v488 = vunpack.c.l.b16 %v224
  %v489 = vunpack.c.h.b16 %v224
  %v490 = vunpack.c.l.b16 %v225
  %v491 = vunpack.c.h.b16 %v225
  %v492 = vunpack.c.l.b16 %v226
  %v493 = vunpack.c.h.b16 %v226
  %v494 = vunpack.c.l.b16 %v227
  %v495 = vunpack.c.h.b16 %v227
  %v496 = vunpack.c.l.b16 %v228
  %v497 = vunpack.c.h.b16 %v228
  %v498 = vunpack.c.l.b16 %v229
  %v499 = vunpack.c.h.b16 %v229
  %v500 = vunpack.c.l.b16 %v230
  %v501 = vunpack.c.h.b16 %v230
  %v502 = vunpack.c.l.b16 %v231
  %v503 = vunpack.c.h.b16 %v231
  %v504 = vunpack.c.l.b16 %v232
  %v505 = vunpack.c.h.b16 %v232
  %v506 = vunpack.c.l.b16 %v233
  %v507 = vunpack.c.h.b16 %v233
  %v508 = vunpack.c.l.b16 %v234
  %v509 = vunpack.c.h.b16 %v234
  %v510 = vunpack.c.l.b16 %v235
  %v511 = vunpack.c.h.b16 %v235
  %v512 = vunpack.c.l.b16 %v236
  %v513 = vunpack.c.h.b16 %v236
  %v514 = vunpack.c.l.b16 %v237
  %v515 = vunpack.c.h.b16 %v237
  %v516 = vunpack.c.l.b16 %v238
  %v517 = vunpack.c.h.b16 %v238
  %v518 = vunpack.c.l.b16 %v239
  %v519 = vunpack.c.h.b16 %v239
  %v520 = vunpack.c.l.b16 %v240
  %v521 = vunpack.c.h.b16 %v240
  %v522 = vunpack.c.l.b16 %v241
  %v523 = vunpack.c.h.b16 %v241
  %v524 = vunpack.c.l.b16 %v242
  %v525 = vunpack.c.h.b16 %v242
  %v526 = vunpack.c.l.b16 %v243
  %v527 = vunpack.c.h.b16 %v243
  %v528 = vunpack.c.l.b16 %v244
  %v529 = vunpack.c.h.b16 %v244
  %v530 = vunpack.c.l.b16 %v245
  %v531 = vunpack.c.h.b16 %v245
  %v532 = vunpack.c.l.b16 %v246
  %v533 = vunpack.c.h.b16 %v246
  %v534 = vunpack.c.l.b16 %v247
  %v535 = vunpack.c.h.b16 %v247
  %v536 = vunpack.c.l.b16 %v248
  %v537 = vunpack.c.h.b16 %v248
  %v538 = vunpack.c.l.b16 %v249
  %v539 = vunpack.c.h.b16 %v249
  %v540 = vunpack.c.l.b16 %v250
  %v541 = vunpack.c.h.b16 %v250
  %v542 = vunpack.c.l.b16 %v251
  %v543 = vunpack.c.h.b16 %v251
  %v544 = vunpack.c.l.b16 %v252
  %v545 = vunpack.c.h.b16 %v252
  %v546 = vunpack.c.l.b16 %v253
  %v547 = vunpack.c.h.b16 %v253
  %v548 = vunpack.c.l.b16 %v254
  %v549 = vunpack.c.h.b16 %v254
  %v550 = vunpack.c.l.b16 %v255
  %v551 = vunpack.c.h.b16 %v255
  %v552 = vunpack.c.l.b16 %v256
  %v553 = vunpack.c.h.b16 %v256
  %v554 = vunpack.c.l.b16 %v257
  %v555 = vunpack.c.h.b16 %v257
  %v556 = vunpack.c.l.b16 %v258
  %v557 = vunpack.c.h.b16 %v258
  %v558 = vunpack.c.l.b16 %v259
  %v559 = vunpack.c.h.b16 %v259
  %v560 = vunpack.c.l.b16 %v260
  %v561 = vunpack.c.h.b16 %v260
  %v562 = vunpack.c.l.b16 %v261
  %v563 = vunpack.c.h.b16 %v261
  %v564 = vunpack.c.l.b16 %v262
  %v565 = vunpack.c.h.b16 %v262
  %v566 = vunpack.c.l.b16 %v263
  %v567 = vunpack.c.h.b16 %v263
  %v568 = vunpack.c.l.b16 %v264
  %v569 = vunpack.c.h.b16 %v264
  %v570 = vunpack.c.l.b16 %v265
  %v571 = vunpack.c.h.b16 %v265
  %v572 = vunpack.c.l.b16 %v266
  %v573 = vunpack.c.h.b16 %v266
  %v574 = vunpack.c.l.b16 %v267
  %v575 = vunpack.c.h.b16 %v267
  %v576 = vunpack.c.l.b16 %v268
  %v577 = vunpack.c.h.b16 %v268
  %v578 = vunpack.c.l.b16 %v269
  %v579 = vunpack.c.h.b16 %v269
  %v580 = vunpack.c.l.b16 %v270
  %v581 = vunpack.c.h.b16 %v270
  %v582 = vunpack.c.l.b16 %v271
  %v583 = vunpack.c.h.b16 %v271
  %v584 = vunpack.c.l.b16 %v272
  %v585 = vunpack.c.h.b16 %v272
  %v586 = vunpack.c.l.b16 %v273
  %v587 = vunpack.c.h.b16 %v273
  %v588 = vunpack.c.l.b16 %v274
  %v589 = vunpack.c.h.b16 %v274
  %v590 = vunpack.c.l.b16 %v275
  %v591 = vunpack.c.h.b16 %v275
  %v592 = vunpack.c.l.b16 %v276
  %v593 = vunpack.c.h.b16 %v276
  %v594 = vunpack.c.l.b16 %v277
  %v595 = vunpack.c.h.b16 %v277
  %v596 = vunpack.c.l.b16 %v278
  %v597 = vunpack.c.h.b16 %v278
  %v598 = vunpack.c.l.b16 %v279
  %v599 = vunpack.c.h.b16 %v279
  %v600 = vunpack.c.l.b16 %v280
  %v601 = vunpack.c.h.b16 %v280
  %v602 = vunpack.c.l.b16 %v281
  %v603 = vunpack.c.h.b16 %v281
  %v604 = vunpack.c.l.b16 %v282
  %v605 = vunpack.c.h.b16 %v282
  %v606 = vunpack.c.l.b16 %v283
  %v607 = vunpack.c.h.b16 %v283
  %v608 = vunpack.c.l.b16 %v284
  %v609 = vunpack.c.h.b16 %v284
  %v610 = vunpack.c.l.b16 %v285
  %v611 = vunpack.c.h.b16 %v285
  %v612 = vunpack.c.l.b16 %v286
  %v613 = vunpack.c.h.b16 %v286
  %v614 = vunpack.c.l.b16 %v287
  %v615 = vunpack.c.h.b16 %v287
  %v616 = vunpack.c.l.b16 %v288
  %v617 = vunpack.c.h.b16 %v288
  %v618 = vunpack.c.l.b16 %v289
  %v619 = vunpack.c.h.b16 %v289
  %v620 = vunpack.c.l.b16 %v290
  %v621 = vunpack.c.h.b16 %v290
  %v622 = vunpack.c.l.b16 %v291
  %v623 = vunpack.c.h.b16 %v291
  %v624 = vunpack.c.l.b16 %v292
  %v625 = vunpack.c.h.b16 %v292
  %v626 = vunpack.c.l.b16 %v293
  %v627 = vunpack.c.h.b16 %v293
  %v628 = vunpack.c.l.b16 %v294
  %v629 = vunpack.c.h.b16 %v294
  %v630 = vunpack.c.l.b16 %v295
  %v631 = vunpack.c.h.b16 %v295
  %v632 = vunpack.c.l.b16 %v296
  %v633 = vunpack.c.h.b16 %v296
  %v634 = vunpack.c.l.b16 %v297
  %v635 = vunpack.c.h.b16 %v297
  %v636 = vunpack.c.l.b16 %v298
  %v637 = vunpack.c.h.b16 %v298
  %v638 = vunpack.c.l.b16 %v299
  %v639 = vunpack.c.h.b16 %v299
  %v640 = vunpack.c.l.b16 %v300
  %v641 = vunpack.c.h.b16 %v300
  %v642 = vunpack.c.l.b16 %v301
  %v643 = vunpack.c.h.b16 %v301
  %v644 = vunpack.c.l.b16 %v302
  %v645 = vunpack.c.h.b16 %v302
  %v646 = vunpack.c.l.b16 %v303
  %v647 = vunpack.c.h.b16 %v303
  %v648 = vunpack.c.l.b16 %v304
  %v649 = vunpack.c.h.b16 %v304
  %v650 = vunpack.c.l.b16 %v305
  %v651 = vunpack.c.h.b16 %v305
  %v652 = vunpack.c.l.b16 %v306
  %v653 = vunpack.c.h.b16 %v306
  %v654 = vunpack.c.l.b16 %v307
  %v655 = vunpack.c.h.b16 %v307
  %v656 = vunpack.c.l.b16 %v308
  %v657 = vunpack.c.h.b16 %v308
  %v658 = vunpack.c.l.b16 %v309
  %v659 = vunpack.c.h.b16 %v309
  %v660 = vunpack.c.l.b16 %v310
  %v661 = vunpack.c.h.b16 %v310
  %v662 = vunpack.c.l.b16 %v311
  %v663 = vunpack.c.h.b16 %v311
  %v664 = vunpack.c.l.b16 %v312
  %v665 = vunpack.c.h.b16 %v312
  %v666 = vunpack.c.l.b16 %v313
  %v667 = vunpack.c.h.b16 %v313
  %v668 = vunpack.c.l.b16 %v314
  %v669 = vunpack.c.h.b16 %v314
  %v670 = vunpack.c.l.b16 %v315
  %v671 = vunpack.c.h.b16 %v315
  %v672 = vunpack.c.l.b16 %v316
  %v673 = vunpack.c.h.b16 %v316
  %v674 = vunpack.c.l.b16 %v317
  %v675 = vunpack.c.h.b16 %v317
  %v676 = vunpack.c.l.b16 %v318
  %v677 = vunpack.c.h.b16 %v318
  %v678 = vunpack.c.l.b16 %v319
  %v679 = vunpack.c.h.b16 %v319
  %v680 = vunpack.c.l.b16 %v320
  %v681 = vunpack.c.h.b16 %v320
  %v682 = vunpack.c.l.b16 %v321
  %v683 = vunpack.c.h.b16 %v321
  %v684 = vunpack.c.l.b16 %v322
  %v685 = vunpack.c.h.b16 %v322
  %v686 = vunpack.c.l.b16 %v323
  %v687 = vunpack.c.h.b16 %v323
  %v688 = vunpack.c.l.b16 %v324
  %v689 = vunpack.c.h.b16 %v324
  %v690 = vunpack.c.l.b16 %v325
  %v691 = vunpack.c.h.b16 %v325
  %v692 = vunpack.c.l.b16 %v326
  %v693 = vunpack.c.h.b16 %v326
  %v694 = vunpack.c.l.b16 %v327
  %v695 = vunpack.c.h.b16 %v327
  %v696 = vunpack.c.l.b16 %v328
  %v697 = vunpack.c.h.b16 %v328
  %v698 = vunpack.c.l.b16 %v329
  %v699 = vunpack.c.h.b16 %v329
  %v700 = vunpack.c.l.b16 %v330
  %v701 = vunpack.c.h.b16 %v330
  %v702 = vunpack.c.l.b16 %v331
  %v703 = vunpack.c.h.b16 %v331
  %v704 = vunpack.c.l.b16 %v332
  %v705 = vunpack.c.h.b16 %v332
  %v706 = vunpack.c.l.b16 %v333
  %v707 = vunpack.c.h.b16 %v333
  %v708 = vunpack.c.l.b16 %v334
  %v709 = vunpack.c.h.b16 %v334
  %v710 = vunpack.c.l.b16 %v335
  %v711 = vunpack.c.h.b16 %v335
  %v712 = vunpack.c.l.b16 %v336
  %v713 = vunpack.c.h.b16 %v336
  %v714 = vunpack.c.l.b16 %v337
  %v715 = vunpack.c.h.b16 %v337
  %v716 = vunpack.c.l.b16 %v338
  %v717 = vunpack.c.h.b16 %v338
  %v718 = vunpack.c.l.b16 %v339
  %v719 = vunpack.c.h.b16 %v339
  %v720 = vunpack.c.l.b16 %v340
  %v721 = vunpack.c.h.b16 %v340
  %v722 = vunpack.c.l.b16 %v341
  %v723 = vunpack.c.h.b16 %v341
  %v724 = vunpack.c.l.b16 %v342
  %v725 = vunpack.c.h.b16 %v342
  %v726 = vunpack.c.l.b16 %v343
  %v727 = vunpack.c.h.b16 %v343
  %v728 = vpack.c.b16 %v476, %v472
  %v729 = vpack.c.b16 %v477, %v473
  %v730 = vpack.c.b16 %v478, %v474
  %v731 = vpack.c.b16 %v479, %v475
  %v732 = vpack.c.b16 %v484, %v480
  %v733 = vpack.c.b16 %v485, %v481
  %v734 = vpack.c.b16 %v486, %v482
  %v735 = vpack.c.b16 %v487, %v483
  %v736 = vpack.c.b16 %v492, %v488
  %v737 = vpack.c.b16 %v493, %v489
  %v738 = vpack.c.b16 %v494, %v490
  %v739 = vpack.c.b16 %v495, %v491
  %v740 = vpack.c.b16 %v500, %v496
  %v741 = vpack.c.b16 %v501, %v497
  %v742 = vpack.c.b16 %v502, %v498
  %v743 = vpack.c.b16 %v503, %v499
  %v744 = vpack.c.b16 %v508, %v504
  %v745 = vpack.c.b16 %v509, %v505
  %v746 = vpack.c.b16 %v510, %v506
  %v747 = vpack.c.b16 %v511, %v507
  %v748 = vpack.c.b16 %v516, %v512
  %v749 = vpack.c.b16 %v517, %v513
  %v750 = vpack.c.b16 %v518, %v514
  %v751 = vpack.c.b16 %v519, %v515
  %v752 = vpack.c.b16 %v524, %v520
  %v753 = vpack.c.b16 %v525, %v521
  %v754 = vpack.c.b16 %v526, %v522
  %v755 = vpack.c.b16 %v527, %v523
  %v756 = vpack.c.b16 %v532, %v528
  %v757 = vpack.c.b16 %v533, %v529
  %v758 = vpack.c.b16 %v534, %v530
  %v759 = vpack.c.b16 %v535, %v531
  %v760 = vpack.c.b16 %v540, %v536
  %v761 = vpack.c.b16 %v541, %v537
  %v762 = vpack.c.b16 %v542, %v538
  %v763 = vpack.c.b16 %v543, %v539
  %v764 = vpack.c.b16 %v548, %v544
  %v765 = vpack.c.b16 %v549, %v545
  %v766 = vpack.c.b16 %v550, %v546
  %v767 = vpack.c.b16 %v551, %v547
  %v768 = vpack.c.b16 %v556, %v552
  %v769 = vpack.c.b16 %v557, %v553
  %v770 = vpack.c.b16 %v558, %v554
  %v771 = vpack.c.b16 %v559, %v555
  %v772 = vpack.c.b16 %v564, %v560
  %v773 = vpack.c.b16 %v565, %v561
  %v774 = vpack.c.b16 %v566, %v562
  %v775 = vpack.c.b16 %v567, %v563
  %v776 = vpack.c.b16 %v572, %v568
  %v777 = vpack.c.b16 %v573, %v569
  %v778 = vpack.c.b16 %v574, %v570
  %v779 = vpack.c.b16 %v575, %v571
  %v780 = vpack.c.b16 %v580, %v576
  %v781 = vpack.c.b16 %v581, %v577
  %v782 = vpack.c.b16 %v582, %v578
  %v783 = vpack.c.b16 %v583, %v579
  %v784 = vpack.c.b16 %v588, %v584
  %v785 = vpack.c.b16 %v589, %v585
  %v786 = vpack.c.b16 %v590, %v586
  %v787 = vpack.c.b16 %v591, %v587
  %v788 = vpack.c.b16 %v596, %v592
  %v789 = vpack.c.b16 %v597, %v593
  %v790 = vpack.c.b16 %v598, %v594
  %v791 = vpack.c.b16 %v599, %v595
  %v792 = vpack.c.b16 %v604, %v600
  %v793 = vpack.c.b16 %v605, %v601
  %v794 = vpack.c.b16 %v606, %v602
  %v795 = vpack.c.b16 %v607, %v603
  %v796 = vpack.c.b16 %v612, %v608
  %v797 = vpack.c.b16 %v613, %v609
  %v798 = vpack.c.b16 %v614, %v610
  %v799 = vpack.c.b16 %v615, %v611
  %v800 = vpack.c.b16 %v620, %v616
  %v801 = vpack.c.b16 %v621, %v617
  %v802 = vpack.c.b16 %v622, %v618
  %v803 = vpack.c.b16 %v623, %v619
  %v804 = vpack.c.b16 %v628, %v624
  %v805 = vpack.c.b16 %v629, %v625
  %v806 = vpack.c.b16 %v630, %v626
  %v807 = vpack.c.b16 %v631, %v627
  %v808 = vpack.c.b16 %v636, %v632
  %v809 = vpack.c.b16 %v637, %v633
  %v810 = vpack.c.b16 %v638, %v634
  %v811 = vpack.c.b16 %v639, %v635
  %v812 = vpack.c.b16 %v644, %v640
  %v813 = vpack.c.b16 %v645, %v641
  %v814 = vpack.c.b16 %v646, %v642
  %v815 = vpack.c.b16 %v647, %v643
  %v816 = vpack.c.b16 %v652, %v648
  %v817 = vpack.c.b16 %v653, %v649
  %v818 = vpack.c.b16 %v654, %v650
  %v819 = vpack.c.b16 %v655, %v651
  %v820 = vpack.c.b16 %v660, %v656
  %v821 = vpack.c.b16 %v661, %v657
  %v822 = vpack.c.b16 %v662, %v658
  %v823 = vpack.c.b16 %v663, %v659
  %v824 = vpack.c.b16 %v668, %v664
  %v825 = vpack.c.b16 %v669, %v665
  %v826 = vpack.c.b16 %v670, %v666
  %v827 = vpack.c.b16 %v671, %v667
  %v828 = vpack.c.b16 %v676, %v672
  %v829 = vpack.c.b16 %v677, %v673
  %v830 = vpack.c.b16 %v678, %v674
  %v831 = vpack.c.b16 %v679, %v675
  %v832 = vpack.c.b16 %v684, %v680
  %v833 = vpack.c.b16 %v685, %v681
  %v834 = vpack.c.b16 %v686, %v682
  %v835 = vpack.c.b16 %v687, %v683
  %v836 = vpack.c.b16 %v692, %v688
  %v837 = vpack.c.b16 %v693, %v689
  %v838 = vpack.c.b16 %v694, %v690
  %v839 = vpack.c.b16 %v695, %v691
  %v840 = vpack.c.b16 %v700, %v696
  %v841 = vpack.c.b16 %v701, %v697
  %v842 = vpack.c.b16 %v702, %v698
  %v843 = vpack.c.b16 %v703, %v699
  %v844 = vpack.c.b16 %v708, %v704
  %v845 = vpack.c.b16 %v709, %v705
  %v846 = vpack.c.b16 %v710, %v706
  %v847 = vpack.c.b16 %v711, %v707
  %v848 = vpack.c.b16 %v716, %v712
  %v849 = vpack.c.b16 %v717, %v713
  %v850 = vpack.c.b16 %v718, %v714
  %v851 = vpack.c.b16 %v719, %v715
  %v852 = vpack.c.b16 %v724, %v720
  %v853 = vpack.c.b16 %v725, %v721
  %v854 = vpack.c.b16 %v726, %v722
  %v855 = vpack.c.b16 %v727, %v723
  %v1048 = vunpack.c.l.b16 %v88
  %v1049 = vunpack.c.l.b16 %v89
  %v1050 = vunpack.c.l.b16 %v90
  %v1051 = vunpack.c.l.b16 %v91
  %v1052 = vunpack.c.l.b16 %v92
  %v1053 = vunpack.c.l.b16 %v93
  %v1054 = vunpack.c.l.b16 %v94
  %v1055 = vunpack.c.l.b16 %v95
  %v1056 = vunpack.c.l.b16 %v96
  %v1057 = vunpack.c.l.b16 %v97
  %v1058 = vunpack.c.l.b16 %v98
  %v1059 = vunpack.c.l.b16 %v99
  %v1060 = vunpack.c.l.b16 %v100
  %v1061 = vunpack.c.l.b16 %v101
  %v1062 = vunpack.c.l.b16 %v102
  %v1063 = vunpack.c.l.b16 %v103
  %v1064 = vunpack.c.l.b16 %v104
  %v1065 = vunpack.c.l.b16 %v105
  %v1066 = vunpack.c.l.b16 %v106
  %v1067 = vunpack.c.l.b16 %v107
  %v1068 = vunpack.c.l.b16 %v108
  %v1069 = vunpack.c.l.b16 %v109
  %v1070 = vunpack.c.l.b16 %v110
  %v1071 = vunpack.c.l.b16 %v111
  %v1072 = vunpack.c.l.b16 %v112
  %v1073 = vunpack.c.l.b16 %v113
  %v1074 = vunpack.c.l.b16 %v114
  %v1075 = vunpack.c.l.b16 %v115
  %v1076 = vunpack.c.l.b16 %v116
  %v1077 = vunpack.c.l.b16 %v117
  %v1078 = vunpack.c.l.b16 %v118
  %v1079 = vunpack.c.l.b16 %v119
  %v1080 = vunpack.c.l.b16 %v120
  %v1081 = vunpack.c.l.b16 %v121
  %v1082 = vunpack.c.l.b16 %v122
  %v1083 = vunpack.c.l.b16 %v123
  %v1084 = vunpack.c.l.b16 %v124
  %v1085 = vunpack.c.l.b16 %v125
  %v1086 = vunpack.c.l.b16 %v126
  %v1087 = vunpack.c.l.b16 %v127
  %v1088 = vunpack.c.l.b16 %v128
  %v1089 = vunpack.c.l.b16 %v129
  %v1090 = vunpack.c.l.b16 %v130
  %v1091 = vunpack.c.l.b16 %v131
  %v1092 = vunpack.c.l.b16 %v132
  %v1093 = vunpack.c.l.b16 %v133
  %v1094 = vunpack.c.l.b16 %v134
  %v1095 = vunpack.c.l.b16 %v135
  %v1096 = vunpack.c.l.b16 %v136
  %v1097 = vunpack.c.l.b16 %v137
  %v1098 = vunpack.c.l.b16 %v138
  %v1099 = vunpack.c.l.b16 %v139
  %v1100 = vunpack.c.l.b16 %v140
  %v1101 = vunpack.c.l.b16 %v141
  %v1102 = vunpack.c.l.b16 %v142
  %v1103 = vunpack.c.l.b16 %v143
  %v1104 = vunpack.c.l.b16 %v144
  %v1105 = vunpack.c.l.b16 %v145
  %v1106 = vunpack.c.l.b16 %v146
  %v1107 = vunpack.c.l.b16 %v147
  %v1108 = vunpack.c.l.b16 %v148
  %v1109 = vunpack.c.l.b16 %v149
  %v1110 = vunpack.c.l.b16 %v150
  %v1111 = vunpack.c.l.b16 %v151
  %v1112 = vpack.c.b16 %v1049, %v1048
  %v1113 = vpack.c.b16 %v1051, %v1050
  %v1114 = vpack.c.b16 %v1053, %v1052
  %v1115 = vpack.c.b16 %v1055, %v1054
  %v1116 = vpack.c.b16 %v1057, %v1056
  %v1117 = vpack.c.b16 %v1059, %v1058
  %v1118 = vpack.c.b16 %v1061, %v1060
  %v1119 = vpack.c.b16 %v1063, %v1062
  %v1120 = vpack.c.b16 %v1065, %v1064
  %v1121 = vpack.c.b16 %v1067, %v1066
  %v1122 = vpack.c.b16 %v1069, %v1068
  %v1123 = vpack.c.b16 %v1071, %v1070
  %v1124 = vpack.c.b16 %v1073, %v1072
  %v1125 = vpack.c.b16 %v1075, %v1074
  %v1126 = vpack.c.b16 %v1077, %v1076
  %v1127 = vpack.c.b16 %v1079, %v1078
  %v1128 = vpack.c.b16 %v1081, %v1080
  %v1129 = vpack.c.b16 %v1083, %v1082
  %v1130 = vpack.c.b16 %v1085, %v1084
  %v1131 = vpack.c.b16 %v1087, %v1086
  %v1132 = vpack.c.b16 %v1089, %v1088
  %v1133 = vpack.c.b16 %v1091, %v1090
  %v1134 = vpack.c.b16 %v1093, %v1092
  %v1135 = vpack.c.b16 %v1095, %v1094
  %v1136 = vpack.c.b16 %v1097, %v1096
  %v1137 = vpack.c.b16 %v1099, %v1098
  %v1138 = vpack.c.b16 %v1101, %v1100
  %v1139 = vpack.c.b16 %v1103, %v1102
  %v1140 = vpack.c.b16 %v1105, %v1104
  %v1141 = vpack.c.b16 %v1107, %v1106
  %v1142 = vpack.c.b16 %v1109, %v1108
  %v1143 = vpack.c.b16 %v1111, %v1110
  %1176 = vmatprep.subr.bf16.mxu0 0
  %1177 = vmatpush1.bf16.msra.mxu0 %v1119
  %1178 = vmatprep.subr.bf16.mxu0 0
  %1179 = vmatpush1.bf16.msra.mxu0 %v1118
  %1180 = vmatprep.subr.bf16.mxu0 0
  %1181 = vmatpush1.bf16.msra.mxu0 %v1117
  %1182 = vmatprep.subr.bf16.mxu0 0
  %1183 = vmatpush1.bf16.msra.mxu0 %v1116
  %1184 = vmatprep.subr.bf16.mxu0 0
  %1185 = vmatpush1.bf16.msra.mxu0 %v1115
  %1186 = vmatprep.subr.bf16.mxu0 0
  %1187 = vmatpush1.bf16.msra.mxu0 %v1114
  %1188 = vmatprep.subr.bf16.mxu0 0
  %1189 = vmatpush1.bf16.msra.mxu0 %v1113
  %1190 = vmatprep.subr.bf16.mxu0 0
  %1191 = vmatpush1.bf16.msra.mxu0 %v1112
  %1192 = vmatprep.subr.bf16.mxu0 0
  %1193 = vmatpush2.bf16.msra.mxu0 %v1127
  %1194 = vmatprep.subr.bf16.mxu0 0
  %1195 = vmatpush2.bf16.msra.mxu0 %v1126
  %1196 = vmatprep.subr.bf16.mxu0 0
  %1197 = vmatpush2.bf16.msra.mxu0 %v1125
  %1198 = vmatprep.subr.bf16.mxu0 0
  %1199 = vmatpush2.bf16.msra.mxu0 %v1124
  %1200 = vmatprep.subr.bf16.mxu0 0
  %1201 = vmatpush2.bf16.msra.mxu0 %v1123
  %1202 = vmatprep.subr.bf16.mxu0 0
  %1203 = vmatpush2.bf16.msra.mxu0 %v1122
  %1204 = vmatprep.subr.bf16.mxu0 0
  %1205 = vmatpush2.bf16.msra.mxu0 %v1121
  %1206 = vmatprep.subr.bf16.mxu0 0
  %1207 = vmatpush2.bf16.msra.mxu0 %v1120
  %1208 = vmatprep.mubr.bf16.mxu0 %v729
  %1209 = vmatmul.mubr.bf16.gmra.mxu0 %v728
  %v1210 = vpop.f32.mrf.mxu0
  %v1211 = vadd.f32 0.0, %v1210
  %v1212 = vpop.f32.mrf.mxu0
  %v1213 = vpop.f32.mrf.mxu0
  %v1214 = vadd.f32 0.0, %v1213
  %v1215 = vpop.f32.mrf.mxu0
  %1216 = vmatprep.mubr.bf16.mxu0 %v733
  %1217 = vmatmul.mubr.bf16.gmra.mxu0 %v732
  %v1218 = vpop.f32.mrf.mxu0
  %v1219 = vadd.f32 0.0, %v1218
  %v1220 = vpop.f32.mrf.mxu0
  %v1221 = vpop.f32.mrf.mxu0
  %v1222 = vadd.f32 0.0, %v1221
  %v1223 = vpop.f32.mrf.mxu0
  %1224 = vmatprep.mubr.bf16.mxu0 %v737
  %1225 = vmatmul.mubr.bf16.gmra.mxu0 %v736
  %v1226 = vpop.f32.mrf.mxu0
  %v1227 = vadd.f32 0.0, %v1226
  %v1228 = vpop.f32.mrf.mxu0
  %v1229 = vpop.f32.mrf.mxu0
  %v1230 = vadd.f32 0.0, %v1229
  %v1231 = vpop.f32.mrf.mxu0
  %1232 = vmatprep.mubr.bf16.mxu0 %v741
  %1233 = vmatmul.mubr.bf16.gmra.mxu0 %v740
  %v1234 = vpop.f32.mrf.mxu0
  %v1235 = vadd.f32 0.0, %v1234
  %v1236 = vpop.f32.mrf.mxu0
  %v1237 = vpop.f32.mrf.mxu0
  %v1238 = vadd.f32 0.0, %v1237
  %v1239 = vpop.f32.mrf.mxu0
  %1240 = vmatprep.mubr.bf16.mxu0 %v745
  %1241 = vmatmul.mubr.bf16.gmra.mxu0 %v744
  %v1242 = vpop.f32.mrf.mxu0
  %v1243 = vadd.f32 0.0, %v1242
  %v1244 = vpop.f32.mrf.mxu0
  %v1245 = vpop.f32.mrf.mxu0
  %v1246 = vadd.f32 0.0, %v1245
  %v1247 = vpop.f32.mrf.mxu0
  %1248 = vmatprep.mubr.bf16.mxu0 %v749
  %1249 = vmatmul.mubr.bf16.gmra.mxu0 %v748
  %v1250 = vpop.f32.mrf.mxu0
  %v1251 = vadd.f32 0.0, %v1250
  %v1252 = vpop.f32.mrf.mxu0
  %v1253 = vpop.f32.mrf.mxu0
  %v1254 = vadd.f32 0.0, %v1253
  %v1255 = vpop.f32.mrf.mxu0
  %1256 = vmatprep.mubr.bf16.mxu0 %v753
  %1257 = vmatmul.mubr.bf16.gmra.mxu0 %v752
  %v1258 = vpop.f32.mrf.mxu0
  %v1259 = vadd.f32 0.0, %v1258
  %v1260 = vpop.f32.mrf.mxu0
  %v1261 = vpop.f32.mrf.mxu0
  %v1262 = vadd.f32 0.0, %v1261
  %v1263 = vpop.f32.mrf.mxu0
  %1264 = vmatprep.mubr.bf16.mxu0 %v757
  %1265 = vmatmul.mubr.bf16.gmra.mxu0 %v756
  %v1266 = vpop.f32.mrf.mxu0
  %v1267 = vadd.f32 0.0, %v1266
  %v1268 = vpop.f32.mrf.mxu0
  %v1269 = vpop.f32.mrf.mxu0
  %v1270 = vadd.f32 0.0, %v1269
  %v1271 = vpop.f32.mrf.mxu0
  %1272 = vmatprep.mubr.bf16.mxu0 %v761
  %1273 = vmatmul.mubr.bf16.gmra.mxu0 %v760
  %v1274 = vpop.f32.mrf.mxu0
  %v1275 = vadd.f32 0.0, %v1274
  %v1276 = vpop.f32.mrf.mxu0
  %v1277 = vpop.f32.mrf.mxu0
  %v1278 = vadd.f32 0.0, %v1277
  %v1279 = vpop.f32.mrf.mxu0
  %1280 = vmatprep.mubr.bf16.mxu0 %v765
  %1281 = vmatmul.mubr.bf16.gmra.mxu0 %v764
  %v1282 = vpop.f32.mrf.mxu0
  %v1283 = vadd.f32 0.0, %v1282
  %v1284 = vpop.f32.mrf.mxu0
  %v1285 = vpop.f32.mrf.mxu0
  %v1286 = vadd.f32 0.0, %v1285
  %v1287 = vpop.f32.mrf.mxu0
  %1288 = vmatprep.mubr.bf16.mxu0 %v769
  %1289 = vmatmul.mubr.bf16.gmra.mxu0 %v768
  %v1290 = vpop.f32.mrf.mxu0
  %v1291 = vadd.f32 0.0, %v1290
  %v1292 = vpop.f32.mrf.mxu0
  %v1293 = vpop.f32.mrf.mxu0
  %v1294 = vadd.f32 0.0, %v1293
  %v1295 = vpop.f32.mrf.mxu0
  %1296 = vmatprep.mubr.bf16.mxu0 %v773
  %1297 = vmatmul.mubr.bf16.gmra.mxu0 %v772
  %v1298 = vpop.f32.mrf.mxu0
  %v1299 = vadd.f32 0.0, %v1298
  %v1300 = vpop.f32.mrf.mxu0
  %v1301 = vpop.f32.mrf.mxu0
  %v1302 = vadd.f32 0.0, %v1301
  %v1303 = vpop.f32.mrf.mxu0
  %1304 = vmatprep.mubr.bf16.mxu0 %v777
  %1305 = vmatmul.mubr.bf16.gmra.mxu0 %v776
  %v1306 = vpop.f32.mrf.mxu0
  %v1307 = vadd.f32 0.0, %v1306
  %v1308 = vpop.f32.mrf.mxu0
  %v1309 = vpop.f32.mrf.mxu0
  %v1310 = vadd.f32 0.0, %v1309
  %v1311 = vpop.f32.mrf.mxu0
  %1312 = vmatprep.mubr.bf16.mxu0 %v781
  %1313 = vmatmul.mubr.bf16.gmra.mxu0 %v780
  %v1314 = vpop.f32.mrf.mxu0
  %v1315 = vadd.f32 0.0, %v1314
  %v1316 = vpop.f32.mrf.mxu0
  %v1317 = vpop.f32.mrf.mxu0
  %v1318 = vadd.f32 0.0, %v1317
  %v1319 = vpop.f32.mrf.mxu0
  %1320 = vmatprep.mubr.bf16.mxu0 %v785
  %1321 = vmatmul.mubr.bf16.gmra.mxu0 %v784
  %v1322 = vpop.f32.mrf.mxu0
  %v1323 = vadd.f32 0.0, %v1322
  %v1324 = vpop.f32.mrf.mxu0
  %v1325 = vpop.f32.mrf.mxu0
  %v1326 = vadd.f32 0.0, %v1325
  %v1327 = vpop.f32.mrf.mxu0
  %1328 = vmatprep.mubr.bf16.mxu0 %v789
  %1329 = vmatmul.mubr.bf16.gmra.mxu0 %v788
  %v1330 = vpop.f32.mrf.mxu0
  %v1331 = vadd.f32 0.0, %v1330
  %v1332 = vpop.f32.mrf.mxu0
  %v1333 = vpop.f32.mrf.mxu0
  %v1334 = vadd.f32 0.0, %v1333
  %v1335 = vpop.f32.mrf.mxu0
  %1336 = vmatprep.mubr.bf16.mxu0 %v793
  %1337 = vmatmul.mubr.bf16.gmra.mxu0 %v792
  %v1338 = vpop.f32.mrf.mxu0
  %v1339 = vadd.f32 0.0, %v1338
  %v1340 = vpop.f32.mrf.mxu0
  %v1341 = vpop.f32.mrf.mxu0
  %v1342 = vadd.f32 0.0, %v1341
  %v1343 = vpop.f32.mrf.mxu0
  %1344 = vmatprep.mubr.bf16.mxu0 %v797
  %1345 = vmatmul.mubr.bf16.gmra.mxu0 %v796
  %v1346 = vpop.f32.mrf.mxu0
  %v1347 = vadd.f32 0.0, %v1346
  %v1348 = vpop.f32.mrf.mxu0
  %v1349 = vpop.f32.mrf.mxu0
  %v1350 = vadd.f32 0.0, %v1349
  %v1351 = vpop.f32.mrf.mxu0
  %1352 = vmatprep.mubr.bf16.mxu0 %v801
  %1353 = vmatmul.mubr.bf16.gmra.mxu0 %v800
  %v1354 = vpop.f32.mrf.mxu0
  %v1355 = vadd.f32 0.0, %v1354
  %v1356 = vpop.f32.mrf.mxu0
  %v1357 = vpop.f32.mrf.mxu0
  %v1358 = vadd.f32 0.0, %v1357
  %v1359 = vpop.f32.mrf.mxu0
  %1360 = vmatprep.mubr.bf16.mxu0 %v805
  %1361 = vmatmul.mubr.bf16.gmra.mxu0 %v804
  %v1362 = vpop.f32.mrf.mxu0
  %v1363 = vadd.f32 0.0, %v1362
  %v1364 = vpop.f32.mrf.mxu0
  %v1365 = vpop.f32.mrf.mxu0
  %v1366 = vadd.f32 0.0, %v1365
  %v1367 = vpop.f32.mrf.mxu0
  %1368 = vmatprep.mubr.bf16.mxu0 %v809
  %1369 = vmatmul.mubr.bf16.gmra.mxu0 %v808
  %v1370 = vpop.f32.mrf.mxu0
  %v1371 = vadd.f32 0.0, %v1370
  %v1372 = vpop.f32.mrf.mxu0
  %v1373 = vpop.f32.mrf.mxu0
  %v1374 = vadd.f32 0.0, %v1373
  %v1375 = vpop.f32.mrf.mxu0
  %1376 = vmatprep.mubr.bf16.mxu0 %v813
  %1377 = vmatmul.mubr.bf16.gmra.mxu0 %v812
  %v1378 = vpop.f32.mrf.mxu0
  %v1379 = vadd.f32 0.0, %v1378
  %v1380 = vpop.f32.mrf.mxu0
  %v1381 = vpop.f32.mrf.mxu0
  %v1382 = vadd.f32 0.0, %v1381
  %v1383 = vpop.f32.mrf.mxu0
  %1384 = vmatprep.mubr.bf16.mxu0 %v817
  %1385 = vmatmul.mubr.bf16.gmra.mxu0 %v816
  %v1386 = vpop.f32.mrf.mxu0
  %v1387 = vadd.f32 0.0, %v1386
  %v1388 = vpop.f32.mrf.mxu0
  %v1389 = vpop.f32.mrf.mxu0
  %v1390 = vadd.f32 0.0, %v1389
  %v1391 = vpop.f32.mrf.mxu0
  %1392 = vmatprep.mubr.bf16.mxu0 %v821
  %1393 = vmatmul.mubr.bf16.gmra.mxu0 %v820
  %v1394 = vpop.f32.mrf.mxu0
  %v1395 = vadd.f32 0.0, %v1394
  %v1396 = vpop.f32.mrf.mxu0
  %v1397 = vpop.f32.mrf.mxu0
  %v1398 = vadd.f32 0.0, %v1397
  %v1399 = vpop.f32.mrf.mxu0
  %1400 = vmatprep.mubr.bf16.mxu0 %v825
  %1401 = vmatmul.mubr.bf16.gmra.mxu0 %v824
  %v1402 = vpop.f32.mrf.mxu0
  %v1403 = vadd.f32 0.0, %v1402
  %v1404 = vpop.f32.mrf.mxu0
  %v1405 = vpop.f32.mrf.mxu0
  %v1406 = vadd.f32 0.0, %v1405
  %v1407 = vpop.f32.mrf.mxu0
  %1408 = vmatprep.mubr.bf16.mxu0 %v829
  %1409 = vmatmul.mubr.bf16.gmra.mxu0 %v828
  %v1410 = vpop.f32.mrf.mxu0
  %v1411 = vadd.f32 0.0, %v1410
  %v1412 = vpop.f32.mrf.mxu0
  %v1413 = vpop.f32.mrf.mxu0
  %v1414 = vadd.f32 0.0, %v1413
  %v1415 = vpop.f32.mrf.mxu0
  %1416 = vmatprep.mubr.bf16.mxu0 %v833
  %1417 = vmatmul.mubr.bf16.gmra.mxu0 %v832
  %v1418 = vpop.f32.mrf.mxu0
  %v1419 = vadd.f32 0.0, %v1418
  %v1420 = vpop.f32.mrf.mxu0
  %v1421 = vpop.f32.mrf.mxu0
  %v1422 = vadd.f32 0.0, %v1421
  %v1423 = vpop.f32.mrf.mxu0
  %1424 = vmatprep.mubr.bf16.mxu0 %v837
  %1425 = vmatmul.mubr.bf16.gmra.mxu0 %v836
  %v1426 = vpop.f32.mrf.mxu0
  %v1427 = vadd.f32 0.0, %v1426
  %v1428 = vpop.f32.mrf.mxu0
  %v1429 = vpop.f32.mrf.mxu0
  %v1430 = vadd.f32 0.0, %v1429
  %v1431 = vpop.f32.mrf.mxu0
  %1432 = vmatprep.mubr.bf16.mxu0 %v841
  %1433 = vmatmul.mubr.bf16.gmra.mxu0 %v840
  %v1434 = vpop.f32.mrf.mxu0
  %v1435 = vadd.f32 0.0, %v1434
  %v1436 = vpop.f32.mrf.mxu0
  %v1437 = vpop.f32.mrf.mxu0
  %v1438 = vadd.f32 0.0, %v1437
  %v1439 = vpop.f32.mrf.mxu0
  %1440 = vmatprep.mubr.bf16.mxu0 %v845
  %1441 = vmatmul.mubr.bf16.gmra.mxu0 %v844
  %v1442 = vpop.f32.mrf.mxu0
  %v1443 = vadd.f32 0.0, %v1442
  %v1444 = vpop.f32.mrf.mxu0
  %v1445 = vpop.f32.mrf.mxu0
  %v1446 = vadd.f32 0.0, %v1445
  %v1447 = vpop.f32.mrf.mxu0
  %1448 = vmatprep.mubr.bf16.mxu0 %v849
  %1449 = vmatmul.mubr.bf16.gmra.mxu0 %v848
  %v1450 = vpop.f32.mrf.mxu0
  %v1451 = vadd.f32 0.0, %v1450
  %v1452 = vpop.f32.mrf.mxu0
  %v1453 = vpop.f32.mrf.mxu0
  %v1454 = vadd.f32 0.0, %v1453
  %v1455 = vpop.f32.mrf.mxu0
  %1456 = vmatprep.mubr.bf16.mxu0 %v853
  %1457 = vmatmul.mubr.bf16.gmra.mxu0 %v852
  %v1458 = vpop.f32.mrf.mxu0
  %v1459 = vadd.f32 0.0, %v1458
  %v1460 = vpop.f32.mrf.mxu0
  %v1461 = vpop.f32.mrf.mxu0
  %v1462 = vadd.f32 0.0, %v1461
  %v1463 = vpop.f32.mrf.mxu0
  %1464 = vdwg.mxu0
  %1465 = vmatprep.subr.bf16.mxu0 0
  %1466 = vmatpush1.bf16.msra.mxu0 %v1135
  %1467 = vmatprep.subr.bf16.mxu0 0
  %1468 = vmatpush1.bf16.msra.mxu0 %v1134
  %1469 = vmatprep.subr.bf16.mxu0 0
  %1470 = vmatpush1.bf16.msra.mxu0 %v1133
  %1471 = vmatprep.subr.bf16.mxu0 0
  %1472 = vmatpush1.bf16.msra.mxu0 %v1132
  %1473 = vmatprep.subr.bf16.mxu0 0
  %1474 = vmatpush1.bf16.msra.mxu0 %v1131
  %1475 = vmatprep.subr.bf16.mxu0 0
  %1476 = vmatpush1.bf16.msra.mxu0 %v1130
  %1477 = vmatprep.subr.bf16.mxu0 0
  %1478 = vmatpush1.bf16.msra.mxu0 %v1129
  %1479 = vmatprep.subr.bf16.mxu0 0
  %1480 = vmatpush1.bf16.msra.mxu0 %v1128
  %1481 = vmatprep.subr.bf16.mxu0 0
  %1482 = vmatpush2.bf16.msra.mxu0 %v1143
  %1483 = vmatprep.subr.bf16.mxu0 0
  %1484 = vmatpush2.bf16.msra.mxu0 %v1142
  %1485 = vmatprep.subr.bf16.mxu0 0
  %1486 = vmatpush2.bf16.msra.mxu0 %v1141
  %1487 = vmatprep.subr.bf16.mxu0 0
  %1488 = vmatpush2.bf16.msra.mxu0 %v1140
  %1489 = vmatprep.subr.bf16.mxu0 0
  %1490 = vmatpush2.bf16.msra.mxu0 %v1139
  %1491 = vmatprep.subr.bf16.mxu0 0
  %1492 = vmatpush2.bf16.msra.mxu0 %v1138
  %1493 = vmatprep.subr.bf16.mxu0 0
  %1494 = vmatpush2.bf16.msra.mxu0 %v1137
  %1495 = vmatprep.subr.bf16.mxu0 0
  %1496 = vmatpush2.bf16.msra.mxu0 %v1136
  %1497 = vmatprep.mubr.bf16.mxu0 %v731
  %1498 = vmatmul.mubr.bf16.gmra.mxu0 %v730
  %v1499 = vpop.f32.mrf.mxu0
  %v1500 = vadd.f32 %v1211, %v1499
  %v1501 = vpop.f32.mrf.mxu0
  %v1502 = vpop.f32.mrf.mxu0
  %v1503 = vadd.f32 %v1214, %v1502
  %v1504 = vpop.f32.mrf.mxu0
  %1505 = vmatprep.mubr.bf16.mxu0 %v735
  %1506 = vmatmul.mubr.bf16.gmra.mxu0 %v734
  %v1507 = vpop.f32.mrf.mxu0
  %v1508 = vadd.f32 %v1219, %v1507
  %v1509 = vpop.f32.mrf.mxu0
  %v1510 = vpop.f32.mrf.mxu0
  %v1511 = vadd.f32 %v1222, %v1510
  %v1512 = vpop.f32.mrf.mxu0
  %1513 = vmatprep.mubr.bf16.mxu0 %v739
  %1514 = vmatmul.mubr.bf16.gmra.mxu0 %v738
  %v1515 = vpop.f32.mrf.mxu0
  %v1516 = vadd.f32 %v1227, %v1515
  %v1517 = vpop.f32.mrf.mxu0
  %v1518 = vpop.f32.mrf.mxu0
  %v1519 = vadd.f32 %v1230, %v1518
  %v1520 = vpop.f32.mrf.mxu0
  %1521 = vmatprep.mubr.bf16.mxu0 %v743
  %1522 = vmatmul.mubr.bf16.gmra.mxu0 %v742
  %v1523 = vpop.f32.mrf.mxu0
  %v1524 = vadd.f32 %v1235, %v1523
  %v1525 = vpop.f32.mrf.mxu0
  %v1526 = vpop.f32.mrf.mxu0
  %v1527 = vadd.f32 %v1238, %v1526
  %v1528 = vpop.f32.mrf.mxu0
  %1529 = vmatprep.mubr.bf16.mxu0 %v747
  %1530 = vmatmul.mubr.bf16.gmra.mxu0 %v746
  %v1531 = vpop.f32.mrf.mxu0
  %v1532 = vadd.f32 %v1243, %v1531
  %v1533 = vpop.f32.mrf.mxu0
  %v1534 = vpop.f32.mrf.mxu0
  %v1535 = vadd.f32 %v1246, %v1534
  %v1536 = vpop.f32.mrf.mxu0
  %1537 = vmatprep.mubr.bf16.mxu0 %v751
  %1538 = vmatmul.mubr.bf16.gmra.mxu0 %v750
  %v1539 = vpop.f32.mrf.mxu0
  %v1540 = vadd.f32 %v1251, %v1539
  %v1541 = vpop.f32.mrf.mxu0
  %v1542 = vpop.f32.mrf.mxu0
  %v1543 = vadd.f32 %v1254, %v1542
  %v1544 = vpop.f32.mrf.mxu0
  %1545 = vmatprep.mubr.bf16.mxu0 %v755
  %1546 = vmatmul.mubr.bf16.gmra.mxu0 %v754
  %v1547 = vpop.f32.mrf.mxu0
  %v1548 = vadd.f32 %v1259, %v1547
  %v1549 = vpop.f32.mrf.mxu0
  %v1550 = vpop.f32.mrf.mxu0
  %v1551 = vadd.f32 %v1262, %v1550
  %v1552 = vpop.f32.mrf.mxu0
  %1553 = vmatprep.mubr.bf16.mxu0 %v759
  %1554 = vmatmul.mubr.bf16.gmra.mxu0 %v758
  %v1555 = vpop.f32.mrf.mxu0
  %v1556 = vadd.f32 %v1267, %v1555
  %v1557 = vpop.f32.mrf.mxu0
  %v1558 = vpop.f32.mrf.mxu0
  %v1559 = vadd.f32 %v1270, %v1558
  %v1560 = vpop.f32.mrf.mxu0
  %1561 = vmatprep.mubr.bf16.mxu0 %v763
  %1562 = vmatmul.mubr.bf16.gmra.mxu0 %v762
  %v1563 = vpop.f32.mrf.mxu0
  %v1564 = vadd.f32 %v1275, %v1563
  %v1565 = vpop.f32.mrf.mxu0
  %v1566 = vpop.f32.mrf.mxu0
  %v1567 = vadd.f32 %v1278, %v1566
  %v1568 = vpop.f32.mrf.mxu0
  %1569 = vmatprep.mubr.bf16.mxu0 %v767
  %1570 = vmatmul.mubr.bf16.gmra.mxu0 %v766
  %v1571 = vpop.f32.mrf.mxu0
  %v1572 = vadd.f32 %v1283, %v1571
  %v1573 = vpop.f32.mrf.mxu0
  %v1574 = vpop.f32.mrf.mxu0
  %v1575 = vadd.f32 %v1286, %v1574
  %v1576 = vpop.f32.mrf.mxu0
  %1577 = vmatprep.mubr.bf16.mxu0 %v771
  %1578 = vmatmul.mubr.bf16.gmra.mxu0 %v770
  %v1579 = vpop.f32.mrf.mxu0
  %v1580 = vadd.f32 %v1291, %v1579
  %v1581 = vpop.f32.mrf.mxu0
  %v1582 = vpop.f32.mrf.mxu0
  %v1583 = vadd.f32 %v1294, %v1582
  %v1584 = vpop.f32.mrf.mxu0
  %1585 = vmatprep.mubr.bf16.mxu0 %v775
  %1586 = vmatmul.mubr.bf16.gmra.mxu0 %v774
  %v1587 = vpop.f32.mrf.mxu0
  %v1588 = vadd.f32 %v1299, %v1587
  %v1589 = vpop.f32.mrf.mxu0
  %v1590 = vpop.f32.mrf.mxu0
  %v1591 = vadd.f32 %v1302, %v1590
  %v1592 = vpop.f32.mrf.mxu0
  %1593 = vmatprep.mubr.bf16.mxu0 %v779
  %1594 = vmatmul.mubr.bf16.gmra.mxu0 %v778
  %v1595 = vpop.f32.mrf.mxu0
  %v1596 = vadd.f32 %v1307, %v1595
  %v1597 = vpop.f32.mrf.mxu0
  %v1598 = vpop.f32.mrf.mxu0
  %v1599 = vadd.f32 %v1310, %v1598
  %v1600 = vpop.f32.mrf.mxu0
  %1601 = vmatprep.mubr.bf16.mxu0 %v783
  %1602 = vmatmul.mubr.bf16.gmra.mxu0 %v782
  %v1603 = vpop.f32.mrf.mxu0
  %v1604 = vadd.f32 %v1315, %v1603
  %v1605 = vpop.f32.mrf.mxu0
  %v1606 = vpop.f32.mrf.mxu0
  %v1607 = vadd.f32 %v1318, %v1606
  %v1608 = vpop.f32.mrf.mxu0
  %1609 = vmatprep.mubr.bf16.mxu0 %v787
  %1610 = vmatmul.mubr.bf16.gmra.mxu0 %v786
  %v1611 = vpop.f32.mrf.mxu0
  %v1612 = vadd.f32 %v1323, %v1611
  %v1613 = vpop.f32.mrf.mxu0
  %v1614 = vpop.f32.mrf.mxu0
  %v1615 = vadd.f32 %v1326, %v1614
  %v1616 = vpop.f32.mrf.mxu0
  %1617 = vmatprep.mubr.bf16.mxu0 %v791
  %1618 = vmatmul.mubr.bf16.gmra.mxu0 %v790
  %v1619 = vpop.f32.mrf.mxu0
  %v1620 = vadd.f32 %v1331, %v1619
  %v1621 = vpop.f32.mrf.mxu0
  %v1622 = vpop.f32.mrf.mxu0
  %v1623 = vadd.f32 %v1334, %v1622
  %v1624 = vpop.f32.mrf.mxu0
  %1625 = vmatprep.mubr.bf16.mxu0 %v795
  %1626 = vmatmul.mubr.bf16.gmra.mxu0 %v794
  %v1627 = vpop.f32.mrf.mxu0
  %v1628 = vadd.f32 %v1339, %v1627
  %v1629 = vpop.f32.mrf.mxu0
  %v1630 = vpop.f32.mrf.mxu0
  %v1631 = vadd.f32 %v1342, %v1630
  %v1632 = vpop.f32.mrf.mxu0
  %1633 = vmatprep.mubr.bf16.mxu0 %v799
  %1634 = vmatmul.mubr.bf16.gmra.mxu0 %v798
  %v1635 = vpop.f32.mrf.mxu0
  %v1636 = vadd.f32 %v1347, %v1635
  %v1637 = vpop.f32.mrf.mxu0
  %v1638 = vpop.f32.mrf.mxu0
  %v1639 = vadd.f32 %v1350, %v1638
  %v1640 = vpop.f32.mrf.mxu0
  %1641 = vmatprep.mubr.bf16.mxu0 %v803
  %1642 = vmatmul.mubr.bf16.gmra.mxu0 %v802
  %v1643 = vpop.f32.mrf.mxu0
  %v1644 = vadd.f32 %v1355, %v1643
  %v1645 = vpop.f32.mrf.mxu0
  %v1646 = vpop.f32.mrf.mxu0
  %v1647 = vadd.f32 %v1358, %v1646
  %v1648 = vpop.f32.mrf.mxu0
  %1649 = vmatprep.mubr.bf16.mxu0 %v807
  %1650 = vmatmul.mubr.bf16.gmra.mxu0 %v806
  %v1651 = vpop.f32.mrf.mxu0
  %v1652 = vadd.f32 %v1363, %v1651
  %v1653 = vpop.f32.mrf.mxu0
  %v1654 = vpop.f32.mrf.mxu0
  %v1655 = vadd.f32 %v1366, %v1654
  %v1656 = vpop.f32.mrf.mxu0
  %1657 = vmatprep.mubr.bf16.mxu0 %v811
  %1658 = vmatmul.mubr.bf16.gmra.mxu0 %v810
  %v1659 = vpop.f32.mrf.mxu0
  %v1660 = vadd.f32 %v1371, %v1659
  %v1661 = vpop.f32.mrf.mxu0
  %v1662 = vpop.f32.mrf.mxu0
  %v1663 = vadd.f32 %v1374, %v1662
  %v1664 = vpop.f32.mrf.mxu0
  %1665 = vmatprep.mubr.bf16.mxu0 %v815
  %1666 = vmatmul.mubr.bf16.gmra.mxu0 %v814
  %v1667 = vpop.f32.mrf.mxu0
  %v1668 = vadd.f32 %v1379, %v1667
  %v1669 = vpop.f32.mrf.mxu0
  %v1670 = vpop.f32.mrf.mxu0
  %v1671 = vadd.f32 %v1382, %v1670
  %v1672 = vpop.f32.mrf.mxu0
  %1673 = vmatprep.mubr.bf16.mxu0 %v819
  %1674 = vmatmul.mubr.bf16.gmra.mxu0 %v818
  %v1675 = vpop.f32.mrf.mxu0
  %v1676 = vadd.f32 %v1387, %v1675
  %v1677 = vpop.f32.mrf.mxu0
  %v1678 = vpop.f32.mrf.mxu0
  %v1679 = vadd.f32 %v1390, %v1678
  %v1680 = vpop.f32.mrf.mxu0
  %1681 = vmatprep.mubr.bf16.mxu0 %v823
  %1682 = vmatmul.mubr.bf16.gmra.mxu0 %v822
  %v1683 = vpop.f32.mrf.mxu0
  %v1684 = vadd.f32 %v1395, %v1683
  %v1685 = vpop.f32.mrf.mxu0
  %v1686 = vpop.f32.mrf.mxu0
  %v1687 = vadd.f32 %v1398, %v1686
  %v1688 = vpop.f32.mrf.mxu0
  %1689 = vmatprep.mubr.bf16.mxu0 %v827
  %1690 = vmatmul.mubr.bf16.gmra.mxu0 %v826
  %v1691 = vpop.f32.mrf.mxu0
  %v1692 = vadd.f32 %v1403, %v1691
  %v1693 = vpop.f32.mrf.mxu0
  %v1694 = vpop.f32.mrf.mxu0
  %v1695 = vadd.f32 %v1406, %v1694
  %v1696 = vpop.f32.mrf.mxu0
  %1697 = vmatprep.mubr.bf16.mxu0 %v831
  %1698 = vmatmul.mubr.bf16.gmra.mxu0 %v830
  %v1699 = vpop.f32.mrf.mxu0
  %v1700 = vadd.f32 %v1411, %v1699
  %v1701 = vpop.f32.mrf.mxu0
  %v1702 = vpop.f32.mrf.mxu0
  %v1703 = vadd.f32 %v1414, %v1702
  %v1704 = vpop.f32.mrf.mxu0
  %1705 = vmatprep.mubr.bf16.mxu0 %v835
  %1706 = vmatmul.mubr.bf16.gmra.mxu0 %v834
  %v1707 = vpop.f32.mrf.mxu0
  %v1708 = vadd.f32 %v1419, %v1707
  %v1709 = vpop.f32.mrf.mxu0
  %v1710 = vpop.f32.mrf.mxu0
  %v1711 = vadd.f32 %v1422, %v1710
  %v1712 = vpop.f32.mrf.mxu0
  %1713 = vmatprep.mubr.bf16.mxu0 %v839
  %1714 = vmatmul.mubr.bf16.gmra.mxu0 %v838
  %v1715 = vpop.f32.mrf.mxu0
  %v1716 = vadd.f32 %v1427, %v1715
  %v1717 = vpop.f32.mrf.mxu0
  %v1718 = vpop.f32.mrf.mxu0
  %v1719 = vadd.f32 %v1430, %v1718
  %v1720 = vpop.f32.mrf.mxu0
  %1721 = vmatprep.mubr.bf16.mxu0 %v843
  %1722 = vmatmul.mubr.bf16.gmra.mxu0 %v842
  %v1723 = vpop.f32.mrf.mxu0
  %v1724 = vadd.f32 %v1435, %v1723
  %v1725 = vpop.f32.mrf.mxu0
  %v1726 = vpop.f32.mrf.mxu0
  %v1727 = vadd.f32 %v1438, %v1726
  %v1728 = vpop.f32.mrf.mxu0
  %1729 = vmatprep.mubr.bf16.mxu0 %v847
  %1730 = vmatmul.mubr.bf16.gmra.mxu0 %v846
  %v1731 = vpop.f32.mrf.mxu0
  %v1732 = vadd.f32 %v1443, %v1731
  %v1733 = vpop.f32.mrf.mxu0
  %v1734 = vpop.f32.mrf.mxu0
  %v1735 = vadd.f32 %v1446, %v1734
  %v1736 = vpop.f32.mrf.mxu0
  %1737 = vmatprep.mubr.bf16.mxu0 %v851
  %1738 = vmatmul.mubr.bf16.gmra.mxu0 %v850
  %v1739 = vpop.f32.mrf.mxu0
  %v1740 = vadd.f32 %v1451, %v1739
  %v1741 = vpop.f32.mrf.mxu0
  %v1742 = vpop.f32.mrf.mxu0
  %v1743 = vadd.f32 %v1454, %v1742
  %v1744 = vpop.f32.mrf.mxu0
  %1745 = vmatprep.mubr.bf16.mxu0 %v855
  %1746 = vmatmul.mubr.bf16.gmra.mxu0 %v854
  %v1747 = vpop.f32.mrf.mxu0
  %v1748 = vadd.f32 %v1459, %v1747
  %v1749 = vpop.f32.mrf.mxu0
  %v1750 = vpop.f32.mrf.mxu0
  %v1751 = vadd.f32 %v1462, %v1750
  %v1752 = vpop.f32.mrf.mxu0
  %1753 = vdwg.mxu0
  %v1754 = vadd.f32 %v152, %v1500
  %v1755 = vadd.f32 %v153, %v1503
  %v1756 = vadd.f32 %v154, %v1508
  %v1757 = vadd.f32 %v155, %v1511
  %v1758 = vadd.f32 %v156, %v1516
  %v1759 = vadd.f32 %v157, %v1519
  %v1760 = vadd.f32 %v158, %v1524
  %v1761 = vadd.f32 %v159, %v1527
  %v1762 = vadd.f32 %v160, %v1532
  %v1763 = vadd.f32 %v161, %v1535
  %v1764 = vadd.f32 %v162, %v1540
  %v1765 = vadd.f32 %v163, %v1543
  %v1766 = vadd.f32 %v164, %v1548
  %v1767 = vadd.f32 %v165, %v1551
  %v1768 = vadd.f32 %v166, %v1556
  %v1769 = vadd.f32 %v167, %v1559
  %v1770 = vadd.f32 %v168, %v1564
  %v1771 = vadd.f32 %v169, %v1567
  %v1772 = vadd.f32 %v170, %v1572
  %v1773 = vadd.f32 %v171, %v1575
  %v1774 = vadd.f32 %v172, %v1580
  %v1775 = vadd.f32 %v173, %v1583
  %v1776 = vadd.f32 %v174, %v1588
  %v1777 = vadd.f32 %v175, %v1591
  %v1778 = vadd.f32 %v176, %v1596
  %v1779 = vadd.f32 %v177, %v1599
  %v1780 = vadd.f32 %v178, %v1604
  %v1781 = vadd.f32 %v179, %v1607
  %v1782 = vadd.f32 %v180, %v1612
  %v1783 = vadd.f32 %v181, %v1615
  %v1784 = vadd.f32 %v182, %v1620
  %v1785 = vadd.f32 %v183, %v1623
  %v1786 = vadd.f32 %v184, %v1628
  %v1787 = vadd.f32 %v185, %v1631
  %v1788 = vadd.f32 %v186, %v1636
  %v1789 = vadd.f32 %v187, %v1639
  %v1790 = vadd.f32 %v188, %v1644
  %v1791 = vadd.f32 %v189, %v1647
  %v1792 = vadd.f32 %v190, %v1652
  %v1793 = vadd.f32 %v191, %v1655
  %v1794 = vadd.f32 %v192, %v1660
  %v1795 = vadd.f32 %v193, %v1663
  %v1796 = vadd.f32 %v194, %v1668
  %v1797 = vadd.f32 %v195, %v1671
  %v1798 = vadd.f32 %v196, %v1676
  %v1799 = vadd.f32 %v197, %v1679
  %v1800 = vadd.f32 %v198, %v1684
  %v1801 = vadd.f32 %v199, %v1687
  %v1802 = vadd.f32 %v200, %v1692
  %v1803 = vadd.f32 %v201, %v1695
  %v1804 = vadd.f32 %v202, %v1700
  %v1805 = vadd.f32 %v203, %v1703
  %v1806 = vadd.f32 %v204, %v1708
  %v1807 = vadd.f32 %v205, %v1711
  %v1808 = vadd.f32 %v206, %v1716
  %v1809 = vadd.f32 %v207, %v1719
  %v1810 = vadd.f32 %v208, %v1724
  %v1811 = vadd.f32 %v209, %v1727
  %v1812 = vadd.f32 %v210, %v1732
  %v1813 = vadd.f32 %v211, %v1735
  %v1814 = vadd.f32 %v212, %v1740
  %v1815 = vadd.f32 %v213, %v1743
  %v1816 = vadd.f32 %v214, %v1748
  %v1817 = vadd.f32 %v215, %v1751
  %1818 = vst [vmem:[#allocation2] sm:$0xff] %v1754
  %1819 = vst [vmem:[#allocation2 + $0x8] sm:$0xff] %v1755
  %1820 = vst [vmem:[#allocation2 + $0x10] sm:$0xff] %v1756
  %1821 = vst [vmem:[#allocation2 + $0x18] sm:$0xff] %v1757
  %1822 = vst [vmem:[#allocation2 + $0x20] sm:$0xff] %v1758
  %1823 = vst [vmem:[#allocation2 + $0x28] sm:$0xff] %v1759
  %1824 = vst [vmem:[#allocation2 + $0x30] sm:$0xff] %v1760
  %1825 = vst [vmem:[#allocation2 + $0x38] sm:$0xff] %v1761
  %1826 = vst [vmem:[#allocation2 + $0x40] sm:$0xff] %v1762
  %1827 = vst [vmem:[#allocation2 + $0x48] sm:$0xff] %v1763
  %1828 = vst [vmem:[#allocation2 + $0x50] sm:$0xff] %v1764
  %1829 = vst [vmem:[#allocation2 + $0x58] sm:$0xff] %v1765
  %1830 = vst [vmem:[#allocation2 + $0x60] sm:$0xff] %v1766
  %1831 = vst [vmem:[#allocation2 + $0x68] sm:$0xff] %v1767
  %1832 = vst [vmem:[#allocation2 + $0x70] sm:$0xff] %v1768
  %1833 = vst [vmem:[#allocation2 + $0x78] sm:$0xff] %v1769
  %1834 = vst [vmem:[#allocation2 + $0x80] sm:$0xff] %v1770
  %1835 = vst [vmem:[#allocation2 + $0x88] sm:$0xff] %v1771
  %1836 = vst [vmem:[#allocation2 + $0x90] sm:$0xff] %v1772
  %1837 = vst [vmem:[#allocation2 + $0x98] sm:$0xff] %v1773
  %1838 = vst [vmem:[#allocation2 + $0xa0] sm:$0xff] %v1774
  %1839 = vst [vmem:[#allocation2 + $0xa8] sm:$0xff] %v1775
  %1840 = vst [vmem:[#allocation2 + $0xb0] sm:$0xff] %v1776
  %1841 = vst [vmem:[#allocation2 + $0xb8] sm:$0xff] %v1777
  %1842 = vst [vmem:[#allocation2 + $0xc0] sm:$0xff] %v1778
  %1843 = vst [vmem:[#allocation2 + $0xc8] sm:$0xff] %v1779
  %1844 = vst [vmem:[#allocation2 + $0xd0] sm:$0xff] %v1780
  %1845 = vst [vmem:[#allocation2 + $0xd8] sm:$0xff] %v1781
  %1846 = vst [vmem:[#allocation2 + $0xe0] sm:$0xff] %v1782
  %1847 = vst [vmem:[#allocation2 + $0xe8] sm:$0xff] %v1783
  %1848 = vst [vmem:[#allocation2 + $0xf0] sm:$0xff] %v1784
  %1849 = vst [vmem:[#allocation2 + $0xf8] sm:$0xff] %v1785
  %1850 = vst [vmem:[#allocation2 + $0x100] sm:$0xff] %v1786
  %1851 = vst [vmem:[#allocation2 + $0x108] sm:$0xff] %v1787
  %1852 = vst [vmem:[#allocation2 + $0x110] sm:$0xff] %v1788
  %1853 = vst [vmem:[#allocation2 + $0x118] sm:$0xff] %v1789
  %1854 = vst [vmem:[#allocation2 + $0x120] sm:$0xff] %v1790
  %1855 = vst [vmem:[#allocation2 + $0x128] sm:$0xff] %v1791
  %1856 = vst [vmem:[#allocation2 + $0x130] sm:$0xff] %v1792
  %1857 = vst [vmem:[#allocation2 + $0x138] sm:$0xff] %v1793
  %1858 = vst [vmem:[#allocation2 + $0x140] sm:$0xff] %v1794
  %1859 = vst [vmem:[#allocation2 + $0x148] sm:$0xff] %v1795
  %1860 = vst [vmem:[#allocation2 + $0x150] sm:$0xff] %v1796
  %1861 = vst [vmem:[#allocation2 + $0x158] sm:$0xff] %v1797
  %1862 = vst [vmem:[#allocation2 + $0x160] sm:$0xff] %v1798
  %1863 = vst [vmem:[#allocation2 + $0x168] sm:$0xff] %v1799
  %1864 = vst [vmem:[#allocation2 + $0x170] sm:$0xff] %v1800
  %1865 = vst [vmem:[#allocation2 + $0x178] sm:$0xff] %v1801
  %1866 = vst [vmem:[#allocation2 + $0x180] sm:$0xff] %v1802
  %1867 = vst [vmem:[#allocation2 + $0x188] sm:$0xff] %v1803
  %1868 = vst [vmem:[#allocation2 + $0x190] sm:$0xff] %v1804
  %1869 = vst [vmem:[#allocation2 + $0x198] sm:$0xff] %v1805
  %1870 = vst [vmem:[#allocation2 + $0x1a0] sm:$0xff] %v1806
  %1871 = vst [vmem:[#allocation2 + $0x1a8] sm:$0xff] %v1807
  %1872 = vst [vmem:[#allocation2 + $0x1b0] sm:$0xff] %v1808
  %1873 = vst [vmem:[#allocation2 + $0x1b8] sm:$0xff] %v1809
  %1874 = vst [vmem:[#allocation2 + $0x1c0] sm:$0xff] %v1810
  %1875 = vst [vmem:[#allocation2 + $0x1c8] sm:$0xff] %v1811
  %1876 = vst [vmem:[#allocation2 + $0x1d0] sm:$0xff] %v1812
  %1877 = vst [vmem:[#allocation2 + $0x1d8] sm:$0xff] %v1813
  %1878 = vst [vmem:[#allocation2 + $0x1e0] sm:$0xff] %v1814
  %1879 = vst [vmem:[#allocation2 + $0x1e8] sm:$0xff] %v1815
  %1880 = vst [vmem:[#allocation2 + $0x1f0] sm:$0xff] %v1816
  %1881 = vst [vmem:[#allocation2 + $0x1f8] sm:$0xff] %v1817
  // Predicated region
  $region18: #{gcn_rand_labeled_forward.4} parent=0 // pred_check
    %p1882 = pneg %p15
  $region19: #{gcn_rand_labeled_forward.4} parent=0 // pred_check_branch
    %1884 = sbr.rel (%p1882) target = $region21
  $region20: #{gcn_rand_labeled_forward.4} parent=0 // pred_region
    %v1885 = vld [vmem:[#allocation2] sm:$0xff]
    %v1886 = vld [vmem:[#allocation2 + $0x8] sm:$0xff]
    %v1887 = vld [vmem:[#allocation2 + $0x10] sm:$0xff]
    %v1888 = vld [vmem:[#allocation2 + $0x18] sm:$0xff]
    %v1889 = vld [vmem:[#allocation2 + $0x20] sm:$0xff]
    %v1890 = vld [vmem:[#allocation2 + $0x28] sm:$0xff]
    %v1891 = vld [vmem:[#allocation2 + $0x30] sm:$0xff]
    %v1892 = vld [vmem:[#allocation2 + $0x38] sm:$0xff]
    %v1893 = vld [vmem:[#allocation2 + $0x40] sm:$0xff]
    %v1894 = vld [vmem:[#allocation2 + $0x48] sm:$0xff]
    %v1895 = vld [vmem:[#allocation2 + $0x50] sm:$0xff]
    %v1896 = vld [vmem:[#allocation2 + $0x58] sm:$0xff]
    %v1897 = vld [vmem:[#allocation2 + $0x60] sm:$0xff]
    %v1898 = vld [vmem:[#allocation2 + $0x68] sm:$0xff]
    %v1899 = vld [vmem:[#allocation2 + $0x70] sm:$0xff]
    %v1900 = vld [vmem:[#allocation2 + $0x78] sm:$0xff]
    %v1901 = vld [vmem:[#allocation2 + $0x80] sm:$0xff]
    %v1902 = vld [vmem:[#allocation2 + $0x88] sm:$0xff]
    %v1903 = vld [vmem:[#allocation2 + $0x90] sm:$0xff]
    %v1904 = vld [vmem:[#allocation2 + $0x98] sm:$0xff]
    %v1905 = vld [vmem:[#allocation2 + $0xa0] sm:$0xff]
    %v1906 = vld [vmem:[#allocation2 + $0xa8] sm:$0xff]
    %v1907 = vld [vmem:[#allocation2 + $0xb0] sm:$0xff]
    %v1908 = vld [vmem:[#allocation2 + $0xb8] sm:$0xff]
    %v1909 = vld [vmem:[#allocation2 + $0xc0] sm:$0xff]
    %v1910 = vld [vmem:[#allocation2 + $0xc8] sm:$0xff]
    %v1911 = vld [vmem:[#allocation2 + $0xd0] sm:$0xff]
    %v1912 = vld [vmem:[#allocation2 + $0xd8] sm:$0xff]
    %v1913 = vld [vmem:[#allocation2 + $0xe0] sm:$0xff]
    %v1914 = vld [vmem:[#allocation2 + $0xe8] sm:$0xff]
    %v1915 = vld [vmem:[#allocation2 + $0xf0] sm:$0xff]
    %v1916 = vld [vmem:[#allocation2 + $0xf8] sm:$0xff]
    %v1917 = vld [vmem:[#allocation2 + $0x100] sm:$0xff]
    %v1918 = vld [vmem:[#allocation2 + $0x108] sm:$0xff]
    %v1919 = vld [vmem:[#allocation2 + $0x110] sm:$0xff]
    %v1920 = vld [vmem:[#allocation2 + $0x118] sm:$0xff]
    %v1921 = vld [vmem:[#allocation2 + $0x120] sm:$0xff]
    %v1922 = vld [vmem:[#allocation2 + $0x128] sm:$0xff]
    %v1923 = vld [vmem:[#allocation2 + $0x130] sm:$0xff]
    %v1924 = vld [vmem:[#allocation2 + $0x138] sm:$0xff]
    %v1925 = vld [vmem:[#allocation2 + $0x140] sm:$0xff]
    %v1926 = vld [vmem:[#allocation2 + $0x148] sm:$0xff]
    %v1927 = vld [vmem:[#allocation2 + $0x150] sm:$0xff]
    %v1928 = vld [vmem:[#allocation2 + $0x158] sm:$0xff]
    %v1929 = vld [vmem:[#allocation2 + $0x160] sm:$0xff]
    %v1930 = vld [vmem:[#allocation2 + $0x168] sm:$0xff]
    %v1931 = vld [vmem:[#allocation2 + $0x170] sm:$0xff]
    %v1932 = vld [vmem:[#allocation2 + $0x178] sm:$0xff]
    %v1933 = vld [vmem:[#allocation2 + $0x180] sm:$0xff]
    %v1934 = vld [vmem:[#allocation2 + $0x188] sm:$0xff]
    %v1935 = vld [vmem:[#allocation2 + $0x190] sm:$0xff]
    %v1936 = vld [vmem:[#allocation2 + $0x198] sm:$0xff]
    %v1937 = vld [vmem:[#allocation2 + $0x1a0] sm:$0xff]
    %v1938 = vld [vmem:[#allocation2 + $0x1a8] sm:$0xff]
    %v1939 = vld [vmem:[#allocation2 + $0x1b0] sm:$0xff]
    %v1940 = vld [vmem:[#allocation2 + $0x1b8] sm:$0xff]
    %v1941 = vld [vmem:[#allocation2 + $0x1c0] sm:$0xff]
    %v1942 = vld [vmem:[#allocation2 + $0x1c8] sm:$0xff]
    %v1943 = vld [vmem:[#allocation2 + $0x1d0] sm:$0xff]
    %v1944 = vld [vmem:[#allocation2 + $0x1d8] sm:$0xff]
    %v1945 = vld [vmem:[#allocation2 + $0x1e0] sm:$0xff]
    %v1946 = vld [vmem:[#allocation2 + $0x1e8] sm:$0xff]
    %v1947 = vld [vmem:[#allocation2 + $0x1f0] sm:$0xff]
    %v1948 = vld [vmem:[#allocation2 + $0x1f8] sm:$0xff]
    %v1949 = vld [vmem:[%s2] sm:$0x1]
    %v1951 = vlaneseq
    %v1952 = vshrl.u32 %v1951, 7
    %v1953 = vsub.s32 0, %v1952
    %v1954 = vrot.slane %v1949, %v1953
    %v1956 = vadd.f32 %v1885, %v1954
    %v1957 = vadd.f32 %v1886, %v1954
    %v1958 = vadd.f32 %v1887, %v1954
    %v1959 = vadd.f32 %v1888, %v1954
    %v1960 = vadd.f32 %v1889, %v1954
    %v1961 = vadd.f32 %v1890, %v1954
    %v1962 = vadd.f32 %v1891, %v1954
    %v1963 = vadd.f32 %v1892, %v1954
    %v1964 = vadd.f32 %v1893, %v1954
    %v1965 = vadd.f32 %v1894, %v1954
    %v1966 = vadd.f32 %v1895, %v1954
    %v1967 = vadd.f32 %v1896, %v1954
    %v1968 = vadd.f32 %v1897, %v1954
    %v1969 = vadd.f32 %v1898, %v1954
    %v1970 = vadd.f32 %v1899, %v1954
    %v1971 = vadd.f32 %v1900, %v1954
    %v1972 = vadd.f32 %v1901, %v1954
    %v1973 = vadd.f32 %v1902, %v1954
    %v1974 = vadd.f32 %v1903, %v1954
    %v1975 = vadd.f32 %v1904, %v1954
    %v1976 = vadd.f32 %v1905, %v1954
    %v1977 = vadd.f32 %v1906, %v1954
    %v1978 = vadd.f32 %v1907, %v1954
    %v1979 = vadd.f32 %v1908, %v1954
    %v1980 = vadd.f32 %v1909, %v1954
    %v1981 = vadd.f32 %v1910, %v1954
    %v1982 = vadd.f32 %v1911, %v1954
    %v1983 = vadd.f32 %v1912, %v1954
    %v1984 = vadd.f32 %v1913, %v1954
    %v1985 = vadd.f32 %v1914, %v1954
    %v1986 = vadd.f32 %v1915, %v1954
    %v1987 = vadd.f32 %v1916, %v1954
    %v1988 = vadd.f32 %v1917, %v1954
    %v1989 = vadd.f32 %v1918, %v1954
    %v1990 = vadd.f32 %v1919, %v1954
    %v1991 = vadd.f32 %v1920, %v1954
    %v1992 = vadd.f32 %v1921, %v1954
    %v1993 = vadd.f32 %v1922, %v1954
    %v1994 = vadd.f32 %v1923, %v1954
    %v1995 = vadd.f32 %v1924, %v1954
    %v1996 = vadd.f32 %v1925, %v1954
    %v1997 = vadd.f32 %v1926, %v1954
    %v1998 = vadd.f32 %v1927, %v1954
    %v1999 = vadd.f32 %v1928, %v1954
    %v2000 = vadd.f32 %v1929, %v1954
    %v2001 = vadd.f32 %v1930, %v1954
    %v2002 = vadd.f32 %v1931, %v1954
    %v2003 = vadd.f32 %v1932, %v1954
    %v2004 = vadd.f32 %v1933, %v1954
    %v2005 = vadd.f32 %v1934, %v1954
    %v2006 = vadd.f32 %v1935, %v1954
    %v2007 = vadd.f32 %v1936, %v1954
    %v2008 = vadd.f32 %v1937, %v1954
    %v2009 = vadd.f32 %v1938, %v1954
    %v2010 = vadd.f32 %v1939, %v1954
    %v2011 = vadd.f32 %v1940, %v1954
    %v2012 = vadd.f32 %v1941, %v1954
    %v2013 = vadd.f32 %v1942, %v1954
    %v2014 = vadd.f32 %v1943, %v1954
    %v2015 = vadd.f32 %v1944, %v1954
    %v2016 = vadd.f32 %v1945, %v1954
    %v2017 = vadd.f32 %v1946, %v1954
    %v2018 = vadd.f32 %v1947, %v1954
    %v2019 = vadd.f32 %v1948, %v1954
    %v2020 = vmax.f32 %v1956, 0.0
    %v2021 = vmax.f32 %v1957, 0.0
    %v2022 = vmax.f32 %v1958, 0.0
    %v2023 = vmax.f32 %v1959, 0.0
    %v2024 = vmax.f32 %v1960, 0.0
    %v2025 = vmax.f32 %v1961, 0.0
    %v2026 = vmax.f32 %v1962, 0.0
    %v2027 = vmax.f32 %v1963, 0.0
    %v2028 = vmax.f32 %v1964, 0.0
    %v2029 = vmax.f32 %v1965, 0.0
    %v2030 = vmax.f32 %v1966, 0.0
    %v2031 = vmax.f32 %v1967, 0.0
    %v2032 = vmax.f32 %v1968, 0.0
    %v2033 = vmax.f32 %v1969, 0.0
    %v2034 = vmax.f32 %v1970, 0.0
    %v2035 = vmax.f32 %v1971, 0.0
    %v2036 = vmax.f32 %v1972, 0.0
    %v2037 = vmax.f32 %v1973, 0.0
    %v2038 = vmax.f32 %v1974, 0.0
    %v2039 = vmax.f32 %v1975, 0.0
    %v2040 = vmax.f32 %v1976, 0.0
    %v2041 = vmax.f32 %v1977, 0.0
    %v2042 = vmax.f32 %v1978, 0.0
    %v2043 = vmax.f32 %v1979, 0.0
    %v2044 = vmax.f32 %v1980, 0.0
    %v2045 = vmax.f32 %v1981, 0.0
    %v2046 = vmax.f32 %v1982, 0.0
    %v2047 = vmax.f32 %v1983, 0.0
    %v2048 = vmax.f32 %v1984, 0.0
    %v2049 = vmax.f32 %v1985, 0.0
    %v2050 = vmax.f32 %v1986, 0.0
    %v2051 = vmax.f32 %v1987, 0.0
    %v2052 = vmax.f32 %v1988, 0.0
    %v2053 = vmax.f32 %v1989, 0.0
    %v2054 = vmax.f32 %v1990, 0.0
    %v2055 = vmax.f32 %v1991, 0.0
    %v2056 = vmax.f32 %v1992, 0.0
    %v2057 = vmax.f32 %v1993, 0.0
    %v2058 = vmax.f32 %v1994, 0.0
    %v2059 = vmax.f32 %v1995, 0.0
    %v2060 = vmax.f32 %v1996, 0.0
    %v2061 = vmax.f32 %v1997, 0.0
    %v2062 = vmax.f32 %v1998, 0.0
    %v2063 = vmax.f32 %v1999, 0.0
    %v2064 = vmax.f32 %v2000, 0.0
    %v2065 = vmax.f32 %v2001, 0.0
    %v2066 = vmax.f32 %v2002, 0.0
    %v2067 = vmax.f32 %v2003, 0.0
    %v2068 = vmax.f32 %v2004, 0.0
    %v2069 = vmax.f32 %v2005, 0.0
    %v2070 = vmax.f32 %v2006, 0.0
    %v2071 = vmax.f32 %v2007, 0.0
    %v2072 = vmax.f32 %v2008, 0.0
    %v2073 = vmax.f32 %v2009, 0.0
    %v2074 = vmax.f32 %v2010, 0.0
    %v2075 = vmax.f32 %v2011, 0.0
    %v2076 = vmax.f32 %v2012, 0.0
    %v2077 = vmax.f32 %v2013, 0.0
    %v2078 = vmax.f32 %v2014, 0.0
    %v2079 = vmax.f32 %v2015, 0.0
    %v2080 = vmax.f32 %v2016, 0.0
    %v2081 = vmax.f32 %v2017, 0.0
    %v2082 = vmax.f32 %v2018, 0.0
    %v2083 = vmax.f32 %v2019, 0.0
    %v2084 = vpack.c.bf16 %v2021, %v2020
    %v2085 = vpack.c.bf16 %v2023, %v2022
    %v2086 = vpack.c.bf16 %v2025, %v2024
    %v2087 = vpack.c.bf16 %v2027, %v2026
    %v2088 = vpack.c.bf16 %v2029, %v2028
    %v2089 = vpack.c.bf16 %v2031, %v2030
    %v2090 = vpack.c.bf16 %v2033, %v2032
    %v2091 = vpack.c.bf16 %v2035, %v2034
    %v2092 = vpack.c.bf16 %v2037, %v2036
    %v2093 = vpack.c.bf16 %v2039, %v2038
    %v2094 = vpack.c.bf16 %v2041, %v2040
    %v2095 = vpack.c.bf16 %v2043, %v2042
    %v2096 = vpack.c.bf16 %v2045, %v2044
    %v2097 = vpack.c.bf16 %v2047, %v2046
    %v2098 = vpack.c.bf16 %v2049, %v2048
    %v2099 = vpack.c.bf16 %v2051, %v2050
    %v2100 = vpack.c.bf16 %v2053, %v2052
    %v2101 = vpack.c.bf16 %v2055, %v2054
    %v2102 = vpack.c.bf16 %v2057, %v2056
    %v2103 = vpack.c.bf16 %v2059, %v2058
    %v2104 = vpack.c.bf16 %v2061, %v2060
    %v2105 = vpack.c.bf16 %v2063, %v2062
    %v2106 = vpack.c.bf16 %v2065, %v2064
    %v2107 = vpack.c.bf16 %v2067, %v2066
    %v2108 = vpack.c.bf16 %v2069, %v2068
    %v2109 = vpack.c.bf16 %v2071, %v2070
    %v2110 = vpack.c.bf16 %v2073, %v2072
    %v2111 = vpack.c.bf16 %v2075, %v2074
    %v2112 = vpack.c.bf16 %v2077, %v2076
    %v2113 = vpack.c.bf16 %v2079, %v2078
    %v2114 = vpack.c.bf16 %v2081, %v2080
    %v2115 = vpack.c.bf16 %v2083, %v2082
    %v2148 = vunpack.c.l.b16 %v2084
    %v2149 = vunpack.c.h.b16 %v2084
    %v2150 = vunpack.c.l.b16 %v2085
    %v2151 = vunpack.c.h.b16 %v2085
    %v2152 = vunpack.c.l.b16 %v2086
    %v2153 = vunpack.c.h.b16 %v2086
    %v2154 = vunpack.c.l.b16 %v2087
    %v2155 = vunpack.c.h.b16 %v2087
    %v2156 = vunpack.c.l.b16 %v2088
    %v2157 = vunpack.c.h.b16 %v2088
    %v2158 = vunpack.c.l.b16 %v2089
    %v2159 = vunpack.c.h.b16 %v2089
    %v2160 = vunpack.c.l.b16 %v2090
    %v2161 = vunpack.c.h.b16 %v2090
    %v2162 = vunpack.c.l.b16 %v2091
    %v2163 = vunpack.c.h.b16 %v2091
    %v2164 = vunpack.c.l.b16 %v2092
    %v2165 = vunpack.c.h.b16 %v2092
    %v2166 = vunpack.c.l.b16 %v2093
    %v2167 = vunpack.c.h.b16 %v2093
    %v2168 = vunpack.c.l.b16 %v2094
    %v2169 = vunpack.c.h.b16 %v2094
    %v2170 = vunpack.c.l.b16 %v2095
    %v2171 = vunpack.c.h.b16 %v2095
    %v2172 = vunpack.c.l.b16 %v2096
    %v2173 = vunpack.c.h.b16 %v2096
    %v2174 = vunpack.c.l.b16 %v2097
    %v2175 = vunpack.c.h.b16 %v2097
    %v2176 = vunpack.c.l.b16 %v2098
    %v2177 = vunpack.c.h.b16 %v2098
    %v2178 = vunpack.c.l.b16 %v2099
    %v2179 = vunpack.c.h.b16 %v2099
    %v2180 = vunpack.c.l.b16 %v2100
    %v2181 = vunpack.c.h.b16 %v2100
    %v2182 = vunpack.c.l.b16 %v2101
    %v2183 = vunpack.c.h.b16 %v2101
    %v2184 = vunpack.c.l.b16 %v2102
    %v2185 = vunpack.c.h.b16 %v2102
    %v2186 = vunpack.c.l.b16 %v2103
    %v2187 = vunpack.c.h.b16 %v2103
    %v2188 = vunpack.c.l.b16 %v2104
    %v2189 = vunpack.c.h.b16 %v2104
    %v2190 = vunpack.c.l.b16 %v2105
    %v2191 = vunpack.c.h.b16 %v2105
    %v2192 = vunpack.c.l.b16 %v2106
    %v2193 = vunpack.c.h.b16 %v2106
    %v2194 = vunpack.c.l.b16 %v2107
    %v2195 = vunpack.c.h.b16 %v2107
    %v2196 = vunpack.c.l.b16 %v2108
    %v2197 = vunpack.c.h.b16 %v2108
    %v2198 = vunpack.c.l.b16 %v2109
    %v2199 = vunpack.c.h.b16 %v2109
    %v2200 = vunpack.c.l.b16 %v2110
    %v2201 = vunpack.c.h.b16 %v2110
    %v2202 = vunpack.c.l.b16 %v2111
    %v2203 = vunpack.c.h.b16 %v2111
    %v2204 = vunpack.c.l.b16 %v2112
    %v2205 = vunpack.c.h.b16 %v2112
    %v2206 = vunpack.c.l.b16 %v2113
    %v2207 = vunpack.c.h.b16 %v2113
    %v2208 = vunpack.c.l.b16 %v2114
    %v2209 = vunpack.c.h.b16 %v2114
    %v2210 = vunpack.c.l.b16 %v2115
    %v2211 = vunpack.c.h.b16 %v2115
    %v2212 = vpack.c.b16 %v2148, %v2148
    %v2213 = vpack.c.b16 %v2149, %v2149
    %v2214 = vpack.c.b16 %v2150, %v2150
    %v2215 = vpack.c.b16 %v2151, %v2151
    %v2216 = vpack.c.b16 %v2152, %v2152
    %v2217 = vpack.c.b16 %v2153, %v2153
    %v2218 = vpack.c.b16 %v2154, %v2154
    %v2219 = vpack.c.b16 %v2155, %v2155
    %v2220 = vpack.c.b16 %v2156, %v2156
    %v2221 = vpack.c.b16 %v2157, %v2157
    %v2222 = vpack.c.b16 %v2158, %v2158
    %v2223 = vpack.c.b16 %v2159, %v2159
    %v2224 = vpack.c.b16 %v2160, %v2160
    %v2225 = vpack.c.b16 %v2161, %v2161
    %v2226 = vpack.c.b16 %v2162, %v2162
    %v2227 = vpack.c.b16 %v2163, %v2163
    %v2228 = vpack.c.b16 %v2164, %v2164
    %v2229 = vpack.c.b16 %v2165, %v2165
    %v2230 = vpack.c.b16 %v2166, %v2166
    %v2231 = vpack.c.b16 %v2167, %v2167
    %v2232 = vpack.c.b16 %v2168, %v2168
    %v2233 = vpack.c.b16 %v2169, %v2169
    %v2234 = vpack.c.b16 %v2170, %v2170
    %v2235 = vpack.c.b16 %v2171, %v2171
    %v2236 = vpack.c.b16 %v2172, %v2172
    %v2237 = vpack.c.b16 %v2173, %v2173
    %v2238 = vpack.c.b16 %v2174, %v2174
    %v2239 = vpack.c.b16 %v2175, %v2175
    %v2240 = vpack.c.b16 %v2176, %v2176
    %v2241 = vpack.c.b16 %v2177, %v2177
    %v2242 = vpack.c.b16 %v2178, %v2178
    %v2243 = vpack.c.b16 %v2179, %v2179
    %v2244 = vpack.c.b16 %v2180, %v2180
    %v2245 = vpack.c.b16 %v2181, %v2181
    %v2246 = vpack.c.b16 %v2182, %v2182
    %v2247 = vpack.c.b16 %v2183, %v2183
    %v2248 = vpack.c.b16 %v2184, %v2184
    %v2249 = vpack.c.b16 %v2185, %v2185
    %v2250 = vpack.c.b16 %v2186, %v2186
    %v2251 = vpack.c.b16 %v2187, %v2187
    %v2252 = vpack.c.b16 %v2188, %v2188
    %v2253 = vpack.c.b16 %v2189, %v2189
    %v2254 = vpack.c.b16 %v2190, %v2190
    %v2255 = vpack.c.b16 %v2191, %v2191
    %v2256 = vpack.c.b16 %v2192, %v2192
    %v2257 = vpack.c.b16 %v2193, %v2193
    %v2258 = vpack.c.b16 %v2194, %v2194
    %v2259 = vpack.c.b16 %v2195, %v2195
    %v2260 = vpack.c.b16 %v2196, %v2196
    %v2261 = vpack.c.b16 %v2197, %v2197
    %v2262 = vpack.c.b16 %v2198, %v2198
    %v2263 = vpack.c.b16 %v2199, %v2199
    %v2264 = vpack.c.b16 %v2200, %v2200
    %v2265 = vpack.c.b16 %v2201, %v2201
    %v2266 = vpack.c.b16 %v2202, %v2202
    %v2267 = vpack.c.b16 %v2203, %v2203
    %v2268 = vpack.c.b16 %v2204, %v2204
    %v2269 = vpack.c.b16 %v2205, %v2205
    %v2270 = vpack.c.b16 %v2206, %v2206
    %v2271 = vpack.c.b16 %v2207, %v2207
    %v2272 = vpack.c.b16 %v2208, %v2208
    %v2273 = vpack.c.b16 %v2209, %v2209
    %v2274 = vpack.c.b16 %v2210, %v2210
    %v2275 = vpack.c.b16 %v2211, %v2211
    %2340 = vst [vmem:[%s3] sm:$0xf] %v2212
    %2341 = vst [vmem:[%s3 + $0x4] sm:$0xf] %v2213
    %2342 = vst [vmem:[%s3 + $0x8] sm:$0xf] %v2214
    %2343 = vst [vmem:[%s3 + $0xc] sm:$0xf] %v2215
    %2344 = vst [vmem:[%s3 + $0x10] sm:$0xf] %v2216
    %2345 = vst [vmem:[%s3 + $0x14] sm:$0xf] %v2217
    %2346 = vst [vmem:[%s3 + $0x18] sm:$0xf] %v2218
    %2347 = vst [vmem:[%s3 + $0x1c] sm:$0xf] %v2219
    %2348 = vst [vmem:[%s3 + $0x20] sm:$0xf] %v2220
    %2349 = vst [vmem:[%s3 + $0x24] sm:$0xf] %v2221
    %2350 = vst [vmem:[%s3 + $0x28] sm:$0xf] %v2222
    %2351 = vst [vmem:[%s3 + $0x2c] sm:$0xf] %v2223
    %2352 = vst [vmem:[%s3 + $0x30] sm:$0xf] %v2224
    %2353 = vst [vmem:[%s3 + $0x34] sm:$0xf] %v2225
    %2354 = vst [vmem:[%s3 + $0x38] sm:$0xf] %v2226
    %2355 = vst [vmem:[%s3 + $0x3c] sm:$0xf] %v2227
    %2356 = vst [vmem:[%s3 + $0x40] sm:$0xf] %v2228
    %2357 = vst [vmem:[%s3 + $0x44] sm:$0xf] %v2229
    %2358 = vst [vmem:[%s3 + $0x48] sm:$0xf] %v2230
    %2359 = vst [vmem:[%s3 + $0x4c] sm:$0xf] %v2231
    %2360 = vst [vmem:[%s3 + $0x50] sm:$0xf] %v2232
    %2361 = vst [vmem:[%s3 + $0x54] sm:$0xf] %v2233
    %2362 = vst [vmem:[%s3 + $0x58] sm:$0xf] %v2234
    %2363 = vst [vmem:[%s3 + $0x5c] sm:$0xf] %v2235
    %2364 = vst [vmem:[%s3 + $0x60] sm:$0xf] %v2236
    %2365 = vst [vmem:[%s3 + $0x64] sm:$0xf] %v2237
    %2366 = vst [vmem:[%s3 + $0x68] sm:$0xf] %v2238
    %2367 = vst [vmem:[%s3 + $0x6c] sm:$0xf] %v2239
    %2368 = vst [vmem:[%s3 + $0x70] sm:$0xf] %v2240
    %2369 = vst [vmem:[%s3 + $0x74] sm:$0xf] %v2241
    %2370 = vst [vmem:[%s3 + $0x78] sm:$0xf] %v2242
    %2371 = vst [vmem:[%s3 + $0x7c] sm:$0xf] %v2243
    %2372 = vst [vmem:[%s3 + $0x80] sm:$0xf] %v2244
    %2373 = vst [vmem:[%s3 + $0x84] sm:$0xf] %v2245
    %2374 = vst [vmem:[%s3 + $0x88] sm:$0xf] %v2246
    %2375 = vst [vmem:[%s3 + $0x8c] sm:$0xf] %v2247
    %2376 = vst [vmem:[%s3 + $0x90] sm:$0xf] %v2248
    %2377 = vst [vmem:[%s3 + $0x94] sm:$0xf] %v2249
    %2378 = vst [vmem:[%s3 + $0x98] sm:$0xf] %v2250
    %2379 = vst [vmem:[%s3 + $0x9c] sm:$0xf] %v2251
    %2380 = vst [vmem:[%s3 + $0xa0] sm:$0xf] %v2252
    %2381 = vst [vmem:[%s3 + $0xa4] sm:$0xf] %v2253
    %2382 = vst [vmem:[%s3 + $0xa8] sm:$0xf] %v2254
    %2383 = vst [vmem:[%s3 + $0xac] sm:$0xf] %v2255
    %2384 = vst [vmem:[%s3 + $0xb0] sm:$0xf] %v2256
    %2385 = vst [vmem:[%s3 + $0xb4] sm:$0xf] %v2257
    %2386 = vst [vmem:[%s3 + $0xb8] sm:$0xf] %v2258
    %2387 = vst [vmem:[%s3 + $0xbc] sm:$0xf] %v2259
    %2388 = vst [vmem:[%s3 + $0xc0] sm:$0xf] %v2260
    %2389 = vst [vmem:[%s3 + $0xc4] sm:$0xf] %v2261
    %2390 = vst [vmem:[%s3 + $0xc8] sm:$0xf] %v2262
    %2391 = vst [vmem:[%s3 + $0xcc] sm:$0xf] %v2263
    %2392 = vst [vmem:[%s3 + $0xd0] sm:$0xf] %v2264
    %2393 = vst [vmem:[%s3 + $0xd4] sm:$0xf] %v2265
    %2394 = vst [vmem:[%s3 + $0xd8] sm:$0xf] %v2266
    %2395 = vst [vmem:[%s3 + $0xdc] sm:$0xf] %v2267
    %2396 = vst [vmem:[%s3 + $0xe0] sm:$0xf] %v2268
    %2397 = vst [vmem:[%s3 + $0xe4] sm:$0xf] %v2269
    %2398 = vst [vmem:[%s3 + $0xe8] sm:$0xf] %v2270
    %2399 = vst [vmem:[%s3 + $0xec] sm:$0xf] %v2271
    %2400 = vst [vmem:[%s3 + $0xf0] sm:$0xf] %v2272
    %2401 = vst [vmem:[%s3 + $0xf4] sm:$0xf] %v2273
    %2402 = vst [vmem:[%s3 + $0xf8] sm:$0xf] %v2274
    %2403 = vst [vmem:[%s3 + $0xfc] sm:$0xf] %v2275
  $region21: #{gcn_rand_labeled_forward.4} parent=0 // pred_fallthru
    _
  // Predicated region
  $region22: #{gcn_rand_labeled_forward.4} parent=0 // pred_check
    _
  $region23: #{gcn_rand_labeled_forward.4} parent=0 // pred_check_branch
    %2405 = sbr.rel (0) target = $region25
  $region24: #{gcn_rand_labeled_forward.4} parent=0 // pred_region
    _
  $region25: #{gcn_rand_labeled_forward.4} parent=0 // pred_fallthru
    _
  // Predicated region
  $region26: #{gcn_rand_labeled_forward.4} parent=0 // pred_check
    _
  $region27: #{gcn_rand_labeled_forward.4} parent=0 // pred_check_branch
    %2407 = sbr.rel (0) target = $region29
  $region28: #{gcn_rand_labeled_forward.4} parent=0 // pred_region
    _
  $region29: #{gcn_rand_labeled_forward.4} parent=0 // pred_fallthru
    _

// kernel: gcn_rand_labeled_forward.5
$region0: #{gcn_rand_labeled_forward.5}
  #allocation0 [shape = 'u32[]', space=smem, size = 0x4, offset = 0x4, fixed_abs, tag = 'smem constant byte address 0x4 - core index']
  #allocation1 [shape = 'u32[144,128]{1,0:T(1,128)}', space=vmem, size = 0x12000, scoped, tag = 'internal scratch']
  #allocation2 [shape = 'f32[512,128]{1,0:T(8,128)}', space=vmem, size = 0x40000, scoped, tag = 'scratch operand']
  %s0 = inlined_call_operand.vmem [shape: bf16[512,512], index: 0, kind: input, shape index: {}]
  %s1 = inlined_call_operand.vmem [shape: bf16[512,128], index: 1, kind: input, shape index: {}]
  %s2 = inlined_call_operand.vmem [shape: f32[128,128], index: 2, kind: input, shape index: {}]
  %s3 = inlined_call_operand.vmem [shape: f32[1,128], index: 3, kind: input, shape index: {}]
  %s4 = inlined_call_operand.vmem [shape: f32[512,128], index: 4, kind: output, shape index: {}]
  %s5 = sld [smem:[#allocation0]]
  $region34: #{gcn_rand_labeled_forward.5} parent=0
    _
  %s7 = ssub.s32 1, %s5
  %s8 = scalar_select 0, %s7, %s5
  // Predicated region
  $region2: #{gcn_rand_labeled_forward.5} parent=0 // pred_check
    _
  $region3: #{gcn_rand_labeled_forward.5} parent=0 // pred_check_branch
    %10 = sbr.rel (0) target = $region5
  $region4: #{gcn_rand_labeled_forward.5} parent=0 // pred_region
    _
  $region5: #{gcn_rand_labeled_forward.5} parent=0 // pred_fallthru
    _
  // Predicated region
  $region6: #{gcn_rand_labeled_forward.5} parent=0 // pred_check
    _
  $region7: #{gcn_rand_labeled_forward.5} parent=0 // pred_check_branch
    %12 = sbr.rel (0) target = $region9
  $region8: #{gcn_rand_labeled_forward.5} parent=0 // pred_region
    _
  $region9: #{gcn_rand_labeled_forward.5} parent=0 // pred_fallthru
    _
  // Predicated region
  $region10: #{gcn_rand_labeled_forward.5} parent=0 // pred_check
    _
  $region11: #{gcn_rand_labeled_forward.5} parent=0 // pred_check_branch
    %14 = sbr.rel (0) target = $region13
  $region12: #{gcn_rand_labeled_forward.5} parent=0 // pred_region
    _
  $region13: #{gcn_rand_labeled_forward.5} parent=0 // pred_fallthru
    _
  // Predicated region
  $region14: #{gcn_rand_labeled_forward.5} parent=0 // pred_check
    _
  $region15: #{gcn_rand_labeled_forward.5} parent=0 // pred_check_branch
    %16 = sbr.rel (0) target = $region17
  $region16: #{gcn_rand_labeled_forward.5} parent=0 // pred_region
    _
  $region17: #{gcn_rand_labeled_forward.5} parent=0 // pred_fallthru
    _
  %p18 = scmp.eq.s32.totalorder 0, 0
  // Predicated region
  $region18: #{gcn_rand_labeled_forward.5} parent=0 // pred_check
    %p19 = pneg %p18
  $region19: #{gcn_rand_labeled_forward.5} parent=0 // pred_check_branch
    %21 = sbr.rel (%p19) target = $region21
  $region20: #{gcn_rand_labeled_forward.5} parent=0 // pred_region
    %22 = vst [vmem:[#allocation2] sm:$0xff] 0.0
    %23 = vst [vmem:[#allocation2 + $0x8] sm:$0xff] 0.0
    %24 = vst [vmem:[#allocation2 + $0x10] sm:$0xff] 0.0
    %25 = vst [vmem:[#allocation2 + $0x18] sm:$0xff] 0.0
    %26 = vst [vmem:[#allocation2 + $0x20] sm:$0xff] 0.0
    %27 = vst [vmem:[#allocation2 + $0x28] sm:$0xff] 0.0
    %28 = vst [vmem:[#allocation2 + $0x30] sm:$0xff] 0.0
    %29 = vst [vmem:[#allocation2 + $0x38] sm:$0xff] 0.0
    %30 = vst [vmem:[#allocation2 + $0x40] sm:$0xff] 0.0
    %31 = vst [vmem:[#allocation2 + $0x48] sm:$0xff] 0.0
    %32 = vst [vmem:[#allocation2 + $0x50] sm:$0xff] 0.0
    %33 = vst [vmem:[#allocation2 + $0x58] sm:$0xff] 0.0
    %34 = vst [vmem:[#allocation2 + $0x60] sm:$0xff] 0.0
    %35 = vst [vmem:[#allocation2 + $0x68] sm:$0xff] 0.0
    %36 = vst [vmem:[#allocation2 + $0x70] sm:$0xff] 0.0
    %37 = vst [vmem:[#allocation2 + $0x78] sm:$0xff] 0.0
    %38 = vst [vmem:[#allocation2 + $0x80] sm:$0xff] 0.0
    %39 = vst [vmem:[#allocation2 + $0x88] sm:$0xff] 0.0
    %40 = vst [vmem:[#allocation2 + $0x90] sm:$0xff] 0.0
    %41 = vst [vmem:[#allocation2 + $0x98] sm:$0xff] 0.0
    %42 = vst [vmem:[#allocation2 + $0xa0] sm:$0xff] 0.0
    %43 = vst [vmem:[#allocation2 + $0xa8] sm:$0xff] 0.0
    %44 = vst [vmem:[#allocation2 + $0xb0] sm:$0xff] 0.0
    %45 = vst [vmem:[#allocation2 + $0xb8] sm:$0xff] 0.0
    %46 = vst [vmem:[#allocation2 + $0xc0] sm:$0xff] 0.0
    %47 = vst [vmem:[#allocation2 + $0xc8] sm:$0xff] 0.0
    %48 = vst [vmem:[#allocation2 + $0xd0] sm:$0xff] 0.0
    %49 = vst [vmem:[#allocation2 + $0xd8] sm:$0xff] 0.0
    %50 = vst [vmem:[#allocation2 + $0xe0] sm:$0xff] 0.0
    %51 = vst [vmem:[#allocation2 + $0xe8] sm:$0xff] 0.0
    %52 = vst [vmem:[#allocation2 + $0xf0] sm:$0xff] 0.0
    %53 = vst [vmem:[#allocation2 + $0xf8] sm:$0xff] 0.0
    %54 = vst [vmem:[#allocation2 + $0x100] sm:$0xff] 0.0
    %55 = vst [vmem:[#allocation2 + $0x108] sm:$0xff] 0.0
    %56 = vst [vmem:[#allocation2 + $0x110] sm:$0xff] 0.0
    %57 = vst [vmem:[#allocation2 + $0x118] sm:$0xff] 0.0
    %58 = vst [vmem:[#allocation2 + $0x120] sm:$0xff] 0.0
    %59 = vst [vmem:[#allocation2 + $0x128] sm:$0xff] 0.0
    %60 = vst [vmem:[#allocation2 + $0x130] sm:$0xff] 0.0
    %61 = vst [vmem:[#allocation2 + $0x138] sm:$0xff] 0.0
    %62 = vst [vmem:[#allocation2 + $0x140] sm:$0xff] 0.0
    %63 = vst [vmem:[#allocation2 + $0x148] sm:$0xff] 0.0
    %64 = vst [vmem:[#allocation2 + $0x150] sm:$0xff] 0.0
    %65 = vst [vmem:[#allocation2 + $0x158] sm:$0xff] 0.0
    %66 = vst [vmem:[#allocation2 + $0x160] sm:$0xff] 0.0
    %67 = vst [vmem:[#allocation2 + $0x168] sm:$0xff] 0.0
    %68 = vst [vmem:[#allocation2 + $0x170] sm:$0xff] 0.0
    %69 = vst [vmem:[#allocation2 + $0x178] sm:$0xff] 0.0
    %70 = vst [vmem:[#allocation2 + $0x180] sm:$0xff] 0.0
    %71 = vst [vmem:[#allocation2 + $0x188] sm:$0xff] 0.0
    %72 = vst [vmem:[#allocation2 + $0x190] sm:$0xff] 0.0
    %73 = vst [vmem:[#allocation2 + $0x198] sm:$0xff] 0.0
    %74 = vst [vmem:[#allocation2 + $0x1a0] sm:$0xff] 0.0
    %75 = vst [vmem:[#allocation2 + $0x1a8] sm:$0xff] 0.0
    %76 = vst [vmem:[#allocation2 + $0x1b0] sm:$0xff] 0.0
    %77 = vst [vmem:[#allocation2 + $0x1b8] sm:$0xff] 0.0
    %78 = vst [vmem:[#allocation2 + $0x1c0] sm:$0xff] 0.0
    %79 = vst [vmem:[#allocation2 + $0x1c8] sm:$0xff] 0.0
    %80 = vst [vmem:[#allocation2 + $0x1d0] sm:$0xff] 0.0
    %81 = vst [vmem:[#allocation2 + $0x1d8] sm:$0xff] 0.0
    %82 = vst [vmem:[#allocation2 + $0x1e0] sm:$0xff] 0.0
    %83 = vst [vmem:[#allocation2 + $0x1e8] sm:$0xff] 0.0
    %84 = vst [vmem:[#allocation2 + $0x1f0] sm:$0xff] 0.0
    %85 = vst [vmem:[#allocation2 + $0x1f8] sm:$0xff] 0.0
  $region21: #{gcn_rand_labeled_forward.5} parent=0 // pred_fallthru
    _
  %s86 = smul.u32 0, 512
  %s87 = sshra.s32 %s86, 3
  %s88 = sand.u32 %s86, 7
  %s89 = smul.addr %s87, 4
  %s90 = scalar_lea.vmem %s1, %s89
  %v91 = vld [vmem:[%s90] sm:$0xf]
  %v92 = vld [vmem:[%s90 + $0x4] sm:$0xf]
  %v93 = vld [vmem:[%s90 + $0x8] sm:$0xf]
  %v94 = vld [vmem:[%s90 + $0xc] sm:$0xf]
  %v95 = vld [vmem:[%s90 + $0x10] sm:$0xf]
  %v96 = vld [vmem:[%s90 + $0x14] sm:$0xf]
  %v97 = vld [vmem:[%s90 + $0x18] sm:$0xf]
  %v98 = vld [vmem:[%s90 + $0x1c] sm:$0xf]
  %v99 = vld [vmem:[%s90 + $0x20] sm:$0xf]
  %v100 = vld [vmem:[%s90 + $0x24] sm:$0xf]
  %v101 = vld [vmem:[%s90 + $0x28] sm:$0xf]
  %v102 = vld [vmem:[%s90 + $0x2c] sm:$0xf]
  %v103 = vld [vmem:[%s90 + $0x30] sm:$0xf]
  %v104 = vld [vmem:[%s90 + $0x34] sm:$0xf]
  %v105 = vld [vmem:[%s90 + $0x38] sm:$0xf]
  %v106 = vld [vmem:[%s90 + $0x3c] sm:$0xf]
  %v107 = vld [vmem:[%s90 + $0x40] sm:$0xf]
  %v108 = vld [vmem:[%s90 + $0x44] sm:$0xf]
  %v109 = vld [vmem:[%s90 + $0x48] sm:$0xf]
  %v110 = vld [vmem:[%s90 + $0x4c] sm:$0xf]
  %v111 = vld [vmem:[%s90 + $0x50] sm:$0xf]
  %v112 = vld [vmem:[%s90 + $0x54] sm:$0xf]
  %v113 = vld [vmem:[%s90 + $0x58] sm:$0xf]
  %v114 = vld [vmem:[%s90 + $0x5c] sm:$0xf]
  %v115 = vld [vmem:[%s90 + $0x60] sm:$0xf]
  %v116 = vld [vmem:[%s90 + $0x64] sm:$0xf]
  %v117 = vld [vmem:[%s90 + $0x68] sm:$0xf]
  %v118 = vld [vmem:[%s90 + $0x6c] sm:$0xf]
  %v119 = vld [vmem:[%s90 + $0x70] sm:$0xf]
  %v120 = vld [vmem:[%s90 + $0x74] sm:$0xf]
  %v121 = vld [vmem:[%s90 + $0x78] sm:$0xf]
  %v122 = vld [vmem:[%s90 + $0x7c] sm:$0xf]
  %v123 = vld [vmem:[%s90 + $0x80] sm:$0xf]
  %v124 = vld [vmem:[%s90 + $0x84] sm:$0xf]
  %v125 = vld [vmem:[%s90 + $0x88] sm:$0xf]
  %v126 = vld [vmem:[%s90 + $0x8c] sm:$0xf]
  %v127 = vld [vmem:[%s90 + $0x90] sm:$0xf]
  %v128 = vld [vmem:[%s90 + $0x94] sm:$0xf]
  %v129 = vld [vmem:[%s90 + $0x98] sm:$0xf]
  %v130 = vld [vmem:[%s90 + $0x9c] sm:$0xf]
  %v131 = vld [vmem:[%s90 + $0xa0] sm:$0xf]
  %v132 = vld [vmem:[%s90 + $0xa4] sm:$0xf]
  %v133 = vld [vmem:[%s90 + $0xa8] sm:$0xf]
  %v134 = vld [vmem:[%s90 + $0xac] sm:$0xf]
  %v135 = vld [vmem:[%s90 + $0xb0] sm:$0xf]
  %v136 = vld [vmem:[%s90 + $0xb4] sm:$0xf]
  %v137 = vld [vmem:[%s90 + $0xb8] sm:$0xf]
  %v138 = vld [vmem:[%s90 + $0xbc] sm:$0xf]
  %v139 = vld [vmem:[%s90 + $0xc0] sm:$0xf]
  %v140 = vld [vmem:[%s90 + $0xc4] sm:$0xf]
  %v141 = vld [vmem:[%s90 + $0xc8] sm:$0xf]
  %v142 = vld [vmem:[%s90 + $0xcc] sm:$0xf]
  %v143 = vld [vmem:[%s90 + $0xd0] sm:$0xf]
  %v144 = vld [vmem:[%s90 + $0xd4] sm:$0xf]
  %v145 = vld [vmem:[%s90 + $0xd8] sm:$0xf]
  %v146 = vld [vmem:[%s90 + $0xdc] sm:$0xf]
  %v147 = vld [vmem:[%s90 + $0xe0] sm:$0xf]
  %v148 = vld [vmem:[%s90 + $0xe4] sm:$0xf]
  %v149 = vld [vmem:[%s90 + $0xe8] sm:$0xf]
  %v150 = vld [vmem:[%s90 + $0xec] sm:$0xf]
  %v151 = vld [vmem:[%s90 + $0xf0] sm:$0xf]
  %v152 = vld [vmem:[%s90 + $0xf4] sm:$0xf]
  %v153 = vld [vmem:[%s90 + $0xf8] sm:$0xf]
  %v154 = vld [vmem:[%s90 + $0xfc] sm:$0xf]
  %v155 = vld [vmem:[#allocation2] sm:$0xff]
  %v156 = vld [vmem:[#allocation2 + $0x8] sm:$0xff]
  %v157 = vld [vmem:[#allocation2 + $0x10] sm:$0xff]
  %v158 = vld [vmem:[#allocation2 + $0x18] sm:$0xff]
  %v159 = vld [vmem:[#allocation2 + $0x20] sm:$0xff]
  %v160 = vld [vmem:[#allocation2 + $0x28] sm:$0xff]
  %v161 = vld [vmem:[#allocation2 + $0x30] sm:$0xff]
  %v162 = vld [vmem:[#allocation2 + $0x38] sm:$0xff]
  %v163 = vld [vmem:[#allocation2 + $0x40] sm:$0xff]
  %v164 = vld [vmem:[#allocation2 + $0x48] sm:$0xff]
  %v165 = vld [vmem:[#allocation2 + $0x50] sm:$0xff]
  %v166 = vld [vmem:[#allocation2 + $0x58] sm:$0xff]
  %v167 = vld [vmem:[#allocation2 + $0x60] sm:$0xff]
  %v168 = vld [vmem:[#allocation2 + $0x68] sm:$0xff]
  %v169 = vld [vmem:[#allocation2 + $0x70] sm:$0xff]
  %v170 = vld [vmem:[#allocation2 + $0x78] sm:$0xff]
  %v171 = vld [vmem:[#allocation2 + $0x80] sm:$0xff]
  %v172 = vld [vmem:[#allocation2 + $0x88] sm:$0xff]
  %v173 = vld [vmem:[#allocation2 + $0x90] sm:$0xff]
  %v174 = vld [vmem:[#allocation2 + $0x98] sm:$0xff]
  %v175 = vld [vmem:[#allocation2 + $0xa0] sm:$0xff]
  %v176 = vld [vmem:[#allocation2 + $0xa8] sm:$0xff]
  %v177 = vld [vmem:[#allocation2 + $0xb0] sm:$0xff]
  %v178 = vld [vmem:[#allocation2 + $0xb8] sm:$0xff]
  %v179 = vld [vmem:[#allocation2 + $0xc0] sm:$0xff]
  %v180 = vld [vmem:[#allocation2 + $0xc8] sm:$0xff]
  %v181 = vld [vmem:[#allocation2 + $0xd0] sm:$0xff]
  %v182 = vld [vmem:[#allocation2 + $0xd8] sm:$0xff]
  %v183 = vld [vmem:[#allocation2 + $0xe0] sm:$0xff]
  %v184 = vld [vmem:[#allocation2 + $0xe8] sm:$0xff]
  %v185 = vld [vmem:[#allocation2 + $0xf0] sm:$0xff]
  %v186 = vld [vmem:[#allocation2 + $0xf8] sm:$0xff]
  %v187 = vld [vmem:[#allocation2 + $0x100] sm:$0xff]
  %v188 = vld [vmem:[#allocation2 + $0x108] sm:$0xff]
  %v189 = vld [vmem:[#allocation2 + $0x110] sm:$0xff]
  %v190 = vld [vmem:[#allocation2 + $0x118] sm:$0xff]
  %v191 = vld [vmem:[#allocation2 + $0x120] sm:$0xff]
  %v192 = vld [vmem:[#allocation2 + $0x128] sm:$0xff]
  %v193 = vld [vmem:[#allocation2 + $0x130] sm:$0xff]
  %v194 = vld [vmem:[#allocation2 + $0x138] sm:$0xff]
  %v195 = vld [vmem:[#allocation2 + $0x140] sm:$0xff]
  %v196 = vld [vmem:[#allocation2 + $0x148] sm:$0xff]
  %v197 = vld [vmem:[#allocation2 + $0x150] sm:$0xff]
  %v198 = vld [vmem:[#allocation2 + $0x158] sm:$0xff]
  %v199 = vld [vmem:[#allocation2 + $0x160] sm:$0xff]
  %v200 = vld [vmem:[#allocation2 + $0x168] sm:$0xff]
  %v201 = vld [vmem:[#allocation2 + $0x170] sm:$0xff]
  %v202 = vld [vmem:[#allocation2 + $0x178] sm:$0xff]
  %v203 = vld [vmem:[#allocation2 + $0x180] sm:$0xff]
  %v204 = vld [vmem:[#allocation2 + $0x188] sm:$0xff]
  %v205 = vld [vmem:[#allocation2 + $0x190] sm:$0xff]
  %v206 = vld [vmem:[#allocation2 + $0x198] sm:$0xff]
  %v207 = vld [vmem:[#allocation2 + $0x1a0] sm:$0xff]
  %v208 = vld [vmem:[#allocation2 + $0x1a8] sm:$0xff]
  %v209 = vld [vmem:[#allocation2 + $0x1b0] sm:$0xff]
  %v210 = vld [vmem:[#allocation2 + $0x1b8] sm:$0xff]
  %v211 = vld [vmem:[#allocation2 + $0x1c0] sm:$0xff]
  %v212 = vld [vmem:[#allocation2 + $0x1c8] sm:$0xff]
  %v213 = vld [vmem:[#allocation2 + $0x1d0] sm:$0xff]
  %v214 = vld [vmem:[#allocation2 + $0x1d8] sm:$0xff]
  %v215 = vld [vmem:[#allocation2 + $0x1e0] sm:$0xff]
  %v216 = vld [vmem:[#allocation2 + $0x1e8] sm:$0xff]
  %v217 = vld [vmem:[#allocation2 + $0x1f0] sm:$0xff]
  %v218 = vld [vmem:[#allocation2 + $0x1f8] sm:$0xff]
  %v219 = vld [vmem:[%s0] sm:$0xff]
  %v220 = vld [vmem:[%s0 + $0x8] sm:$0xff]
  %v221 = vld [vmem:[%s0 + $0x10] sm:$0xff]
  %v222 = vld [vmem:[%s0 + $0x18] sm:$0xff]
  %v223 = vld [vmem:[%s0 + $0x20] sm:$0xff]
  %v224 = vld [vmem:[%s0 + $0x28] sm:$0xff]
  %v225 = vld [vmem:[%s0 + $0x30] sm:$0xff]
  %v226 = vld [vmem:[%s0 + $0x38] sm:$0xff]
  %v227 = vld [vmem:[%s0 + $0x40] sm:$0xff]
  %v228 = vld [vmem:[%s0 + $0x48] sm:$0xff]
  %v229 = vld [vmem:[%s0 + $0x50] sm:$0xff]
  %v230 = vld [vmem:[%s0 + $0x58] sm:$0xff]
  %v231 = vld [vmem:[%s0 + $0x60] sm:$0xff]
  %v232 = vld [vmem:[%s0 + $0x68] sm:$0xff]
  %v233 = vld [vmem:[%s0 + $0x70] sm:$0xff]
  %v234 = vld [vmem:[%s0 + $0x78] sm:$0xff]
  %v235 = vld [vmem:[%s0 + $0x80] sm:$0xff]
  %v236 = vld [vmem:[%s0 + $0x88] sm:$0xff]
  %v237 = vld [vmem:[%s0 + $0x90] sm:$0xff]
  %v238 = vld [vmem:[%s0 + $0x98] sm:$0xff]
  %v239 = vld [vmem:[%s0 + $0xa0] sm:$0xff]
  %v240 = vld [vmem:[%s0 + $0xa8] sm:$0xff]
  %v241 = vld [vmem:[%s0 + $0xb0] sm:$0xff]
  %v242 = vld [vmem:[%s0 + $0xb8] sm:$0xff]
  %v243 = vld [vmem:[%s0 + $0xc0] sm:$0xff]
  %v244 = vld [vmem:[%s0 + $0xc8] sm:$0xff]
  %v245 = vld [vmem:[%s0 + $0xd0] sm:$0xff]
  %v246 = vld [vmem:[%s0 + $0xd8] sm:$0xff]
  %v247 = vld [vmem:[%s0 + $0xe0] sm:$0xff]
  %v248 = vld [vmem:[%s0 + $0xe8] sm:$0xff]
  %v249 = vld [vmem:[%s0 + $0xf0] sm:$0xff]
  %v250 = vld [vmem:[%s0 + $0xf8] sm:$0xff]
  %v251 = vld [vmem:[%s0 + $0x100] sm:$0xff]
  %v252 = vld [vmem:[%s0 + $0x108] sm:$0xff]
  %v253 = vld [vmem:[%s0 + $0x110] sm:$0xff]
  %v254 = vld [vmem:[%s0 + $0x118] sm:$0xff]
  %v255 = vld [vmem:[%s0 + $0x120] sm:$0xff]
  %v256 = vld [vmem:[%s0 + $0x128] sm:$0xff]
  %v257 = vld [vmem:[%s0 + $0x130] sm:$0xff]
  %v258 = vld [vmem:[%s0 + $0x138] sm:$0xff]
  %v259 = vld [vmem:[%s0 + $0x140] sm:$0xff]
  %v260 = vld [vmem:[%s0 + $0x148] sm:$0xff]
  %v261 = vld [vmem:[%s0 + $0x150] sm:$0xff]
  %v262 = vld [vmem:[%s0 + $0x158] sm:$0xff]
  %v263 = vld [vmem:[%s0 + $0x160] sm:$0xff]
  %v264 = vld [vmem:[%s0 + $0x168] sm:$0xff]
  %v265 = vld [vmem:[%s0 + $0x170] sm:$0xff]
  %v266 = vld [vmem:[%s0 + $0x178] sm:$0xff]
  %v267 = vld [vmem:[%s0 + $0x180] sm:$0xff]
  %v268 = vld [vmem:[%s0 + $0x188] sm:$0xff]
  %v269 = vld [vmem:[%s0 + $0x190] sm:$0xff]
  %v270 = vld [vmem:[%s0 + $0x198] sm:$0xff]
  %v271 = vld [vmem:[%s0 + $0x1a0] sm:$0xff]
  %v272 = vld [vmem:[%s0 + $0x1a8] sm:$0xff]
  %v273 = vld [vmem:[%s0 + $0x1b0] sm:$0xff]
  %v274 = vld [vmem:[%s0 + $0x1b8] sm:$0xff]
  %v275 = vld [vmem:[%s0 + $0x1c0] sm:$0xff]
  %v276 = vld [vmem:[%s0 + $0x1c8] sm:$0xff]
  %v277 = vld [vmem:[%s0 + $0x1d0] sm:$0xff]
  %v278 = vld [vmem:[%s0 + $0x1d8] sm:$0xff]
  %v279 = vld [vmem:[%s0 + $0x1e0] sm:$0xff]
  %v280 = vld [vmem:[%s0 + $0x1e8] sm:$0xff]
  %v281 = vld [vmem:[%s0 + $0x1f0] sm:$0xff]
  %v282 = vld [vmem:[%s0 + $0x1f8] sm:$0xff]
  %v283 = vld [vmem:[%s0 + $0x200] sm:$0xff]
  %v284 = vld [vmem:[%s0 + $0x208] sm:$0xff]
  %v285 = vld [vmem:[%s0 + $0x210] sm:$0xff]
  %v286 = vld [vmem:[%s0 + $0x218] sm:$0xff]
  %v287 = vld [vmem:[%s0 + $0x220] sm:$0xff]
  %v288 = vld [vmem:[%s0 + $0x228] sm:$0xff]
  %v289 = vld [vmem:[%s0 + $0x230] sm:$0xff]
  %v290 = vld [vmem:[%s0 + $0x238] sm:$0xff]
  %v291 = vld [vmem:[%s0 + $0x240] sm:$0xff]
  %v292 = vld [vmem:[%s0 + $0x248] sm:$0xff]
  %v293 = vld [vmem:[%s0 + $0x250] sm:$0xff]
  %v294 = vld [vmem:[%s0 + $0x258] sm:$0xff]
  %v295 = vld [vmem:[%s0 + $0x260] sm:$0xff]
  %v296 = vld [vmem:[%s0 + $0x268] sm:$0xff]
  %v297 = vld [vmem:[%s0 + $0x270] sm:$0xff]
  %v298 = vld [vmem:[%s0 + $0x278] sm:$0xff]
  %v299 = vld [vmem:[%s0 + $0x280] sm:$0xff]
  %v300 = vld [vmem:[%s0 + $0x288] sm:$0xff]
  %v301 = vld [vmem:[%s0 + $0x290] sm:$0xff]
  %v302 = vld [vmem:[%s0 + $0x298] sm:$0xff]
  %v303 = vld [vmem:[%s0 + $0x2a0] sm:$0xff]
  %v304 = vld [vmem:[%s0 + $0x2a8] sm:$0xff]
  %v305 = vld [vmem:[%s0 + $0x2b0] sm:$0xff]
  %v306 = vld [vmem:[%s0 + $0x2b8] sm:$0xff]
  %v307 = vld [vmem:[%s0 + $0x2c0] sm:$0xff]
  %v308 = vld [vmem:[%s0 + $0x2c8] sm:$0xff]
  %v309 = vld [vmem:[%s0 + $0x2d0] sm:$0xff]
  %v310 = vld [vmem:[%s0 + $0x2d8] sm:$0xff]
  %v311 = vld [vmem:[%s0 + $0x2e0] sm:$0xff]
  %v312 = vld [vmem:[%s0 + $0x2e8] sm:$0xff]
  %v313 = vld [vmem:[%s0 + $0x2f0] sm:$0xff]
  %v314 = vld [vmem:[%s0 + $0x2f8] sm:$0xff]
  %v315 = vld [vmem:[%s0 + $0x300] sm:$0xff]
  %v316 = vld [vmem:[%s0 + $0x308] sm:$0xff]
  %v317 = vld [vmem:[%s0 + $0x310] sm:$0xff]
  %v318 = vld [vmem:[%s0 + $0x318] sm:$0xff]
  %v319 = vld [vmem:[%s0 + $0x320] sm:$0xff]
  %v320 = vld [vmem:[%s0 + $0x328] sm:$0xff]
  %v321 = vld [vmem:[%s0 + $0x330] sm:$0xff]
  %v322 = vld [vmem:[%s0 + $0x338] sm:$0xff]
  %v323 = vld [vmem:[%s0 + $0x340] sm:$0xff]
  %v324 = vld [vmem:[%s0 + $0x348] sm:$0xff]
  %v325 = vld [vmem:[%s0 + $0x350] sm:$0xff]
  %v326 = vld [vmem:[%s0 + $0x358] sm:$0xff]
  %v327 = vld [vmem:[%s0 + $0x360] sm:$0xff]
  %v328 = vld [vmem:[%s0 + $0x368] sm:$0xff]
  %v329 = vld [vmem:[%s0 + $0x370] sm:$0xff]
  %v330 = vld [vmem:[%s0 + $0x378] sm:$0xff]
  %v331 = vld [vmem:[%s0 + $0x380] sm:$0xff]
  %v332 = vld [vmem:[%s0 + $0x388] sm:$0xff]
  %v333 = vld [vmem:[%s0 + $0x390] sm:$0xff]
  %v334 = vld [vmem:[%s0 + $0x398] sm:$0xff]
  %v335 = vld [vmem:[%s0 + $0x3a0] sm:$0xff]
  %v336 = vld [vmem:[%s0 + $0x3a8] sm:$0xff]
  %v337 = vld [vmem:[%s0 + $0x3b0] sm:$0xff]
  %v338 = vld [vmem:[%s0 + $0x3b8] sm:$0xff]
  %v339 = vld [vmem:[%s0 + $0x3c0] sm:$0xff]
  %v340 = vld [vmem:[%s0 + $0x3c8] sm:$0xff]
  %v341 = vld [vmem:[%s0 + $0x3d0] sm:$0xff]
  %v342 = vld [vmem:[%s0 + $0x3d8] sm:$0xff]
  %v343 = vld [vmem:[%s0 + $0x3e0] sm:$0xff]
  %v344 = vld [vmem:[%s0 + $0x3e8] sm:$0xff]
  %v345 = vld [vmem:[%s0 + $0x3f0] sm:$0xff]
  %v346 = vld [vmem:[%s0 + $0x3f8] sm:$0xff]
  %v475 = vunpack.c.l.b16 %v219
  %v476 = vunpack.c.h.b16 %v219
  %v477 = vunpack.c.l.b16 %v220
  %v478 = vunpack.c.h.b16 %v220
  %v479 = vunpack.c.l.b16 %v221
  %v480 = vunpack.c.h.b16 %v221
  %v481 = vunpack.c.l.b16 %v222
  %v482 = vunpack.c.h.b16 %v222
  %v483 = vunpack.c.l.b16 %v223
  %v484 = vunpack.c.h.b16 %v223
  %v485 = vunpack.c.l.b16 %v224
  %v486 = vunpack.c.h.b16 %v224
  %v487 = vunpack.c.l.b16 %v225
  %v488 = vunpack.c.h.b16 %v225
  %v489 = vunpack.c.l.b16 %v226
  %v490 = vunpack.c.h.b16 %v226
  %v491 = vunpack.c.l.b16 %v227
  %v492 = vunpack.c.h.b16 %v227
  %v493 = vunpack.c.l.b16 %v228
  %v494 = vunpack.c.h.b16 %v228
  %v495 = vunpack.c.l.b16 %v229
  %v496 = vunpack.c.h.b16 %v229
  %v497 = vunpack.c.l.b16 %v230
  %v498 = vunpack.c.h.b16 %v230
  %v499 = vunpack.c.l.b16 %v231
  %v500 = vunpack.c.h.b16 %v231
  %v501 = vunpack.c.l.b16 %v232
  %v502 = vunpack.c.h.b16 %v232
  %v503 = vunpack.c.l.b16 %v233
  %v504 = vunpack.c.h.b16 %v233
  %v505 = vunpack.c.l.b16 %v234
  %v506 = vunpack.c.h.b16 %v234
  %v507 = vunpack.c.l.b16 %v235
  %v508 = vunpack.c.h.b16 %v235
  %v509 = vunpack.c.l.b16 %v236
  %v510 = vunpack.c.h.b16 %v236
  %v511 = vunpack.c.l.b16 %v237
  %v512 = vunpack.c.h.b16 %v237
  %v513 = vunpack.c.l.b16 %v238
  %v514 = vunpack.c.h.b16 %v238
  %v515 = vunpack.c.l.b16 %v239
  %v516 = vunpack.c.h.b16 %v239
  %v517 = vunpack.c.l.b16 %v240
  %v518 = vunpack.c.h.b16 %v240
  %v519 = vunpack.c.l.b16 %v241
  %v520 = vunpack.c.h.b16 %v241
  %v521 = vunpack.c.l.b16 %v242
  %v522 = vunpack.c.h.b16 %v242
  %v523 = vunpack.c.l.b16 %v243
  %v524 = vunpack.c.h.b16 %v243
  %v525 = vunpack.c.l.b16 %v244
  %v526 = vunpack.c.h.b16 %v244
  %v527 = vunpack.c.l.b16 %v245
  %v528 = vunpack.c.h.b16 %v245
  %v529 = vunpack.c.l.b16 %v246
  %v530 = vunpack.c.h.b16 %v246
  %v531 = vunpack.c.l.b16 %v247
  %v532 = vunpack.c.h.b16 %v247
  %v533 = vunpack.c.l.b16 %v248
  %v534 = vunpack.c.h.b16 %v248
  %v535 = vunpack.c.l.b16 %v249
  %v536 = vunpack.c.h.b16 %v249
  %v537 = vunpack.c.l.b16 %v250
  %v538 = vunpack.c.h.b16 %v250
  %v539 = vunpack.c.l.b16 %v251
  %v540 = vunpack.c.h.b16 %v251
  %v541 = vunpack.c.l.b16 %v252
  %v542 = vunpack.c.h.b16 %v252
  %v543 = vunpack.c.l.b16 %v253
  %v544 = vunpack.c.h.b16 %v253
  %v545 = vunpack.c.l.b16 %v254
  %v546 = vunpack.c.h.b16 %v254
  %v547 = vunpack.c.l.b16 %v255
  %v548 = vunpack.c.h.b16 %v255
  %v549 = vunpack.c.l.b16 %v256
  %v550 = vunpack.c.h.b16 %v256
  %v551 = vunpack.c.l.b16 %v257
  %v552 = vunpack.c.h.b16 %v257
  %v553 = vunpack.c.l.b16 %v258
  %v554 = vunpack.c.h.b16 %v258
  %v555 = vunpack.c.l.b16 %v259
  %v556 = vunpack.c.h.b16 %v259
  %v557 = vunpack.c.l.b16 %v260
  %v558 = vunpack.c.h.b16 %v260
  %v559 = vunpack.c.l.b16 %v261
  %v560 = vunpack.c.h.b16 %v261
  %v561 = vunpack.c.l.b16 %v262
  %v562 = vunpack.c.h.b16 %v262
  %v563 = vunpack.c.l.b16 %v263
  %v564 = vunpack.c.h.b16 %v263
  %v565 = vunpack.c.l.b16 %v264
  %v566 = vunpack.c.h.b16 %v264
  %v567 = vunpack.c.l.b16 %v265
  %v568 = vunpack.c.h.b16 %v265
  %v569 = vunpack.c.l.b16 %v266
  %v570 = vunpack.c.h.b16 %v266
  %v571 = vunpack.c.l.b16 %v267
  %v572 = vunpack.c.h.b16 %v267
  %v573 = vunpack.c.l.b16 %v268
  %v574 = vunpack.c.h.b16 %v268
  %v575 = vunpack.c.l.b16 %v269
  %v576 = vunpack.c.h.b16 %v269
  %v577 = vunpack.c.l.b16 %v270
  %v578 = vunpack.c.h.b16 %v270
  %v579 = vunpack.c.l.b16 %v271
  %v580 = vunpack.c.h.b16 %v271
  %v581 = vunpack.c.l.b16 %v272
  %v582 = vunpack.c.h.b16 %v272
  %v583 = vunpack.c.l.b16 %v273
  %v584 = vunpack.c.h.b16 %v273
  %v585 = vunpack.c.l.b16 %v274
  %v586 = vunpack.c.h.b16 %v274
  %v587 = vunpack.c.l.b16 %v275
  %v588 = vunpack.c.h.b16 %v275
  %v589 = vunpack.c.l.b16 %v276
  %v590 = vunpack.c.h.b16 %v276
  %v591 = vunpack.c.l.b16 %v277
  %v592 = vunpack.c.h.b16 %v277
  %v593 = vunpack.c.l.b16 %v278
  %v594 = vunpack.c.h.b16 %v278
  %v595 = vunpack.c.l.b16 %v279
  %v596 = vunpack.c.h.b16 %v279
  %v597 = vunpack.c.l.b16 %v280
  %v598 = vunpack.c.h.b16 %v280
  %v599 = vunpack.c.l.b16 %v281
  %v600 = vunpack.c.h.b16 %v281
  %v601 = vunpack.c.l.b16 %v282
  %v602 = vunpack.c.h.b16 %v282
  %v603 = vunpack.c.l.b16 %v283
  %v604 = vunpack.c.h.b16 %v283
  %v605 = vunpack.c.l.b16 %v284
  %v606 = vunpack.c.h.b16 %v284
  %v607 = vunpack.c.l.b16 %v285
  %v608 = vunpack.c.h.b16 %v285
  %v609 = vunpack.c.l.b16 %v286
  %v610 = vunpack.c.h.b16 %v286
  %v611 = vunpack.c.l.b16 %v287
  %v612 = vunpack.c.h.b16 %v287
  %v613 = vunpack.c.l.b16 %v288
  %v614 = vunpack.c.h.b16 %v288
  %v615 = vunpack.c.l.b16 %v289
  %v616 = vunpack.c.h.b16 %v289
  %v617 = vunpack.c.l.b16 %v290
  %v618 = vunpack.c.h.b16 %v290
  %v619 = vunpack.c.l.b16 %v291
  %v620 = vunpack.c.h.b16 %v291
  %v621 = vunpack.c.l.b16 %v292
  %v622 = vunpack.c.h.b16 %v292
  %v623 = vunpack.c.l.b16 %v293
  %v624 = vunpack.c.h.b16 %v293
  %v625 = vunpack.c.l.b16 %v294
  %v626 = vunpack.c.h.b16 %v294
  %v627 = vunpack.c.l.b16 %v295
  %v628 = vunpack.c.h.b16 %v295
  %v629 = vunpack.c.l.b16 %v296
  %v630 = vunpack.c.h.b16 %v296
  %v631 = vunpack.c.l.b16 %v297
  %v632 = vunpack.c.h.b16 %v297
  %v633 = vunpack.c.l.b16 %v298
  %v634 = vunpack.c.h.b16 %v298
  %v635 = vunpack.c.l.b16 %v299
  %v636 = vunpack.c.h.b16 %v299
  %v637 = vunpack.c.l.b16 %v300
  %v638 = vunpack.c.h.b16 %v300
  %v639 = vunpack.c.l.b16 %v301
  %v640 = vunpack.c.h.b16 %v301
  %v641 = vunpack.c.l.b16 %v302
  %v642 = vunpack.c.h.b16 %v302
  %v643 = vunpack.c.l.b16 %v303
  %v644 = vunpack.c.h.b16 %v303
  %v645 = vunpack.c.l.b16 %v304
  %v646 = vunpack.c.h.b16 %v304
  %v647 = vunpack.c.l.b16 %v305
  %v648 = vunpack.c.h.b16 %v305
  %v649 = vunpack.c.l.b16 %v306
  %v650 = vunpack.c.h.b16 %v306
  %v651 = vunpack.c.l.b16 %v307
  %v652 = vunpack.c.h.b16 %v307
  %v653 = vunpack.c.l.b16 %v308
  %v654 = vunpack.c.h.b16 %v308
  %v655 = vunpack.c.l.b16 %v309
  %v656 = vunpack.c.h.b16 %v309
  %v657 = vunpack.c.l.b16 %v310
  %v658 = vunpack.c.h.b16 %v310
  %v659 = vunpack.c.l.b16 %v311
  %v660 = vunpack.c.h.b16 %v311
  %v661 = vunpack.c.l.b16 %v312
  %v662 = vunpack.c.h.b16 %v312
  %v663 = vunpack.c.l.b16 %v313
  %v664 = vunpack.c.h.b16 %v313
  %v665 = vunpack.c.l.b16 %v314
  %v666 = vunpack.c.h.b16 %v314
  %v667 = vunpack.c.l.b16 %v315
  %v668 = vunpack.c.h.b16 %v315
  %v669 = vunpack.c.l.b16 %v316
  %v670 = vunpack.c.h.b16 %v316
  %v671 = vunpack.c.l.b16 %v317
  %v672 = vunpack.c.h.b16 %v317
  %v673 = vunpack.c.l.b16 %v318
  %v674 = vunpack.c.h.b16 %v318
  %v675 = vunpack.c.l.b16 %v319
  %v676 = vunpack.c.h.b16 %v319
  %v677 = vunpack.c.l.b16 %v320
  %v678 = vunpack.c.h.b16 %v320
  %v679 = vunpack.c.l.b16 %v321
  %v680 = vunpack.c.h.b16 %v321
  %v681 = vunpack.c.l.b16 %v322
  %v682 = vunpack.c.h.b16 %v322
  %v683 = vunpack.c.l.b16 %v323
  %v684 = vunpack.c.h.b16 %v323
  %v685 = vunpack.c.l.b16 %v324
  %v686 = vunpack.c.h.b16 %v324
  %v687 = vunpack.c.l.b16 %v325
  %v688 = vunpack.c.h.b16 %v325
  %v689 = vunpack.c.l.b16 %v326
  %v690 = vunpack.c.h.b16 %v326
  %v691 = vunpack.c.l.b16 %v327
  %v692 = vunpack.c.h.b16 %v327
  %v693 = vunpack.c.l.b16 %v328
  %v694 = vunpack.c.h.b16 %v328
  %v695 = vunpack.c.l.b16 %v329
  %v696 = vunpack.c.h.b16 %v329
  %v697 = vunpack.c.l.b16 %v330
  %v698 = vunpack.c.h.b16 %v330
  %v699 = vunpack.c.l.b16 %v331
  %v700 = vunpack.c.h.b16 %v331
  %v701 = vunpack.c.l.b16 %v332
  %v702 = vunpack.c.h.b16 %v332
  %v703 = vunpack.c.l.b16 %v333
  %v704 = vunpack.c.h.b16 %v333
  %v705 = vunpack.c.l.b16 %v334
  %v706 = vunpack.c.h.b16 %v334
  %v707 = vunpack.c.l.b16 %v335
  %v708 = vunpack.c.h.b16 %v335
  %v709 = vunpack.c.l.b16 %v336
  %v710 = vunpack.c.h.b16 %v336
  %v711 = vunpack.c.l.b16 %v337
  %v712 = vunpack.c.h.b16 %v337
  %v713 = vunpack.c.l.b16 %v338
  %v714 = vunpack.c.h.b16 %v338
  %v715 = vunpack.c.l.b16 %v339
  %v716 = vunpack.c.h.b16 %v339
  %v717 = vunpack.c.l.b16 %v340
  %v718 = vunpack.c.h.b16 %v340
  %v719 = vunpack.c.l.b16 %v341
  %v720 = vunpack.c.h.b16 %v341
  %v721 = vunpack.c.l.b16 %v342
  %v722 = vunpack.c.h.b16 %v342
  %v723 = vunpack.c.l.b16 %v343
  %v724 = vunpack.c.h.b16 %v343
  %v725 = vunpack.c.l.b16 %v344
  %v726 = vunpack.c.h.b16 %v344
  %v727 = vunpack.c.l.b16 %v345
  %v728 = vunpack.c.h.b16 %v345
  %v729 = vunpack.c.l.b16 %v346
  %v730 = vunpack.c.h.b16 %v346
  %v731 = vpack.c.b16 %v479, %v475
  %v732 = vpack.c.b16 %v480, %v476
  %v733 = vpack.c.b16 %v481, %v477
  %v734 = vpack.c.b16 %v482, %v478
  %v735 = vpack.c.b16 %v487, %v483
  %v736 = vpack.c.b16 %v488, %v484
  %v737 = vpack.c.b16 %v489, %v485
  %v738 = vpack.c.b16 %v490, %v486
  %v739 = vpack.c.b16 %v495, %v491
  %v740 = vpack.c.b16 %v496, %v492
  %v741 = vpack.c.b16 %v497, %v493
  %v742 = vpack.c.b16 %v498, %v494
  %v743 = vpack.c.b16 %v503, %v499
  %v744 = vpack.c.b16 %v504, %v500
  %v745 = vpack.c.b16 %v505, %v501
  %v746 = vpack.c.b16 %v506, %v502
  %v747 = vpack.c.b16 %v511, %v507
  %v748 = vpack.c.b16 %v512, %v508
  %v749 = vpack.c.b16 %v513, %v509
  %v750 = vpack.c.b16 %v514, %v510
  %v751 = vpack.c.b16 %v519, %v515
  %v752 = vpack.c.b16 %v520, %v516
  %v753 = vpack.c.b16 %v521, %v517
  %v754 = vpack.c.b16 %v522, %v518
  %v755 = vpack.c.b16 %v527, %v523
  %v756 = vpack.c.b16 %v528, %v524
  %v757 = vpack.c.b16 %v529, %v525
  %v758 = vpack.c.b16 %v530, %v526
  %v759 = vpack.c.b16 %v535, %v531
  %v760 = vpack.c.b16 %v536, %v532
  %v761 = vpack.c.b16 %v537, %v533
  %v762 = vpack.c.b16 %v538, %v534
  %v763 = vpack.c.b16 %v543, %v539
  %v764 = vpack.c.b16 %v544, %v540
  %v765 = vpack.c.b16 %v545, %v541
  %v766 = vpack.c.b16 %v546, %v542
  %v767 = vpack.c.b16 %v551, %v547
  %v768 = vpack.c.b16 %v552, %v548
  %v769 = vpack.c.b16 %v553, %v549
  %v770 = vpack.c.b16 %v554, %v550
  %v771 = vpack.c.b16 %v559, %v555
  %v772 = vpack.c.b16 %v560, %v556
  %v773 = vpack.c.b16 %v561, %v557
  %v774 = vpack.c.b16 %v562, %v558
  %v775 = vpack.c.b16 %v567, %v563
  %v776 = vpack.c.b16 %v568, %v564
  %v777 = vpack.c.b16 %v569, %v565
  %v778 = vpack.c.b16 %v570, %v566
  %v779 = vpack.c.b16 %v575, %v571
  %v780 = vpack.c.b16 %v576, %v572
  %v781 = vpack.c.b16 %v577, %v573
  %v782 = vpack.c.b16 %v578, %v574
  %v783 = vpack.c.b16 %v583, %v579
  %v784 = vpack.c.b16 %v584, %v580
  %v785 = vpack.c.b16 %v585, %v581
  %v786 = vpack.c.b16 %v586, %v582
  %v787 = vpack.c.b16 %v591, %v587
  %v788 = vpack.c.b16 %v592, %v588
  %v789 = vpack.c.b16 %v593, %v589
  %v790 = vpack.c.b16 %v594, %v590
  %v791 = vpack.c.b16 %v599, %v595
  %v792 = vpack.c.b16 %v600, %v596
  %v793 = vpack.c.b16 %v601, %v597
  %v794 = vpack.c.b16 %v602, %v598
  %v795 = vpack.c.b16 %v607, %v603
  %v796 = vpack.c.b16 %v608, %v604
  %v797 = vpack.c.b16 %v609, %v605
  %v798 = vpack.c.b16 %v610, %v606
  %v799 = vpack.c.b16 %v615, %v611
  %v800 = vpack.c.b16 %v616, %v612
  %v801 = vpack.c.b16 %v617, %v613
  %v802 = vpack.c.b16 %v618, %v614
  %v803 = vpack.c.b16 %v623, %v619
  %v804 = vpack.c.b16 %v624, %v620
  %v805 = vpack.c.b16 %v625, %v621
  %v806 = vpack.c.b16 %v626, %v622
  %v807 = vpack.c.b16 %v631, %v627
  %v808 = vpack.c.b16 %v632, %v628
  %v809 = vpack.c.b16 %v633, %v629
  %v810 = vpack.c.b16 %v634, %v630
  %v811 = vpack.c.b16 %v639, %v635
  %v812 = vpack.c.b16 %v640, %v636
  %v813 = vpack.c.b16 %v641, %v637
  %v814 = vpack.c.b16 %v642, %v638
  %v815 = vpack.c.b16 %v647, %v643
  %v816 = vpack.c.b16 %v648, %v644
  %v817 = vpack.c.b16 %v649, %v645
  %v818 = vpack.c.b16 %v650, %v646
  %v819 = vpack.c.b16 %v655, %v651
  %v820 = vpack.c.b16 %v656, %v652
  %v821 = vpack.c.b16 %v657, %v653
  %v822 = vpack.c.b16 %v658, %v654
  %v823 = vpack.c.b16 %v663, %v659
  %v824 = vpack.c.b16 %v664, %v660
  %v825 = vpack.c.b16 %v665, %v661
  %v826 = vpack.c.b16 %v666, %v662
  %v827 = vpack.c.b16 %v671, %v667
  %v828 = vpack.c.b16 %v672, %v668
  %v829 = vpack.c.b16 %v673, %v669
  %v830 = vpack.c.b16 %v674, %v670
  %v831 = vpack.c.b16 %v679, %v675
  %v832 = vpack.c.b16 %v680, %v676
  %v833 = vpack.c.b16 %v681, %v677
  %v834 = vpack.c.b16 %v682, %v678
  %v835 = vpack.c.b16 %v687, %v683
  %v836 = vpack.c.b16 %v688, %v684
  %v837 = vpack.c.b16 %v689, %v685
  %v838 = vpack.c.b16 %v690, %v686
  %v839 = vpack.c.b16 %v695, %v691
  %v840 = vpack.c.b16 %v696, %v692
  %v841 = vpack.c.b16 %v697, %v693
  %v842 = vpack.c.b16 %v698, %v694
  %v843 = vpack.c.b16 %v703, %v699
  %v844 = vpack.c.b16 %v704, %v700
  %v845 = vpack.c.b16 %v705, %v701
  %v846 = vpack.c.b16 %v706, %v702
  %v847 = vpack.c.b16 %v711, %v707
  %v848 = vpack.c.b16 %v712, %v708
  %v849 = vpack.c.b16 %v713, %v709
  %v850 = vpack.c.b16 %v714, %v710
  %v851 = vpack.c.b16 %v719, %v715
  %v852 = vpack.c.b16 %v720, %v716
  %v853 = vpack.c.b16 %v721, %v717
  %v854 = vpack.c.b16 %v722, %v718
  %v855 = vpack.c.b16 %v727, %v723
  %v856 = vpack.c.b16 %v728, %v724
  %v857 = vpack.c.b16 %v729, %v725
  %v858 = vpack.c.b16 %v730, %v726
  %v1051 = vunpack.c.l.b16 %v91
  %v1052 = vunpack.c.l.b16 %v92
  %v1053 = vunpack.c.l.b16 %v93
  %v1054 = vunpack.c.l.b16 %v94
  %v1055 = vunpack.c.l.b16 %v95
  %v1056 = vunpack.c.l.b16 %v96
  %v1057 = vunpack.c.l.b16 %v97
  %v1058 = vunpack.c.l.b16 %v98
  %v1059 = vunpack.c.l.b16 %v99
  %v1060 = vunpack.c.l.b16 %v100
  %v1061 = vunpack.c.l.b16 %v101
  %v1062 = vunpack.c.l.b16 %v102
  %v1063 = vunpack.c.l.b16 %v103
  %v1064 = vunpack.c.l.b16 %v104
  %v1065 = vunpack.c.l.b16 %v105
  %v1066 = vunpack.c.l.b16 %v106
  %v1067 = vunpack.c.l.b16 %v107
  %v1068 = vunpack.c.l.b16 %v108
  %v1069 = vunpack.c.l.b16 %v109
  %v1070 = vunpack.c.l.b16 %v110
  %v1071 = vunpack.c.l.b16 %v111
  %v1072 = vunpack.c.l.b16 %v112
  %v1073 = vunpack.c.l.b16 %v113
  %v1074 = vunpack.c.l.b16 %v114
  %v1075 = vunpack.c.l.b16 %v115
  %v1076 = vunpack.c.l.b16 %v116
  %v1077 = vunpack.c.l.b16 %v117
  %v1078 = vunpack.c.l.b16 %v118
  %v1079 = vunpack.c.l.b16 %v119
  %v1080 = vunpack.c.l.b16 %v120
  %v1081 = vunpack.c.l.b16 %v121
  %v1082 = vunpack.c.l.b16 %v122
  %v1083 = vunpack.c.l.b16 %v123
  %v1084 = vunpack.c.l.b16 %v124
  %v1085 = vunpack.c.l.b16 %v125
  %v1086 = vunpack.c.l.b16 %v126
  %v1087 = vunpack.c.l.b16 %v127
  %v1088 = vunpack.c.l.b16 %v128
  %v1089 = vunpack.c.l.b16 %v129
  %v1090 = vunpack.c.l.b16 %v130
  %v1091 = vunpack.c.l.b16 %v131
  %v1092 = vunpack.c.l.b16 %v132
  %v1093 = vunpack.c.l.b16 %v133
  %v1094 = vunpack.c.l.b16 %v134
  %v1095 = vunpack.c.l.b16 %v135
  %v1096 = vunpack.c.l.b16 %v136
  %v1097 = vunpack.c.l.b16 %v137
  %v1098 = vunpack.c.l.b16 %v138
  %v1099 = vunpack.c.l.b16 %v139
  %v1100 = vunpack.c.l.b16 %v140
  %v1101 = vunpack.c.l.b16 %v141
  %v1102 = vunpack.c.l.b16 %v142
  %v1103 = vunpack.c.l.b16 %v143
  %v1104 = vunpack.c.l.b16 %v144
  %v1105 = vunpack.c.l.b16 %v145
  %v1106 = vunpack.c.l.b16 %v146
  %v1107 = vunpack.c.l.b16 %v147
  %v1108 = vunpack.c.l.b16 %v148
  %v1109 = vunpack.c.l.b16 %v149
  %v1110 = vunpack.c.l.b16 %v150
  %v1111 = vunpack.c.l.b16 %v151
  %v1112 = vunpack.c.l.b16 %v152
  %v1113 = vunpack.c.l.b16 %v153
  %v1114 = vunpack.c.l.b16 %v154
  %v1115 = vpack.c.b16 %v1052, %v1051
  %v1116 = vpack.c.b16 %v1054, %v1053
  %v1117 = vpack.c.b16 %v1056, %v1055
  %v1118 = vpack.c.b16 %v1058, %v1057
  %v1119 = vpack.c.b16 %v1060, %v1059
  %v1120 = vpack.c.b16 %v1062, %v1061
  %v1121 = vpack.c.b16 %v1064, %v1063
  %v1122 = vpack.c.b16 %v1066, %v1065
  %v1123 = vpack.c.b16 %v1068, %v1067
  %v1124 = vpack.c.b16 %v1070, %v1069
  %v1125 = vpack.c.b16 %v1072, %v1071
  %v1126 = vpack.c.b16 %v1074, %v1073
  %v1127 = vpack.c.b16 %v1076, %v1075
  %v1128 = vpack.c.b16 %v1078, %v1077
  %v1129 = vpack.c.b16 %v1080, %v1079
  %v1130 = vpack.c.b16 %v1082, %v1081
  %v1131 = vpack.c.b16 %v1084, %v1083
  %v1132 = vpack.c.b16 %v1086, %v1085
  %v1133 = vpack.c.b16 %v1088, %v1087
  %v1134 = vpack.c.b16 %v1090, %v1089
  %v1135 = vpack.c.b16 %v1092, %v1091
  %v1136 = vpack.c.b16 %v1094, %v1093
  %v1137 = vpack.c.b16 %v1096, %v1095
  %v1138 = vpack.c.b16 %v1098, %v1097
  %v1139 = vpack.c.b16 %v1100, %v1099
  %v1140 = vpack.c.b16 %v1102, %v1101
  %v1141 = vpack.c.b16 %v1104, %v1103
  %v1142 = vpack.c.b16 %v1106, %v1105
  %v1143 = vpack.c.b16 %v1108, %v1107
  %v1144 = vpack.c.b16 %v1110, %v1109
  %v1145 = vpack.c.b16 %v1112, %v1111
  %v1146 = vpack.c.b16 %v1114, %v1113
  %1179 = vmatprep.subr.bf16.mxu0 0
  %1180 = vmatpush1.bf16.msra.mxu0 %v1122
  %1181 = vmatprep.subr.bf16.mxu0 0
  %1182 = vmatpush1.bf16.msra.mxu0 %v1121
  %1183 = vmatprep.subr.bf16.mxu0 0
  %1184 = vmatpush1.bf16.msra.mxu0 %v1120
  %1185 = vmatprep.subr.bf16.mxu0 0
  %1186 = vmatpush1.bf16.msra.mxu0 %v1119
  %1187 = vmatprep.subr.bf16.mxu0 0
  %1188 = vmatpush1.bf16.msra.mxu0 %v1118
  %1189 = vmatprep.subr.bf16.mxu0 0
  %1190 = vmatpush1.bf16.msra.mxu0 %v1117
  %1191 = vmatprep.subr.bf16.mxu0 0
  %1192 = vmatpush1.bf16.msra.mxu0 %v1116
  %1193 = vmatprep.subr.bf16.mxu0 0
  %1194 = vmatpush1.bf16.msra.mxu0 %v1115
  %1195 = vmatprep.subr.bf16.mxu0 0
  %1196 = vmatpush2.bf16.msra.mxu0 %v1130
  %1197 = vmatprep.subr.bf16.mxu0 0
  %1198 = vmatpush2.bf16.msra.mxu0 %v1129
  %1199 = vmatprep.subr.bf16.mxu0 0
  %1200 = vmatpush2.bf16.msra.mxu0 %v1128
  %1201 = vmatprep.subr.bf16.mxu0 0
  %1202 = vmatpush2.bf16.msra.mxu0 %v1127
  %1203 = vmatprep.subr.bf16.mxu0 0
  %1204 = vmatpush2.bf16.msra.mxu0 %v1126
  %1205 = vmatprep.subr.bf16.mxu0 0
  %1206 = vmatpush2.bf16.msra.mxu0 %v1125
  %1207 = vmatprep.subr.bf16.mxu0 0
  %1208 = vmatpush2.bf16.msra.mxu0 %v1124
  %1209 = vmatprep.subr.bf16.mxu0 0
  %1210 = vmatpush2.bf16.msra.mxu0 %v1123
  %1211 = vmatprep.mubr.bf16.mxu0 %v732
  %1212 = vmatmul.mubr.bf16.gmra.mxu0 %v731
  %v1213 = vpop.f32.mrf.mxu0
  %v1214 = vadd.f32 0.0, %v1213
  %v1215 = vpop.f32.mrf.mxu0
  %v1216 = vpop.f32.mrf.mxu0
  %v1217 = vadd.f32 0.0, %v1216
  %v1218 = vpop.f32.mrf.mxu0
  %1219 = vmatprep.mubr.bf16.mxu0 %v736
  %1220 = vmatmul.mubr.bf16.gmra.mxu0 %v735
  %v1221 = vpop.f32.mrf.mxu0
  %v1222 = vadd.f32 0.0, %v1221
  %v1223 = vpop.f32.mrf.mxu0
  %v1224 = vpop.f32.mrf.mxu0
  %v1225 = vadd.f32 0.0, %v1224
  %v1226 = vpop.f32.mrf.mxu0
  %1227 = vmatprep.mubr.bf16.mxu0 %v740
  %1228 = vmatmul.mubr.bf16.gmra.mxu0 %v739
  %v1229 = vpop.f32.mrf.mxu0
  %v1230 = vadd.f32 0.0, %v1229
  %v1231 = vpop.f32.mrf.mxu0
  %v1232 = vpop.f32.mrf.mxu0
  %v1233 = vadd.f32 0.0, %v1232
  %v1234 = vpop.f32.mrf.mxu0
  %1235 = vmatprep.mubr.bf16.mxu0 %v744
  %1236 = vmatmul.mubr.bf16.gmra.mxu0 %v743
  %v1237 = vpop.f32.mrf.mxu0
  %v1238 = vadd.f32 0.0, %v1237
  %v1239 = vpop.f32.mrf.mxu0
  %v1240 = vpop.f32.mrf.mxu0
  %v1241 = vadd.f32 0.0, %v1240
  %v1242 = vpop.f32.mrf.mxu0
  %1243 = vmatprep.mubr.bf16.mxu0 %v748
  %1244 = vmatmul.mubr.bf16.gmra.mxu0 %v747
  %v1245 = vpop.f32.mrf.mxu0
  %v1246 = vadd.f32 0.0, %v1245
  %v1247 = vpop.f32.mrf.mxu0
  %v1248 = vpop.f32.mrf.mxu0
  %v1249 = vadd.f32 0.0, %v1248
  %v1250 = vpop.f32.mrf.mxu0
  %1251 = vmatprep.mubr.bf16.mxu0 %v752
  %1252 = vmatmul.mubr.bf16.gmra.mxu0 %v751
  %v1253 = vpop.f32.mrf.mxu0
  %v1254 = vadd.f32 0.0, %v1253
  %v1255 = vpop.f32.mrf.mxu0
  %v1256 = vpop.f32.mrf.mxu0
  %v1257 = vadd.f32 0.0, %v1256
  %v1258 = vpop.f32.mrf.mxu0
  %1259 = vmatprep.mubr.bf16.mxu0 %v756
  %1260 = vmatmul.mubr.bf16.gmra.mxu0 %v755
  %v1261 = vpop.f32.mrf.mxu0
  %v1262 = vadd.f32 0.0, %v1261
  %v1263 = vpop.f32.mrf.mxu0
  %v1264 = vpop.f32.mrf.mxu0
  %v1265 = vadd.f32 0.0, %v1264
  %v1266 = vpop.f32.mrf.mxu0
  %1267 = vmatprep.mubr.bf16.mxu0 %v760
  %1268 = vmatmul.mubr.bf16.gmra.mxu0 %v759
  %v1269 = vpop.f32.mrf.mxu0
  %v1270 = vadd.f32 0.0, %v1269
  %v1271 = vpop.f32.mrf.mxu0
  %v1272 = vpop.f32.mrf.mxu0
  %v1273 = vadd.f32 0.0, %v1272
  %v1274 = vpop.f32.mrf.mxu0
  %1275 = vmatprep.mubr.bf16.mxu0 %v764
  %1276 = vmatmul.mubr.bf16.gmra.mxu0 %v763
  %v1277 = vpop.f32.mrf.mxu0
  %v1278 = vadd.f32 0.0, %v1277
  %v1279 = vpop.f32.mrf.mxu0
  %v1280 = vpop.f32.mrf.mxu0
  %v1281 = vadd.f32 0.0, %v1280
  %v1282 = vpop.f32.mrf.mxu0
  %1283 = vmatprep.mubr.bf16.mxu0 %v768
  %1284 = vmatmul.mubr.bf16.gmra.mxu0 %v767
  %v1285 = vpop.f32.mrf.mxu0
  %v1286 = vadd.f32 0.0, %v1285
  %v1287 = vpop.f32.mrf.mxu0
  %v1288 = vpop.f32.mrf.mxu0
  %v1289 = vadd.f32 0.0, %v1288
  %v1290 = vpop.f32.mrf.mxu0
  %1291 = vmatprep.mubr.bf16.mxu0 %v772
  %1292 = vmatmul.mubr.bf16.gmra.mxu0 %v771
  %v1293 = vpop.f32.mrf.mxu0
  %v1294 = vadd.f32 0.0, %v1293
  %v1295 = vpop.f32.mrf.mxu0
  %v1296 = vpop.f32.mrf.mxu0
  %v1297 = vadd.f32 0.0, %v1296
  %v1298 = vpop.f32.mrf.mxu0
  %1299 = vmatprep.mubr.bf16.mxu0 %v776
  %1300 = vmatmul.mubr.bf16.gmra.mxu0 %v775
  %v1301 = vpop.f32.mrf.mxu0
  %v1302 = vadd.f32 0.0, %v1301
  %v1303 = vpop.f32.mrf.mxu0
  %v1304 = vpop.f32.mrf.mxu0
  %v1305 = vadd.f32 0.0, %v1304
  %v1306 = vpop.f32.mrf.mxu0
  %1307 = vmatprep.mubr.bf16.mxu0 %v780
  %1308 = vmatmul.mubr.bf16.gmra.mxu0 %v779
  %v1309 = vpop.f32.mrf.mxu0
  %v1310 = vadd.f32 0.0, %v1309
  %v1311 = vpop.f32.mrf.mxu0
  %v1312 = vpop.f32.mrf.mxu0
  %v1313 = vadd.f32 0.0, %v1312
  %v1314 = vpop.f32.mrf.mxu0
  %1315 = vmatprep.mubr.bf16.mxu0 %v784
  %1316 = vmatmul.mubr.bf16.gmra.mxu0 %v783
  %v1317 = vpop.f32.mrf.mxu0
  %v1318 = vadd.f32 0.0, %v1317
  %v1319 = vpop.f32.mrf.mxu0
  %v1320 = vpop.f32.mrf.mxu0
  %v1321 = vadd.f32 0.0, %v1320
  %v1322 = vpop.f32.mrf.mxu0
  %1323 = vmatprep.mubr.bf16.mxu0 %v788
  %1324 = vmatmul.mubr.bf16.gmra.mxu0 %v787
  %v1325 = vpop.f32.mrf.mxu0
  %v1326 = vadd.f32 0.0, %v1325
  %v1327 = vpop.f32.mrf.mxu0
  %v1328 = vpop.f32.mrf.mxu0
  %v1329 = vadd.f32 0.0, %v1328
  %v1330 = vpop.f32.mrf.mxu0
  %1331 = vmatprep.mubr.bf16.mxu0 %v792
  %1332 = vmatmul.mubr.bf16.gmra.mxu0 %v791
  %v1333 = vpop.f32.mrf.mxu0
  %v1334 = vadd.f32 0.0, %v1333
  %v1335 = vpop.f32.mrf.mxu0
  %v1336 = vpop.f32.mrf.mxu0
  %v1337 = vadd.f32 0.0, %v1336
  %v1338 = vpop.f32.mrf.mxu0
  %1339 = vmatprep.mubr.bf16.mxu0 %v796
  %1340 = vmatmul.mubr.bf16.gmra.mxu0 %v795
  %v1341 = vpop.f32.mrf.mxu0
  %v1342 = vadd.f32 0.0, %v1341
  %v1343 = vpop.f32.mrf.mxu0
  %v1344 = vpop.f32.mrf.mxu0
  %v1345 = vadd.f32 0.0, %v1344
  %v1346 = vpop.f32.mrf.mxu0
  %1347 = vmatprep.mubr.bf16.mxu0 %v800
  %1348 = vmatmul.mubr.bf16.gmra.mxu0 %v799
  %v1349 = vpop.f32.mrf.mxu0
  %v1350 = vadd.f32 0.0, %v1349
  %v1351 = vpop.f32.mrf.mxu0
  %v1352 = vpop.f32.mrf.mxu0
  %v1353 = vadd.f32 0.0, %v1352
  %v1354 = vpop.f32.mrf.mxu0
  %1355 = vmatprep.mubr.bf16.mxu0 %v804
  %1356 = vmatmul.mubr.bf16.gmra.mxu0 %v803
  %v1357 = vpop.f32.mrf.mxu0
  %v1358 = vadd.f32 0.0, %v1357
  %v1359 = vpop.f32.mrf.mxu0
  %v1360 = vpop.f32.mrf.mxu0
  %v1361 = vadd.f32 0.0, %v1360
  %v1362 = vpop.f32.mrf.mxu0
  %1363 = vmatprep.mubr.bf16.mxu0 %v808
  %1364 = vmatmul.mubr.bf16.gmra.mxu0 %v807
  %v1365 = vpop.f32.mrf.mxu0
  %v1366 = vadd.f32 0.0, %v1365
  %v1367 = vpop.f32.mrf.mxu0
  %v1368 = vpop.f32.mrf.mxu0
  %v1369 = vadd.f32 0.0, %v1368
  %v1370 = vpop.f32.mrf.mxu0
  %1371 = vmatprep.mubr.bf16.mxu0 %v812
  %1372 = vmatmul.mubr.bf16.gmra.mxu0 %v811
  %v1373 = vpop.f32.mrf.mxu0
  %v1374 = vadd.f32 0.0, %v1373
  %v1375 = vpop.f32.mrf.mxu0
  %v1376 = vpop.f32.mrf.mxu0
  %v1377 = vadd.f32 0.0, %v1376
  %v1378 = vpop.f32.mrf.mxu0
  %1379 = vmatprep.mubr.bf16.mxu0 %v816
  %1380 = vmatmul.mubr.bf16.gmra.mxu0 %v815
  %v1381 = vpop.f32.mrf.mxu0
  %v1382 = vadd.f32 0.0, %v1381
  %v1383 = vpop.f32.mrf.mxu0
  %v1384 = vpop.f32.mrf.mxu0
  %v1385 = vadd.f32 0.0, %v1384
  %v1386 = vpop.f32.mrf.mxu0
  %1387 = vmatprep.mubr.bf16.mxu0 %v820
  %1388 = vmatmul.mubr.bf16.gmra.mxu0 %v819
  %v1389 = vpop.f32.mrf.mxu0
  %v1390 = vadd.f32 0.0, %v1389
  %v1391 = vpop.f32.mrf.mxu0
  %v1392 = vpop.f32.mrf.mxu0
  %v1393 = vadd.f32 0.0, %v1392
  %v1394 = vpop.f32.mrf.mxu0
  %1395 = vmatprep.mubr.bf16.mxu0 %v824
  %1396 = vmatmul.mubr.bf16.gmra.mxu0 %v823
  %v1397 = vpop.f32.mrf.mxu0
  %v1398 = vadd.f32 0.0, %v1397
  %v1399 = vpop.f32.mrf.mxu0
  %v1400 = vpop.f32.mrf.mxu0
  %v1401 = vadd.f32 0.0, %v1400
  %v1402 = vpop.f32.mrf.mxu0
  %1403 = vmatprep.mubr.bf16.mxu0 %v828
  %1404 = vmatmul.mubr.bf16.gmra.mxu0 %v827
  %v1405 = vpop.f32.mrf.mxu0
  %v1406 = vadd.f32 0.0, %v1405
  %v1407 = vpop.f32.mrf.mxu0
  %v1408 = vpop.f32.mrf.mxu0
  %v1409 = vadd.f32 0.0, %v1408
  %v1410 = vpop.f32.mrf.mxu0
  %1411 = vmatprep.mubr.bf16.mxu0 %v832
  %1412 = vmatmul.mubr.bf16.gmra.mxu0 %v831
  %v1413 = vpop.f32.mrf.mxu0
  %v1414 = vadd.f32 0.0, %v1413
  %v1415 = vpop.f32.mrf.mxu0
  %v1416 = vpop.f32.mrf.mxu0
  %v1417 = vadd.f32 0.0, %v1416
  %v1418 = vpop.f32.mrf.mxu0
  %1419 = vmatprep.mubr.bf16.mxu0 %v836
  %1420 = vmatmul.mubr.bf16.gmra.mxu0 %v835
  %v1421 = vpop.f32.mrf.mxu0
  %v1422 = vadd.f32 0.0, %v1421
  %v1423 = vpop.f32.mrf.mxu0
  %v1424 = vpop.f32.mrf.mxu0
  %v1425 = vadd.f32 0.0, %v1424
  %v1426 = vpop.f32.mrf.mxu0
  %1427 = vmatprep.mubr.bf16.mxu0 %v840
  %1428 = vmatmul.mubr.bf16.gmra.mxu0 %v839
  %v1429 = vpop.f32.mrf.mxu0
  %v1430 = vadd.f32 0.0, %v1429
  %v1431 = vpop.f32.mrf.mxu0
  %v1432 = vpop.f32.mrf.mxu0
  %v1433 = vadd.f32 0.0, %v1432
  %v1434 = vpop.f32.mrf.mxu0
  %1435 = vmatprep.mubr.bf16.mxu0 %v844
  %1436 = vmatmul.mubr.bf16.gmra.mxu0 %v843
  %v1437 = vpop.f32.mrf.mxu0
  %v1438 = vadd.f32 0.0, %v1437
  %v1439 = vpop.f32.mrf.mxu0
  %v1440 = vpop.f32.mrf.mxu0
  %v1441 = vadd.f32 0.0, %v1440
  %v1442 = vpop.f32.mrf.mxu0
  %1443 = vmatprep.mubr.bf16.mxu0 %v848
  %1444 = vmatmul.mubr.bf16.gmra.mxu0 %v847
  %v1445 = vpop.f32.mrf.mxu0
  %v1446 = vadd.f32 0.0, %v1445
  %v1447 = vpop.f32.mrf.mxu0
  %v1448 = vpop.f32.mrf.mxu0
  %v1449 = vadd.f32 0.0, %v1448
  %v1450 = vpop.f32.mrf.mxu0
  %1451 = vmatprep.mubr.bf16.mxu0 %v852
  %1452 = vmatmul.mubr.bf16.gmra.mxu0 %v851
  %v1453 = vpop.f32.mrf.mxu0
  %v1454 = vadd.f32 0.0, %v1453
  %v1455 = vpop.f32.mrf.mxu0
  %v1456 = vpop.f32.mrf.mxu0
  %v1457 = vadd.f32 0.0, %v1456
  %v1458 = vpop.f32.mrf.mxu0
  %1459 = vmatprep.mubr.bf16.mxu0 %v856
  %1460 = vmatmul.mubr.bf16.gmra.mxu0 %v855
  %v1461 = vpop.f32.mrf.mxu0
  %v1462 = vadd.f32 0.0, %v1461
  %v1463 = vpop.f32.mrf.mxu0
  %v1464 = vpop.f32.mrf.mxu0
  %v1465 = vadd.f32 0.0, %v1464
  %v1466 = vpop.f32.mrf.mxu0
  %1467 = vdwg.mxu0
  %1468 = vmatprep.subr.bf16.mxu0 0
  %1469 = vmatpush1.bf16.msra.mxu0 %v1138
  %1470 = vmatprep.subr.bf16.mxu0 0
  %1471 = vmatpush1.bf16.msra.mxu0 %v1137
  %1472 = vmatprep.subr.bf16.mxu0 0
  %1473 = vmatpush1.bf16.msra.mxu0 %v1136
  %1474 = vmatprep.subr.bf16.mxu0 0
  %1475 = vmatpush1.bf16.msra.mxu0 %v1135
  %1476 = vmatprep.subr.bf16.mxu0 0
  %1477 = vmatpush1.bf16.msra.mxu0 %v1134
  %1478 = vmatprep.subr.bf16.mxu0 0
  %1479 = vmatpush1.bf16.msra.mxu0 %v1133
  %1480 = vmatprep.subr.bf16.mxu0 0
  %1481 = vmatpush1.bf16.msra.mxu0 %v1132
  %1482 = vmatprep.subr.bf16.mxu0 0
  %1483 = vmatpush1.bf16.msra.mxu0 %v1131
  %1484 = vmatprep.subr.bf16.mxu0 0
  %1485 = vmatpush2.bf16.msra.mxu0 %v1146
  %1486 = vmatprep.subr.bf16.mxu0 0
  %1487 = vmatpush2.bf16.msra.mxu0 %v1145
  %1488 = vmatprep.subr.bf16.mxu0 0
  %1489 = vmatpush2.bf16.msra.mxu0 %v1144
  %1490 = vmatprep.subr.bf16.mxu0 0
  %1491 = vmatpush2.bf16.msra.mxu0 %v1143
  %1492 = vmatprep.subr.bf16.mxu0 0
  %1493 = vmatpush2.bf16.msra.mxu0 %v1142
  %1494 = vmatprep.subr.bf16.mxu0 0
  %1495 = vmatpush2.bf16.msra.mxu0 %v1141
  %1496 = vmatprep.subr.bf16.mxu0 0
  %1497 = vmatpush2.bf16.msra.mxu0 %v1140
  %1498 = vmatprep.subr.bf16.mxu0 0
  %1499 = vmatpush2.bf16.msra.mxu0 %v1139
  %1500 = vmatprep.mubr.bf16.mxu0 %v734
  %1501 = vmatmul.mubr.bf16.gmra.mxu0 %v733
  %v1502 = vpop.f32.mrf.mxu0
  %v1503 = vadd.f32 %v1214, %v1502
  %v1504 = vpop.f32.mrf.mxu0
  %v1505 = vpop.f32.mrf.mxu0
  %v1506 = vadd.f32 %v1217, %v1505
  %v1507 = vpop.f32.mrf.mxu0
  %1508 = vmatprep.mubr.bf16.mxu0 %v738
  %1509 = vmatmul.mubr.bf16.gmra.mxu0 %v737
  %v1510 = vpop.f32.mrf.mxu0
  %v1511 = vadd.f32 %v1222, %v1510
  %v1512 = vpop.f32.mrf.mxu0
  %v1513 = vpop.f32.mrf.mxu0
  %v1514 = vadd.f32 %v1225, %v1513
  %v1515 = vpop.f32.mrf.mxu0
  %1516 = vmatprep.mubr.bf16.mxu0 %v742
  %1517 = vmatmul.mubr.bf16.gmra.mxu0 %v741
  %v1518 = vpop.f32.mrf.mxu0
  %v1519 = vadd.f32 %v1230, %v1518
  %v1520 = vpop.f32.mrf.mxu0
  %v1521 = vpop.f32.mrf.mxu0
  %v1522 = vadd.f32 %v1233, %v1521
  %v1523 = vpop.f32.mrf.mxu0
  %1524 = vmatprep.mubr.bf16.mxu0 %v746
  %1525 = vmatmul.mubr.bf16.gmra.mxu0 %v745
  %v1526 = vpop.f32.mrf.mxu0
  %v1527 = vadd.f32 %v1238, %v1526
  %v1528 = vpop.f32.mrf.mxu0
  %v1529 = vpop.f32.mrf.mxu0
  %v1530 = vadd.f32 %v1241, %v1529
  %v1531 = vpop.f32.mrf.mxu0
  %1532 = vmatprep.mubr.bf16.mxu0 %v750
  %1533 = vmatmul.mubr.bf16.gmra.mxu0 %v749
  %v1534 = vpop.f32.mrf.mxu0
  %v1535 = vadd.f32 %v1246, %v1534
  %v1536 = vpop.f32.mrf.mxu0
  %v1537 = vpop.f32.mrf.mxu0
  %v1538 = vadd.f32 %v1249, %v1537
  %v1539 = vpop.f32.mrf.mxu0
  %1540 = vmatprep.mubr.bf16.mxu0 %v754
  %1541 = vmatmul.mubr.bf16.gmra.mxu0 %v753
  %v1542 = vpop.f32.mrf.mxu0
  %v1543 = vadd.f32 %v1254, %v1542
  %v1544 = vpop.f32.mrf.mxu0
  %v1545 = vpop.f32.mrf.mxu0
  %v1546 = vadd.f32 %v1257, %v1545
  %v1547 = vpop.f32.mrf.mxu0
  %1548 = vmatprep.mubr.bf16.mxu0 %v758
  %1549 = vmatmul.mubr.bf16.gmra.mxu0 %v757
  %v1550 = vpop.f32.mrf.mxu0
  %v1551 = vadd.f32 %v1262, %v1550
  %v1552 = vpop.f32.mrf.mxu0
  %v1553 = vpop.f32.mrf.mxu0
  %v1554 = vadd.f32 %v1265, %v1553
  %v1555 = vpop.f32.mrf.mxu0
  %1556 = vmatprep.mubr.bf16.mxu0 %v762
  %1557 = vmatmul.mubr.bf16.gmra.mxu0 %v761
  %v1558 = vpop.f32.mrf.mxu0
  %v1559 = vadd.f32 %v1270, %v1558
  %v1560 = vpop.f32.mrf.mxu0
  %v1561 = vpop.f32.mrf.mxu0
  %v1562 = vadd.f32 %v1273, %v1561
  %v1563 = vpop.f32.mrf.mxu0
  %1564 = vmatprep.mubr.bf16.mxu0 %v766
  %1565 = vmatmul.mubr.bf16.gmra.mxu0 %v765
  %v1566 = vpop.f32.mrf.mxu0
  %v1567 = vadd.f32 %v1278, %v1566
  %v1568 = vpop.f32.mrf.mxu0
  %v1569 = vpop.f32.mrf.mxu0
  %v1570 = vadd.f32 %v1281, %v1569
  %v1571 = vpop.f32.mrf.mxu0
  %1572 = vmatprep.mubr.bf16.mxu0 %v770
  %1573 = vmatmul.mubr.bf16.gmra.mxu0 %v769
  %v1574 = vpop.f32.mrf.mxu0
  %v1575 = vadd.f32 %v1286, %v1574
  %v1576 = vpop.f32.mrf.mxu0
  %v1577 = vpop.f32.mrf.mxu0
  %v1578 = vadd.f32 %v1289, %v1577
  %v1579 = vpop.f32.mrf.mxu0
  %1580 = vmatprep.mubr.bf16.mxu0 %v774
  %1581 = vmatmul.mubr.bf16.gmra.mxu0 %v773
  %v1582 = vpop.f32.mrf.mxu0
  %v1583 = vadd.f32 %v1294, %v1582
  %v1584 = vpop.f32.mrf.mxu0
  %v1585 = vpop.f32.mrf.mxu0
  %v1586 = vadd.f32 %v1297, %v1585
  %v1587 = vpop.f32.mrf.mxu0
  %1588 = vmatprep.mubr.bf16.mxu0 %v778
  %1589 = vmatmul.mubr.bf16.gmra.mxu0 %v777
  %v1590 = vpop.f32.mrf.mxu0
  %v1591 = vadd.f32 %v1302, %v1590
  %v1592 = vpop.f32.mrf.mxu0
  %v1593 = vpop.f32.mrf.mxu0
  %v1594 = vadd.f32 %v1305, %v1593
  %v1595 = vpop.f32.mrf.mxu0
  %1596 = vmatprep.mubr.bf16.mxu0 %v782
  %1597 = vmatmul.mubr.bf16.gmra.mxu0 %v781
  %v1598 = vpop.f32.mrf.mxu0
  %v1599 = vadd.f32 %v1310, %v1598
  %v1600 = vpop.f32.mrf.mxu0
  %v1601 = vpop.f32.mrf.mxu0
  %v1602 = vadd.f32 %v1313, %v1601
  %v1603 = vpop.f32.mrf.mxu0
  %1604 = vmatprep.mubr.bf16.mxu0 %v786
  %1605 = vmatmul.mubr.bf16.gmra.mxu0 %v785
  %v1606 = vpop.f32.mrf.mxu0
  %v1607 = vadd.f32 %v1318, %v1606
  %v1608 = vpop.f32.mrf.mxu0
  %v1609 = vpop.f32.mrf.mxu0
  %v1610 = vadd.f32 %v1321, %v1609
  %v1611 = vpop.f32.mrf.mxu0
  %1612 = vmatprep.mubr.bf16.mxu0 %v790
  %1613 = vmatmul.mubr.bf16.gmra.mxu0 %v789
  %v1614 = vpop.f32.mrf.mxu0
  %v1615 = vadd.f32 %v1326, %v1614
  %v1616 = vpop.f32.mrf.mxu0
  %v1617 = vpop.f32.mrf.mxu0
  %v1618 = vadd.f32 %v1329, %v1617
  %v1619 = vpop.f32.mrf.mxu0
  %1620 = vmatprep.mubr.bf16.mxu0 %v794
  %1621 = vmatmul.mubr.bf16.gmra.mxu0 %v793
  %v1622 = vpop.f32.mrf.mxu0
  %v1623 = vadd.f32 %v1334, %v1622
  %v1624 = vpop.f32.mrf.mxu0
  %v1625 = vpop.f32.mrf.mxu0
  %v1626 = vadd.f32 %v1337, %v1625
  %v1627 = vpop.f32.mrf.mxu0
  %1628 = vmatprep.mubr.bf16.mxu0 %v798
  %1629 = vmatmul.mubr.bf16.gmra.mxu0 %v797
  %v1630 = vpop.f32.mrf.mxu0
  %v1631 = vadd.f32 %v1342, %v1630
  %v1632 = vpop.f32.mrf.mxu0
  %v1633 = vpop.f32.mrf.mxu0
  %v1634 = vadd.f32 %v1345, %v1633
  %v1635 = vpop.f32.mrf.mxu0
  %1636 = vmatprep.mubr.bf16.mxu0 %v802
  %1637 = vmatmul.mubr.bf16.gmra.mxu0 %v801
  %v1638 = vpop.f32.mrf.mxu0
  %v1639 = vadd.f32 %v1350, %v1638
  %v1640 = vpop.f32.mrf.mxu0
  %v1641 = vpop.f32.mrf.mxu0
  %v1642 = vadd.f32 %v1353, %v1641
  %v1643 = vpop.f32.mrf.mxu0
  %1644 = vmatprep.mubr.bf16.mxu0 %v806
  %1645 = vmatmul.mubr.bf16.gmra.mxu0 %v805
  %v1646 = vpop.f32.mrf.mxu0
  %v1647 = vadd.f32 %v1358, %v1646
  %v1648 = vpop.f32.mrf.mxu0
  %v1649 = vpop.f32.mrf.mxu0
  %v1650 = vadd.f32 %v1361, %v1649
  %v1651 = vpop.f32.mrf.mxu0
  %1652 = vmatprep.mubr.bf16.mxu0 %v810
  %1653 = vmatmul.mubr.bf16.gmra.mxu0 %v809
  %v1654 = vpop.f32.mrf.mxu0
  %v1655 = vadd.f32 %v1366, %v1654
  %v1656 = vpop.f32.mrf.mxu0
  %v1657 = vpop.f32.mrf.mxu0
  %v1658 = vadd.f32 %v1369, %v1657
  %v1659 = vpop.f32.mrf.mxu0
  %1660 = vmatprep.mubr.bf16.mxu0 %v814
  %1661 = vmatmul.mubr.bf16.gmra.mxu0 %v813
  %v1662 = vpop.f32.mrf.mxu0
  %v1663 = vadd.f32 %v1374, %v1662
  %v1664 = vpop.f32.mrf.mxu0
  %v1665 = vpop.f32.mrf.mxu0
  %v1666 = vadd.f32 %v1377, %v1665
  %v1667 = vpop.f32.mrf.mxu0
  %1668 = vmatprep.mubr.bf16.mxu0 %v818
  %1669 = vmatmul.mubr.bf16.gmra.mxu0 %v817
  %v1670 = vpop.f32.mrf.mxu0
  %v1671 = vadd.f32 %v1382, %v1670
  %v1672 = vpop.f32.mrf.mxu0
  %v1673 = vpop.f32.mrf.mxu0
  %v1674 = vadd.f32 %v1385, %v1673
  %v1675 = vpop.f32.mrf.mxu0
  %1676 = vmatprep.mubr.bf16.mxu0 %v822
  %1677 = vmatmul.mubr.bf16.gmra.mxu0 %v821
  %v1678 = vpop.f32.mrf.mxu0
  %v1679 = vadd.f32 %v1390, %v1678
  %v1680 = vpop.f32.mrf.mxu0
  %v1681 = vpop.f32.mrf.mxu0
  %v1682 = vadd.f32 %v1393, %v1681
  %v1683 = vpop.f32.mrf.mxu0
  %1684 = vmatprep.mubr.bf16.mxu0 %v826
  %1685 = vmatmul.mubr.bf16.gmra.mxu0 %v825
  %v1686 = vpop.f32.mrf.mxu0
  %v1687 = vadd.f32 %v1398, %v1686
  %v1688 = vpop.f32.mrf.mxu0
  %v1689 = vpop.f32.mrf.mxu0
  %v1690 = vadd.f32 %v1401, %v1689
  %v1691 = vpop.f32.mrf.mxu0
  %1692 = vmatprep.mubr.bf16.mxu0 %v830
  %1693 = vmatmul.mubr.bf16.gmra.mxu0 %v829
  %v1694 = vpop.f32.mrf.mxu0
  %v1695 = vadd.f32 %v1406, %v1694
  %v1696 = vpop.f32.mrf.mxu0
  %v1697 = vpop.f32.mrf.mxu0
  %v1698 = vadd.f32 %v1409, %v1697
  %v1699 = vpop.f32.mrf.mxu0
  %1700 = vmatprep.mubr.bf16.mxu0 %v834
  %1701 = vmatmul.mubr.bf16.gmra.mxu0 %v833
  %v1702 = vpop.f32.mrf.mxu0
  %v1703 = vadd.f32 %v1414, %v1702
  %v1704 = vpop.f32.mrf.mxu0
  %v1705 = vpop.f32.mrf.mxu0
  %v1706 = vadd.f32 %v1417, %v1705
  %v1707 = vpop.f32.mrf.mxu0
  %1708 = vmatprep.mubr.bf16.mxu0 %v838
  %1709 = vmatmul.mubr.bf16.gmra.mxu0 %v837
  %v1710 = vpop.f32.mrf.mxu0
  %v1711 = vadd.f32 %v1422, %v1710
  %v1712 = vpop.f32.mrf.mxu0
  %v1713 = vpop.f32.mrf.mxu0
  %v1714 = vadd.f32 %v1425, %v1713
  %v1715 = vpop.f32.mrf.mxu0
  %1716 = vmatprep.mubr.bf16.mxu0 %v842
  %1717 = vmatmul.mubr.bf16.gmra.mxu0 %v841
  %v1718 = vpop.f32.mrf.mxu0
  %v1719 = vadd.f32 %v1430, %v1718
  %v1720 = vpop.f32.mrf.mxu0
  %v1721 = vpop.f32.mrf.mxu0
  %v1722 = vadd.f32 %v1433, %v1721
  %v1723 = vpop.f32.mrf.mxu0
  %1724 = vmatprep.mubr.bf16.mxu0 %v846
  %1725 = vmatmul.mubr.bf16.gmra.mxu0 %v845
  %v1726 = vpop.f32.mrf.mxu0
  %v1727 = vadd.f32 %v1438, %v1726
  %v1728 = vpop.f32.mrf.mxu0
  %v1729 = vpop.f32.mrf.mxu0
  %v1730 = vadd.f32 %v1441, %v1729
  %v1731 = vpop.f32.mrf.mxu0
  %1732 = vmatprep.mubr.bf16.mxu0 %v850
  %1733 = vmatmul.mubr.bf16.gmra.mxu0 %v849
  %v1734 = vpop.f32.mrf.mxu0
  %v1735 = vadd.f32 %v1446, %v1734
  %v1736 = vpop.f32.mrf.mxu0
  %v1737 = vpop.f32.mrf.mxu0
  %v1738 = vadd.f32 %v1449, %v1737
  %v1739 = vpop.f32.mrf.mxu0
  %1740 = vmatprep.mubr.bf16.mxu0 %v854
  %1741 = vmatmul.mubr.bf16.gmra.mxu0 %v853
  %v1742 = vpop.f32.mrf.mxu0
  %v1743 = vadd.f32 %v1454, %v1742
  %v1744 = vpop.f32.mrf.mxu0
  %v1745 = vpop.f32.mrf.mxu0
  %v1746 = vadd.f32 %v1457, %v1745
  %v1747 = vpop.f32.mrf.mxu0
  %1748 = vmatprep.mubr.bf16.mxu0 %v858
  %1749 = vmatmul.mubr.bf16.gmra.mxu0 %v857
  %v1750 = vpop.f32.mrf.mxu0
  %v1751 = vadd.f32 %v1462, %v1750
  %v1752 = vpop.f32.mrf.mxu0
  %v1753 = vpop.f32.mrf.mxu0
  %v1754 = vadd.f32 %v1465, %v1753
  %v1755 = vpop.f32.mrf.mxu0
  %1756 = vdwg.mxu0
  %v1757 = vadd.f32 %v155, %v1503
  %v1758 = vadd.f32 %v156, %v1506
  %v1759 = vadd.f32 %v157, %v1511
  %v1760 = vadd.f32 %v158, %v1514
  %v1761 = vadd.f32 %v159, %v1519
  %v1762 = vadd.f32 %v160, %v1522
  %v1763 = vadd.f32 %v161, %v1527
  %v1764 = vadd.f32 %v162, %v1530
  %v1765 = vadd.f32 %v163, %v1535
  %v1766 = vadd.f32 %v164, %v1538
  %v1767 = vadd.f32 %v165, %v1543
  %v1768 = vadd.f32 %v166, %v1546
  %v1769 = vadd.f32 %v167, %v1551
  %v1770 = vadd.f32 %v168, %v1554
  %v1771 = vadd.f32 %v169, %v1559
  %v1772 = vadd.f32 %v170, %v1562
  %v1773 = vadd.f32 %v171, %v1567
  %v1774 = vadd.f32 %v172, %v1570
  %v1775 = vadd.f32 %v173, %v1575
  %v1776 = vadd.f32 %v174, %v1578
  %v1777 = vadd.f32 %v175, %v1583
  %v1778 = vadd.f32 %v176, %v1586
  %v1779 = vadd.f32 %v177, %v1591
  %v1780 = vadd.f32 %v178, %v1594
  %v1781 = vadd.f32 %v179, %v1599
  %v1782 = vadd.f32 %v180, %v1602
  %v1783 = vadd.f32 %v181, %v1607
  %v1784 = vadd.f32 %v182, %v1610
  %v1785 = vadd.f32 %v183, %v1615
  %v1786 = vadd.f32 %v184, %v1618
  %v1787 = vadd.f32 %v185, %v1623
  %v1788 = vadd.f32 %v186, %v1626
  %v1789 = vadd.f32 %v187, %v1631
  %v1790 = vadd.f32 %v188, %v1634
  %v1791 = vadd.f32 %v189, %v1639
  %v1792 = vadd.f32 %v190, %v1642
  %v1793 = vadd.f32 %v191, %v1647
  %v1794 = vadd.f32 %v192, %v1650
  %v1795 = vadd.f32 %v193, %v1655
  %v1796 = vadd.f32 %v194, %v1658
  %v1797 = vadd.f32 %v195, %v1663
  %v1798 = vadd.f32 %v196, %v1666
  %v1799 = vadd.f32 %v197, %v1671
  %v1800 = vadd.f32 %v198, %v1674
  %v1801 = vadd.f32 %v199, %v1679
  %v1802 = vadd.f32 %v200, %v1682
  %v1803 = vadd.f32 %v201, %v1687
  %v1804 = vadd.f32 %v202, %v1690
  %v1805 = vadd.f32 %v203, %v1695
  %v1806 = vadd.f32 %v204, %v1698
  %v1807 = vadd.f32 %v205, %v1703
  %v1808 = vadd.f32 %v206, %v1706
  %v1809 = vadd.f32 %v207, %v1711
  %v1810 = vadd.f32 %v208, %v1714
  %v1811 = vadd.f32 %v209, %v1719
  %v1812 = vadd.f32 %v210, %v1722
  %v1813 = vadd.f32 %v211, %v1727
  %v1814 = vadd.f32 %v212, %v1730
  %v1815 = vadd.f32 %v213, %v1735
  %v1816 = vadd.f32 %v214, %v1738
  %v1817 = vadd.f32 %v215, %v1743
  %v1818 = vadd.f32 %v216, %v1746
  %v1819 = vadd.f32 %v217, %v1751
  %v1820 = vadd.f32 %v218, %v1754
  %1821 = vst [vmem:[#allocation2] sm:$0xff] %v1757
  %1822 = vst [vmem:[#allocation2 + $0x8] sm:$0xff] %v1758
  %1823 = vst [vmem:[#allocation2 + $0x10] sm:$0xff] %v1759
  %1824 = vst [vmem:[#allocation2 + $0x18] sm:$0xff] %v1760
  %1825 = vst [vmem:[#allocation2 + $0x20] sm:$0xff] %v1761
  %1826 = vst [vmem:[#allocation2 + $0x28] sm:$0xff] %v1762
  %1827 = vst [vmem:[#allocation2 + $0x30] sm:$0xff] %v1763
  %1828 = vst [vmem:[#allocation2 + $0x38] sm:$0xff] %v1764
  %1829 = vst [vmem:[#allocation2 + $0x40] sm:$0xff] %v1765
  %1830 = vst [vmem:[#allocation2 + $0x48] sm:$0xff] %v1766
  %1831 = vst [vmem:[#allocation2 + $0x50] sm:$0xff] %v1767
  %1832 = vst [vmem:[#allocation2 + $0x58] sm:$0xff] %v1768
  %1833 = vst [vmem:[#allocation2 + $0x60] sm:$0xff] %v1769
  %1834 = vst [vmem:[#allocation2 + $0x68] sm:$0xff] %v1770
  %1835 = vst [vmem:[#allocation2 + $0x70] sm:$0xff] %v1771
  %1836 = vst [vmem:[#allocation2 + $0x78] sm:$0xff] %v1772
  %1837 = vst [vmem:[#allocation2 + $0x80] sm:$0xff] %v1773
  %1838 = vst [vmem:[#allocation2 + $0x88] sm:$0xff] %v1774
  %1839 = vst [vmem:[#allocation2 + $0x90] sm:$0xff] %v1775
  %1840 = vst [vmem:[#allocation2 + $0x98] sm:$0xff] %v1776
  %1841 = vst [vmem:[#allocation2 + $0xa0] sm:$0xff] %v1777
  %1842 = vst [vmem:[#allocation2 + $0xa8] sm:$0xff] %v1778
  %1843 = vst [vmem:[#allocation2 + $0xb0] sm:$0xff] %v1779
  %1844 = vst [vmem:[#allocation2 + $0xb8] sm:$0xff] %v1780
  %1845 = vst [vmem:[#allocation2 + $0xc0] sm:$0xff] %v1781
  %1846 = vst [vmem:[#allocation2 + $0xc8] sm:$0xff] %v1782
  %1847 = vst [vmem:[#allocation2 + $0xd0] sm:$0xff] %v1783
  %1848 = vst [vmem:[#allocation2 + $0xd8] sm:$0xff] %v1784
  %1849 = vst [vmem:[#allocation2 + $0xe0] sm:$0xff] %v1785
  %1850 = vst [vmem:[#allocation2 + $0xe8] sm:$0xff] %v1786
  %1851 = vst [vmem:[#allocation2 + $0xf0] sm:$0xff] %v1787
  %1852 = vst [vmem:[#allocation2 + $0xf8] sm:$0xff] %v1788
  %1853 = vst [vmem:[#allocation2 + $0x100] sm:$0xff] %v1789
  %1854 = vst [vmem:[#allocation2 + $0x108] sm:$0xff] %v1790
  %1855 = vst [vmem:[#allocation2 + $0x110] sm:$0xff] %v1791
  %1856 = vst [vmem:[#allocation2 + $0x118] sm:$0xff] %v1792
  %1857 = vst [vmem:[#allocation2 + $0x120] sm:$0xff] %v1793
  %1858 = vst [vmem:[#allocation2 + $0x128] sm:$0xff] %v1794
  %1859 = vst [vmem:[#allocation2 + $0x130] sm:$0xff] %v1795
  %1860 = vst [vmem:[#allocation2 + $0x138] sm:$0xff] %v1796
  %1861 = vst [vmem:[#allocation2 + $0x140] sm:$0xff] %v1797
  %1862 = vst [vmem:[#allocation2 + $0x148] sm:$0xff] %v1798
  %1863 = vst [vmem:[#allocation2 + $0x150] sm:$0xff] %v1799
  %1864 = vst [vmem:[#allocation2 + $0x158] sm:$0xff] %v1800
  %1865 = vst [vmem:[#allocation2 + $0x160] sm:$0xff] %v1801
  %1866 = vst [vmem:[#allocation2 + $0x168] sm:$0xff] %v1802
  %1867 = vst [vmem:[#allocation2 + $0x170] sm:$0xff] %v1803
  %1868 = vst [vmem:[#allocation2 + $0x178] sm:$0xff] %v1804
  %1869 = vst [vmem:[#allocation2 + $0x180] sm:$0xff] %v1805
  %1870 = vst [vmem:[#allocation2 + $0x188] sm:$0xff] %v1806
  %1871 = vst [vmem:[#allocation2 + $0x190] sm:$0xff] %v1807
  %1872 = vst [vmem:[#allocation2 + $0x198] sm:$0xff] %v1808
  %1873 = vst [vmem:[#allocation2 + $0x1a0] sm:$0xff] %v1809
  %1874 = vst [vmem:[#allocation2 + $0x1a8] sm:$0xff] %v1810
  %1875 = vst [vmem:[#allocation2 + $0x1b0] sm:$0xff] %v1811
  %1876 = vst [vmem:[#allocation2 + $0x1b8] sm:$0xff] %v1812
  %1877 = vst [vmem:[#allocation2 + $0x1c0] sm:$0xff] %v1813
  %1878 = vst [vmem:[#allocation2 + $0x1c8] sm:$0xff] %v1814
  %1879 = vst [vmem:[#allocation2 + $0x1d0] sm:$0xff] %v1815
  %1880 = vst [vmem:[#allocation2 + $0x1d8] sm:$0xff] %v1816
  %1881 = vst [vmem:[#allocation2 + $0x1e0] sm:$0xff] %v1817
  %1882 = vst [vmem:[#allocation2 + $0x1e8] sm:$0xff] %v1818
  %1883 = vst [vmem:[#allocation2 + $0x1f0] sm:$0xff] %v1819
  %1884 = vst [vmem:[#allocation2 + $0x1f8] sm:$0xff] %v1820
  // Predicated region
  $region22: #{gcn_rand_labeled_forward.5} parent=0 // pred_check
    %p1885 = pneg %p18
  $region23: #{gcn_rand_labeled_forward.5} parent=0 // pred_check_branch
    %1887 = sbr.rel (%p1885) target = $region25
  $region24: #{gcn_rand_labeled_forward.5} parent=0 // pred_region
    %v1888 = vld [vmem:[#allocation2] sm:$0xff]
    %v1889 = vld [vmem:[#allocation2 + $0x8] sm:$0xff]
    %v1890 = vld [vmem:[#allocation2 + $0x10] sm:$0xff]
    %v1891 = vld [vmem:[#allocation2 + $0x18] sm:$0xff]
    %v1892 = vld [vmem:[#allocation2 + $0x20] sm:$0xff]
    %v1893 = vld [vmem:[#allocation2 + $0x28] sm:$0xff]
    %v1894 = vld [vmem:[#allocation2 + $0x30] sm:$0xff]
    %v1895 = vld [vmem:[#allocation2 + $0x38] sm:$0xff]
    %v1896 = vld [vmem:[#allocation2 + $0x40] sm:$0xff]
    %v1897 = vld [vmem:[#allocation2 + $0x48] sm:$0xff]
    %v1898 = vld [vmem:[#allocation2 + $0x50] sm:$0xff]
    %v1899 = vld [vmem:[#allocation2 + $0x58] sm:$0xff]
    %v1900 = vld [vmem:[#allocation2 + $0x60] sm:$0xff]
    %v1901 = vld [vmem:[#allocation2 + $0x68] sm:$0xff]
    %v1902 = vld [vmem:[#allocation2 + $0x70] sm:$0xff]
    %v1903 = vld [vmem:[#allocation2 + $0x78] sm:$0xff]
    %v1904 = vld [vmem:[#allocation2 + $0x80] sm:$0xff]
    %v1905 = vld [vmem:[#allocation2 + $0x88] sm:$0xff]
    %v1906 = vld [vmem:[#allocation2 + $0x90] sm:$0xff]
    %v1907 = vld [vmem:[#allocation2 + $0x98] sm:$0xff]
    %v1908 = vld [vmem:[#allocation2 + $0xa0] sm:$0xff]
    %v1909 = vld [vmem:[#allocation2 + $0xa8] sm:$0xff]
    %v1910 = vld [vmem:[#allocation2 + $0xb0] sm:$0xff]
    %v1911 = vld [vmem:[#allocation2 + $0xb8] sm:$0xff]
    %v1912 = vld [vmem:[#allocation2 + $0xc0] sm:$0xff]
    %v1913 = vld [vmem:[#allocation2 + $0xc8] sm:$0xff]
    %v1914 = vld [vmem:[#allocation2 + $0xd0] sm:$0xff]
    %v1915 = vld [vmem:[#allocation2 + $0xd8] sm:$0xff]
    %v1916 = vld [vmem:[#allocation2 + $0xe0] sm:$0xff]
    %v1917 = vld [vmem:[#allocation2 + $0xe8] sm:$0xff]
    %v1918 = vld [vmem:[#allocation2 + $0xf0] sm:$0xff]
    %v1919 = vld [vmem:[#allocation2 + $0xf8] sm:$0xff]
    %v1920 = vld [vmem:[#allocation2 + $0x100] sm:$0xff]
    %v1921 = vld [vmem:[#allocation2 + $0x108] sm:$0xff]
    %v1922 = vld [vmem:[#allocation2 + $0x110] sm:$0xff]
    %v1923 = vld [vmem:[#allocation2 + $0x118] sm:$0xff]
    %v1924 = vld [vmem:[#allocation2 + $0x120] sm:$0xff]
    %v1925 = vld [vmem:[#allocation2 + $0x128] sm:$0xff]
    %v1926 = vld [vmem:[#allocation2 + $0x130] sm:$0xff]
    %v1927 = vld [vmem:[#allocation2 + $0x138] sm:$0xff]
    %v1928 = vld [vmem:[#allocation2 + $0x140] sm:$0xff]
    %v1929 = vld [vmem:[#allocation2 + $0x148] sm:$0xff]
    %v1930 = vld [vmem:[#allocation2 + $0x150] sm:$0xff]
    %v1931 = vld [vmem:[#allocation2 + $0x158] sm:$0xff]
    %v1932 = vld [vmem:[#allocation2 + $0x160] sm:$0xff]
    %v1933 = vld [vmem:[#allocation2 + $0x168] sm:$0xff]
    %v1934 = vld [vmem:[#allocation2 + $0x170] sm:$0xff]
    %v1935 = vld [vmem:[#allocation2 + $0x178] sm:$0xff]
    %v1936 = vld [vmem:[#allocation2 + $0x180] sm:$0xff]
    %v1937 = vld [vmem:[#allocation2 + $0x188] sm:$0xff]
    %v1938 = vld [vmem:[#allocation2 + $0x190] sm:$0xff]
    %v1939 = vld [vmem:[#allocation2 + $0x198] sm:$0xff]
    %v1940 = vld [vmem:[#allocation2 + $0x1a0] sm:$0xff]
    %v1941 = vld [vmem:[#allocation2 + $0x1a8] sm:$0xff]
    %v1942 = vld [vmem:[#allocation2 + $0x1b0] sm:$0xff]
    %v1943 = vld [vmem:[#allocation2 + $0x1b8] sm:$0xff]
    %v1944 = vld [vmem:[#allocation2 + $0x1c0] sm:$0xff]
    %v1945 = vld [vmem:[#allocation2 + $0x1c8] sm:$0xff]
    %v1946 = vld [vmem:[#allocation2 + $0x1d0] sm:$0xff]
    %v1947 = vld [vmem:[#allocation2 + $0x1d8] sm:$0xff]
    %v1948 = vld [vmem:[#allocation2 + $0x1e0] sm:$0xff]
    %v1949 = vld [vmem:[#allocation2 + $0x1e8] sm:$0xff]
    %v1950 = vld [vmem:[#allocation2 + $0x1f0] sm:$0xff]
    %v1951 = vld [vmem:[#allocation2 + $0x1f8] sm:$0xff]
    %v1952 = vld [vmem:[%s2] sm:$0xff]
    %v1953 = vld [vmem:[%s2 + $0x8] sm:$0xff]
    %v1954 = vld [vmem:[%s2 + $0x10] sm:$0xff]
    %v1955 = vld [vmem:[%s2 + $0x18] sm:$0xff]
    %v1956 = vld [vmem:[%s2 + $0x20] sm:$0xff]
    %v1957 = vld [vmem:[%s2 + $0x28] sm:$0xff]
    %v1958 = vld [vmem:[%s2 + $0x30] sm:$0xff]
    %v1959 = vld [vmem:[%s2 + $0x38] sm:$0xff]
    %v1960 = vld [vmem:[%s2 + $0x40] sm:$0xff]
    %v1961 = vld [vmem:[%s2 + $0x48] sm:$0xff]
    %v1962 = vld [vmem:[%s2 + $0x50] sm:$0xff]
    %v1963 = vld [vmem:[%s2 + $0x58] sm:$0xff]
    %v1964 = vld [vmem:[%s2 + $0x60] sm:$0xff]
    %v1965 = vld [vmem:[%s2 + $0x68] sm:$0xff]
    %v1966 = vld [vmem:[%s2 + $0x70] sm:$0xff]
    %v1967 = vld [vmem:[%s2 + $0x78] sm:$0xff]
    %v1968 = vld [vmem:[%s3] sm:$0x1]
    %v1970 = vlaneseq
    %v1971 = vshrl.u32 %v1970, 7
    %v1972 = vsub.s32 0, %v1971
    %v1973 = vrot.slane %v1968, %v1972
    %1975 = vmatprep.subr.mxu0 0.0
    %1976 = vmatpush1.msra.mxu0 %v1967
    %1977 = vmatprep.subr.mxu0 0.0
    %1978 = vmatpush1.msra.mxu0 %v1966
    %1979 = vmatprep.subr.mxu0 0.0
    %1980 = vmatpush1.msra.mxu0 %v1965
    %1981 = vmatprep.subr.mxu0 0.0
    %1982 = vmatpush1.msra.mxu0 %v1964
    %1983 = vmatprep.subr.mxu0 0.0
    %1984 = vmatpush1.msra.mxu0 %v1963
    %1985 = vmatprep.subr.mxu0 0.0
    %1986 = vmatpush1.msra.mxu0 %v1962
    %1987 = vmatprep.subr.mxu0 0.0
    %1988 = vmatpush1.msra.mxu0 %v1961
    %1989 = vmatprep.subr.mxu0 0.0
    %1990 = vmatpush1.msra.mxu0 %v1960
    %1991 = vmatprep.subr.mxu0 0.0
    %1992 = vmatpush1.msra.mxu0 %v1959
    %1993 = vmatprep.subr.mxu0 0.0
    %1994 = vmatpush1.msra.mxu0 %v1958
    %1995 = vmatprep.subr.mxu0 0.0
    %1996 = vmatpush1.msra.mxu0 %v1957
    %1997 = vmatprep.subr.mxu0 0.0
    %1998 = vmatpush1.msra.mxu0 %v1956
    %1999 = vmatprep.subr.mxu0 0.0
    %2000 = vmatpush1.msra.mxu0 %v1955
    %2001 = vmatprep.subr.mxu0 0.0
    %2002 = vmatpush1.msra.mxu0 %v1954
    %2003 = vmatprep.subr.mxu0 0.0
    %2004 = vmatpush1.msra.mxu0 %v1953
    %2005 = vmatprep.subr.mxu0 0.0
    %2006 = vmatpush1.msra.mxu0 %v1952
    %2007 = vmatprep.subr.mxu0 0.0
    %2008 = vmatpush2.msra.mxu0 0.0
    %2009 = vmatprep.subr.mxu0 0.0
    %2010 = vmatpush2.msra.mxu0 0.0
    %2011 = vmatprep.subr.mxu0 0.0
    %2012 = vmatpush2.msra.mxu0 0.0
    %2013 = vmatprep.subr.mxu0 0.0
    %2014 = vmatpush2.msra.mxu0 0.0
    %2015 = vmatprep.subr.mxu0 0.0
    %2016 = vmatpush2.msra.mxu0 0.0
    %2017 = vmatprep.subr.mxu0 0.0
    %2018 = vmatpush2.msra.mxu0 0.0
    %2019 = vmatprep.subr.mxu0 0.0
    %2020 = vmatpush2.msra.mxu0 0.0
    %2021 = vmatprep.subr.mxu0 0.0
    %2022 = vmatpush2.msra.mxu0 0.0
    %2023 = vmatprep.subr.mxu0 0.0
    %2024 = vmatpush2.msra.mxu0 0.0
    %2025 = vmatprep.subr.mxu0 0.0
    %2026 = vmatpush2.msra.mxu0 0.0
    %2027 = vmatprep.subr.mxu0 0.0
    %2028 = vmatpush2.msra.mxu0 0.0
    %2029 = vmatprep.subr.mxu0 0.0
    %2030 = vmatpush2.msra.mxu0 0.0
    %2031 = vmatprep.subr.mxu0 0.0
    %2032 = vmatpush2.msra.mxu0 0.0
    %2033 = vmatprep.subr.mxu0 0.0
    %2034 = vmatpush2.msra.mxu0 0.0
    %2035 = vmatprep.subr.mxu0 0.0
    %2036 = vmatpush2.msra.mxu0 0.0
    %2037 = vmatprep.subr.mxu0 0.0
    %2038 = vmatpush2.msra.mxu0 0.0
    %2039 = vmatprep.mubr.f32.mxu0 0.0
    %2040 = vmatmul.mubr.f32.gmra.mxu0 %v1888
    %v2041 = vpop.f32.mrf.mxu0
    %v2042 = vadd.f32 %v1973, %v2041
    %v2043 = vpop.f32.mrf.mxu0
    %2044 = vmatprep.mubr.f32.mxu0 0.0
    %2045 = vmatmul.mubr.f32.gmra.mxu0 %v1889
    %v2046 = vpop.f32.mrf.mxu0
    %v2047 = vadd.f32 %v1973, %v2046
    %v2048 = vpop.f32.mrf.mxu0
    %2049 = vmatprep.mubr.f32.mxu0 0.0
    %2050 = vmatmul.mubr.f32.gmra.mxu0 %v1890
    %v2051 = vpop.f32.mrf.mxu0
    %v2052 = vadd.f32 %v1973, %v2051
    %v2053 = vpop.f32.mrf.mxu0
    %2054 = vmatprep.mubr.f32.mxu0 0.0
    %2055 = vmatmul.mubr.f32.gmra.mxu0 %v1891
    %v2056 = vpop.f32.mrf.mxu0
    %v2057 = vadd.f32 %v1973, %v2056
    %v2058 = vpop.f32.mrf.mxu0
    %2059 = vmatprep.mubr.f32.mxu0 0.0
    %2060 = vmatmul.mubr.f32.gmra.mxu0 %v1892
    %v2061 = vpop.f32.mrf.mxu0
    %v2062 = vadd.f32 %v1973, %v2061
    %v2063 = vpop.f32.mrf.mxu0
    %2064 = vmatprep.mubr.f32.mxu0 0.0
    %2065 = vmatmul.mubr.f32.gmra.mxu0 %v1893
    %v2066 = vpop.f32.mrf.mxu0
    %v2067 = vadd.f32 %v1973, %v2066
    %v2068 = vpop.f32.mrf.mxu0
    %2069 = vmatprep.mubr.f32.mxu0 0.0
    %2070 = vmatmul.mubr.f32.gmra.mxu0 %v1894
    %v2071 = vpop.f32.mrf.mxu0
    %v2072 = vadd.f32 %v1973, %v2071
    %v2073 = vpop.f32.mrf.mxu0
    %2074 = vmatprep.mubr.f32.mxu0 0.0
    %2075 = vmatmul.mubr.f32.gmra.mxu0 %v1895
    %v2076 = vpop.f32.mrf.mxu0
    %v2077 = vadd.f32 %v1973, %v2076
    %v2078 = vpop.f32.mrf.mxu0
    %2079 = vmatprep.mubr.f32.mxu0 0.0
    %2080 = vmatmul.mubr.f32.gmra.mxu0 %v1896
    %v2081 = vpop.f32.mrf.mxu0
    %v2082 = vadd.f32 %v1973, %v2081
    %v2083 = vpop.f32.mrf.mxu0
    %2084 = vmatprep.mubr.f32.mxu0 0.0
    %2085 = vmatmul.mubr.f32.gmra.mxu0 %v1897
    %v2086 = vpop.f32.mrf.mxu0
    %v2087 = vadd.f32 %v1973, %v2086
    %v2088 = vpop.f32.mrf.mxu0
    %2089 = vmatprep.mubr.f32.mxu0 0.0
    %2090 = vmatmul.mubr.f32.gmra.mxu0 %v1898
    %v2091 = vpop.f32.mrf.mxu0
    %v2092 = vadd.f32 %v1973, %v2091
    %v2093 = vpop.f32.mrf.mxu0
    %2094 = vmatprep.mubr.f32.mxu0 0.0
    %2095 = vmatmul.mubr.f32.gmra.mxu0 %v1899
    %v2096 = vpop.f32.mrf.mxu0
    %v2097 = vadd.f32 %v1973, %v2096
    %v2098 = vpop.f32.mrf.mxu0
    %2099 = vmatprep.mubr.f32.mxu0 0.0
    %2100 = vmatmul.mubr.f32.gmra.mxu0 %v1900
    %v2101 = vpop.f32.mrf.mxu0
    %v2102 = vadd.f32 %v1973, %v2101
    %v2103 = vpop.f32.mrf.mxu0
    %2104 = vmatprep.mubr.f32.mxu0 0.0
    %2105 = vmatmul.mubr.f32.gmra.mxu0 %v1901
    %v2106 = vpop.f32.mrf.mxu0
    %v2107 = vadd.f32 %v1973, %v2106
    %v2108 = vpop.f32.mrf.mxu0
    %2109 = vmatprep.mubr.f32.mxu0 0.0
    %2110 = vmatmul.mubr.f32.gmra.mxu0 %v1902
    %v2111 = vpop.f32.mrf.mxu0
    %v2112 = vadd.f32 %v1973, %v2111
    %v2113 = vpop.f32.mrf.mxu0
    %2114 = vmatprep.mubr.f32.mxu0 0.0
    %2115 = vmatmul.mubr.f32.gmra.mxu0 %v1903
    %v2116 = vpop.f32.mrf.mxu0
    %v2117 = vadd.f32 %v1973, %v2116
    %v2118 = vpop.f32.mrf.mxu0
    %2119 = vmatprep.mubr.f32.mxu0 0.0
    %2120 = vmatmul.mubr.f32.gmra.mxu0 %v1904
    %v2121 = vpop.f32.mrf.mxu0
    %v2122 = vadd.f32 %v1973, %v2121
    %v2123 = vpop.f32.mrf.mxu0
    %2124 = vmatprep.mubr.f32.mxu0 0.0
    %2125 = vmatmul.mubr.f32.gmra.mxu0 %v1905
    %v2126 = vpop.f32.mrf.mxu0
    %v2127 = vadd.f32 %v1973, %v2126
    %v2128 = vpop.f32.mrf.mxu0
    %2129 = vmatprep.mubr.f32.mxu0 0.0
    %2130 = vmatmul.mubr.f32.gmra.mxu0 %v1906
    %v2131 = vpop.f32.mrf.mxu0
    %v2132 = vadd.f32 %v1973, %v2131
    %v2133 = vpop.f32.mrf.mxu0
    %2134 = vmatprep.mubr.f32.mxu0 0.0
    %2135 = vmatmul.mubr.f32.gmra.mxu0 %v1907
    %v2136 = vpop.f32.mrf.mxu0
    %v2137 = vadd.f32 %v1973, %v2136
    %v2138 = vpop.f32.mrf.mxu0
    %2139 = vmatprep.mubr.f32.mxu0 0.0
    %2140 = vmatmul.mubr.f32.gmra.mxu0 %v1908
    %v2141 = vpop.f32.mrf.mxu0
    %v2142 = vadd.f32 %v1973, %v2141
    %v2143 = vpop.f32.mrf.mxu0
    %2144 = vmatprep.mubr.f32.mxu0 0.0
    %2145 = vmatmul.mubr.f32.gmra.mxu0 %v1909
    %v2146 = vpop.f32.mrf.mxu0
    %v2147 = vadd.f32 %v1973, %v2146
    %v2148 = vpop.f32.mrf.mxu0
    %2149 = vmatprep.mubr.f32.mxu0 0.0
    %2150 = vmatmul.mubr.f32.gmra.mxu0 %v1910
    %v2151 = vpop.f32.mrf.mxu0
    %v2152 = vadd.f32 %v1973, %v2151
    %v2153 = vpop.f32.mrf.mxu0
    %2154 = vmatprep.mubr.f32.mxu0 0.0
    %2155 = vmatmul.mubr.f32.gmra.mxu0 %v1911
    %v2156 = vpop.f32.mrf.mxu0
    %v2157 = vadd.f32 %v1973, %v2156
    %v2158 = vpop.f32.mrf.mxu0
    %2159 = vmatprep.mubr.f32.mxu0 0.0
    %2160 = vmatmul.mubr.f32.gmra.mxu0 %v1912
    %v2161 = vpop.f32.mrf.mxu0
    %v2162 = vadd.f32 %v1973, %v2161
    %v2163 = vpop.f32.mrf.mxu0
    %2164 = vmatprep.mubr.f32.mxu0 0.0
    %2165 = vmatmul.mubr.f32.gmra.mxu0 %v1913
    %v2166 = vpop.f32.mrf.mxu0
    %v2167 = vadd.f32 %v1973, %v2166
    %v2168 = vpop.f32.mrf.mxu0
    %2169 = vmatprep.mubr.f32.mxu0 0.0
    %2170 = vmatmul.mubr.f32.gmra.mxu0 %v1914
    %v2171 = vpop.f32.mrf.mxu0
    %v2172 = vadd.f32 %v1973, %v2171
    %v2173 = vpop.f32.mrf.mxu0
    %2174 = vmatprep.mubr.f32.mxu0 0.0
    %2175 = vmatmul.mubr.f32.gmra.mxu0 %v1915
    %v2176 = vpop.f32.mrf.mxu0
    %v2177 = vadd.f32 %v1973, %v2176
    %v2178 = vpop.f32.mrf.mxu0
    %2179 = vmatprep.mubr.f32.mxu0 0.0
    %2180 = vmatmul.mubr.f32.gmra.mxu0 %v1916
    %v2181 = vpop.f32.mrf.mxu0
    %v2182 = vadd.f32 %v1973, %v2181
    %v2183 = vpop.f32.mrf.mxu0
    %2184 = vmatprep.mubr.f32.mxu0 0.0
    %2185 = vmatmul.mubr.f32.gmra.mxu0 %v1917
    %v2186 = vpop.f32.mrf.mxu0
    %v2187 = vadd.f32 %v1973, %v2186
    %v2188 = vpop.f32.mrf.mxu0
    %2189 = vmatprep.mubr.f32.mxu0 0.0
    %2190 = vmatmul.mubr.f32.gmra.mxu0 %v1918
    %v2191 = vpop.f32.mrf.mxu0
    %v2192 = vadd.f32 %v1973, %v2191
    %v2193 = vpop.f32.mrf.mxu0
    %2194 = vmatprep.mubr.f32.mxu0 0.0
    %2195 = vmatmul.mubr.f32.gmra.mxu0 %v1919
    %v2196 = vpop.f32.mrf.mxu0
    %v2197 = vadd.f32 %v1973, %v2196
    %v2198 = vpop.f32.mrf.mxu0
    %2199 = vmatprep.mubr.f32.mxu0 0.0
    %2200 = vmatmul.mubr.f32.gmra.mxu0 %v1920
    %v2201 = vpop.f32.mrf.mxu0
    %v2202 = vadd.f32 %v1973, %v2201
    %v2203 = vpop.f32.mrf.mxu0
    %2204 = vmatprep.mubr.f32.mxu0 0.0
    %2205 = vmatmul.mubr.f32.gmra.mxu0 %v1921
    %v2206 = vpop.f32.mrf.mxu0
    %v2207 = vadd.f32 %v1973, %v2206
    %v2208 = vpop.f32.mrf.mxu0
    %2209 = vmatprep.mubr.f32.mxu0 0.0
    %2210 = vmatmul.mubr.f32.gmra.mxu0 %v1922
    %v2211 = vpop.f32.mrf.mxu0
    %v2212 = vadd.f32 %v1973, %v2211
    %v2213 = vpop.f32.mrf.mxu0
    %2214 = vmatprep.mubr.f32.mxu0 0.0
    %2215 = vmatmul.mubr.f32.gmra.mxu0 %v1923
    %v2216 = vpop.f32.mrf.mxu0
    %v2217 = vadd.f32 %v1973, %v2216
    %v2218 = vpop.f32.mrf.mxu0
    %2219 = vmatprep.mubr.f32.mxu0 0.0
    %2220 = vmatmul.mubr.f32.gmra.mxu0 %v1924
    %v2221 = vpop.f32.mrf.mxu0
    %v2222 = vadd.f32 %v1973, %v2221
    %v2223 = vpop.f32.mrf.mxu0
    %2224 = vmatprep.mubr.f32.mxu0 0.0
    %2225 = vmatmul.mubr.f32.gmra.mxu0 %v1925
    %v2226 = vpop.f32.mrf.mxu0
    %v2227 = vadd.f32 %v1973, %v2226
    %v2228 = vpop.f32.mrf.mxu0
    %2229 = vmatprep.mubr.f32.mxu0 0.0
    %2230 = vmatmul.mubr.f32.gmra.mxu0 %v1926
    %v2231 = vpop.f32.mrf.mxu0
    %v2232 = vadd.f32 %v1973, %v2231
    %v2233 = vpop.f32.mrf.mxu0
    %2234 = vmatprep.mubr.f32.mxu0 0.0
    %2235 = vmatmul.mubr.f32.gmra.mxu0 %v1927
    %v2236 = vpop.f32.mrf.mxu0
    %v2237 = vadd.f32 %v1973, %v2236
    %v2238 = vpop.f32.mrf.mxu0
    %2239 = vmatprep.mubr.f32.mxu0 0.0
    %2240 = vmatmul.mubr.f32.gmra.mxu0 %v1928
    %v2241 = vpop.f32.mrf.mxu0
    %v2242 = vadd.f32 %v1973, %v2241
    %v2243 = vpop.f32.mrf.mxu0
    %2244 = vmatprep.mubr.f32.mxu0 0.0
    %2245 = vmatmul.mubr.f32.gmra.mxu0 %v1929
    %v2246 = vpop.f32.mrf.mxu0
    %v2247 = vadd.f32 %v1973, %v2246
    %v2248 = vpop.f32.mrf.mxu0
    %2249 = vmatprep.mubr.f32.mxu0 0.0
    %2250 = vmatmul.mubr.f32.gmra.mxu0 %v1930
    %v2251 = vpop.f32.mrf.mxu0
    %v2252 = vadd.f32 %v1973, %v2251
    %v2253 = vpop.f32.mrf.mxu0
    %2254 = vmatprep.mubr.f32.mxu0 0.0
    %2255 = vmatmul.mubr.f32.gmra.mxu0 %v1931
    %v2256 = vpop.f32.mrf.mxu0
    %v2257 = vadd.f32 %v1973, %v2256
    %v2258 = vpop.f32.mrf.mxu0
    %2259 = vmatprep.mubr.f32.mxu0 0.0
    %2260 = vmatmul.mubr.f32.gmra.mxu0 %v1932
    %v2261 = vpop.f32.mrf.mxu0
    %v2262 = vadd.f32 %v1973, %v2261
    %v2263 = vpop.f32.mrf.mxu0
    %2264 = vmatprep.mubr.f32.mxu0 0.0
    %2265 = vmatmul.mubr.f32.gmra.mxu0 %v1933
    %v2266 = vpop.f32.mrf.mxu0
    %v2267 = vadd.f32 %v1973, %v2266
    %v2268 = vpop.f32.mrf.mxu0
    %2269 = vmatprep.mubr.f32.mxu0 0.0
    %2270 = vmatmul.mubr.f32.gmra.mxu0 %v1934
    %v2271 = vpop.f32.mrf.mxu0
    %v2272 = vadd.f32 %v1973, %v2271
    %v2273 = vpop.f32.mrf.mxu0
    %2274 = vmatprep.mubr.f32.mxu0 0.0
    %2275 = vmatmul.mubr.f32.gmra.mxu0 %v1935
    %v2276 = vpop.f32.mrf.mxu0
    %v2277 = vadd.f32 %v1973, %v2276
    %v2278 = vpop.f32.mrf.mxu0
    %2279 = vmatprep.mubr.f32.mxu0 0.0
    %2280 = vmatmul.mubr.f32.gmra.mxu0 %v1936
    %v2281 = vpop.f32.mrf.mxu0
    %v2282 = vadd.f32 %v1973, %v2281
    %v2283 = vpop.f32.mrf.mxu0
    %2284 = vmatprep.mubr.f32.mxu0 0.0
    %2285 = vmatmul.mubr.f32.gmra.mxu0 %v1937
    %v2286 = vpop.f32.mrf.mxu0
    %v2287 = vadd.f32 %v1973, %v2286
    %v2288 = vpop.f32.mrf.mxu0
    %2289 = vmatprep.mubr.f32.mxu0 0.0
    %2290 = vmatmul.mubr.f32.gmra.mxu0 %v1938
    %v2291 = vpop.f32.mrf.mxu0
    %v2292 = vadd.f32 %v1973, %v2291
    %v2293 = vpop.f32.mrf.mxu0
    %2294 = vmatprep.mubr.f32.mxu0 0.0
    %2295 = vmatmul.mubr.f32.gmra.mxu0 %v1939
    %v2296 = vpop.f32.mrf.mxu0
    %v2297 = vadd.f32 %v1973, %v2296
    %v2298 = vpop.f32.mrf.mxu0
    %2299 = vmatprep.mubr.f32.mxu0 0.0
    %2300 = vmatmul.mubr.f32.gmra.mxu0 %v1940
    %v2301 = vpop.f32.mrf.mxu0
    %v2302 = vadd.f32 %v1973, %v2301
    %v2303 = vpop.f32.mrf.mxu0
    %2304 = vmatprep.mubr.f32.mxu0 0.0
    %2305 = vmatmul.mubr.f32.gmra.mxu0 %v1941
    %v2306 = vpop.f32.mrf.mxu0
    %v2307 = vadd.f32 %v1973, %v2306
    %v2308 = vpop.f32.mrf.mxu0
    %2309 = vmatprep.mubr.f32.mxu0 0.0
    %2310 = vmatmul.mubr.f32.gmra.mxu0 %v1942
    %v2311 = vpop.f32.mrf.mxu0
    %v2312 = vadd.f32 %v1973, %v2311
    %v2313 = vpop.f32.mrf.mxu0
    %2314 = vmatprep.mubr.f32.mxu0 0.0
    %2315 = vmatmul.mubr.f32.gmra.mxu0 %v1943
    %v2316 = vpop.f32.mrf.mxu0
    %v2317 = vadd.f32 %v1973, %v2316
    %v2318 = vpop.f32.mrf.mxu0
    %2319 = vmatprep.mubr.f32.mxu0 0.0
    %2320 = vmatmul.mubr.f32.gmra.mxu0 %v1944
    %v2321 = vpop.f32.mrf.mxu0
    %v2322 = vadd.f32 %v1973, %v2321
    %v2323 = vpop.f32.mrf.mxu0
    %2324 = vmatprep.mubr.f32.mxu0 0.0
    %2325 = vmatmul.mubr.f32.gmra.mxu0 %v1945
    %v2326 = vpop.f32.mrf.mxu0
    %v2327 = vadd.f32 %v1973, %v2326
    %v2328 = vpop.f32.mrf.mxu0
    %2329 = vmatprep.mubr.f32.mxu0 0.0
    %2330 = vmatmul.mubr.f32.gmra.mxu0 %v1946
    %v2331 = vpop.f32.mrf.mxu0
    %v2332 = vadd.f32 %v1973, %v2331
    %v2333 = vpop.f32.mrf.mxu0
    %2334 = vmatprep.mubr.f32.mxu0 0.0
    %2335 = vmatmul.mubr.f32.gmra.mxu0 %v1947
    %v2336 = vpop.f32.mrf.mxu0
    %v2337 = vadd.f32 %v1973, %v2336
    %v2338 = vpop.f32.mrf.mxu0
    %2339 = vmatprep.mubr.f32.mxu0 0.0
    %2340 = vmatmul.mubr.f32.gmra.mxu0 %v1948
    %v2341 = vpop.f32.mrf.mxu0
    %v2342 = vadd.f32 %v1973, %v2341
    %v2343 = vpop.f32.mrf.mxu0
    %2344 = vmatprep.mubr.f32.mxu0 0.0
    %2345 = vmatmul.mubr.f32.gmra.mxu0 %v1949
    %v2346 = vpop.f32.mrf.mxu0
    %v2347 = vadd.f32 %v1973, %v2346
    %v2348 = vpop.f32.mrf.mxu0
    %2349 = vmatprep.mubr.f32.mxu0 0.0
    %2350 = vmatmul.mubr.f32.gmra.mxu0 %v1950
    %v2351 = vpop.f32.mrf.mxu0
    %v2352 = vadd.f32 %v1973, %v2351
    %v2353 = vpop.f32.mrf.mxu0
    %2354 = vmatprep.mubr.f32.mxu0 0.0
    %2355 = vmatmul.mubr.f32.gmra.mxu0 %v1951
    %v2356 = vpop.f32.mrf.mxu0
    %v2357 = vadd.f32 %v1973, %v2356
    %v2358 = vpop.f32.mrf.mxu0
    %2359 = vdwg.mxu0
    %v2360 = vlaneseq
    %v2361 = vand.u32 %v2360, 127
    %vm2362 = vcmp.lt.s32.totalorder %v2361, 4
    %v2363 = vsel %vm2362, %v2042, -1e+30
    %v2364 = vsel %vm2362, %v2047, -1e+30
    %v2365 = vsel %vm2362, %v2052, -1e+30
    %v2366 = vsel %vm2362, %v2057, -1e+30
    %v2367 = vsel %vm2362, %v2062, -1e+30
    %v2368 = vsel %vm2362, %v2067, -1e+30
    %v2369 = vsel %vm2362, %v2072, -1e+30
    %v2370 = vsel %vm2362, %v2077, -1e+30
    %v2371 = vsel %vm2362, %v2082, -1e+30
    %v2372 = vsel %vm2362, %v2087, -1e+30
    %v2373 = vsel %vm2362, %v2092, -1e+30
    %v2374 = vsel %vm2362, %v2097, -1e+30
    %v2375 = vsel %vm2362, %v2102, -1e+30
    %v2376 = vsel %vm2362, %v2107, -1e+30
    %v2377 = vsel %vm2362, %v2112, -1e+30
    %v2378 = vsel %vm2362, %v2117, -1e+30
    %v2379 = vsel %vm2362, %v2122, -1e+30
    %v2380 = vsel %vm2362, %v2127, -1e+30
    %v2381 = vsel %vm2362, %v2132, -1e+30
    %v2382 = vsel %vm2362, %v2137, -1e+30
    %v2383 = vsel %vm2362, %v2142, -1e+30
    %v2384 = vsel %vm2362, %v2147, -1e+30
    %v2385 = vsel %vm2362, %v2152, -1e+30
    %v2386 = vsel %vm2362, %v2157, -1e+30
    %v2387 = vsel %vm2362, %v2162, -1e+30
    %v2388 = vsel %vm2362, %v2167, -1e+30
    %v2389 = vsel %vm2362, %v2172, -1e+30
    %v2390 = vsel %vm2362, %v2177, -1e+30
    %v2391 = vsel %vm2362, %v2182, -1e+30
    %v2392 = vsel %vm2362, %v2187, -1e+30
    %v2393 = vsel %vm2362, %v2192, -1e+30
    %v2394 = vsel %vm2362, %v2197, -1e+30
    %v2395 = vsel %vm2362, %v2202, -1e+30
    %v2396 = vsel %vm2362, %v2207, -1e+30
    %v2397 = vsel %vm2362, %v2212, -1e+30
    %v2398 = vsel %vm2362, %v2217, -1e+30
    %v2399 = vsel %vm2362, %v2222, -1e+30
    %v2400 = vsel %vm2362, %v2227, -1e+30
    %v2401 = vsel %vm2362, %v2232, -1e+30
    %v2402 = vsel %vm2362, %v2237, -1e+30
    %v2403 = vsel %vm2362, %v2242, -1e+30
    %v2404 = vsel %vm2362, %v2247, -1e+30
    %v2405 = vsel %vm2362, %v2252, -1e+30
    %v2406 = vsel %vm2362, %v2257, -1e+30
    %v2407 = vsel %vm2362, %v2262, -1e+30
    %v2408 = vsel %vm2362, %v2267, -1e+30
    %v2409 = vsel %vm2362, %v2272, -1e+30
    %v2410 = vsel %vm2362, %v2277, -1e+30
    %v2411 = vsel %vm2362, %v2282, -1e+30
    %v2412 = vsel %vm2362, %v2287, -1e+30
    %v2413 = vsel %vm2362, %v2292, -1e+30
    %v2414 = vsel %vm2362, %v2297, -1e+30
    %v2415 = vsel %vm2362, %v2302, -1e+30
    %v2416 = vsel %vm2362, %v2307, -1e+30
    %v2417 = vsel %vm2362, %v2312, -1e+30
    %v2418 = vsel %vm2362, %v2317, -1e+30
    %v2419 = vsel %vm2362, %v2322, -1e+30
    %v2420 = vsel %vm2362, %v2327, -1e+30
    %v2421 = vsel %vm2362, %v2332, -1e+30
    %v2422 = vsel %vm2362, %v2337, -1e+30
    %v2423 = vsel %vm2362, %v2342, -1e+30
    %v2424 = vsel %vm2362, %v2347, -1e+30
    %v2425 = vsel %vm2362, %v2352, -1e+30
    %v2426 = vsel %vm2362, %v2357, -1e+30
    %2427 = vmax.xlane.f32.xlu0 %v2363
    %v2428 = vpop.xlane.xlu0 %2427
    %2429 = vmax.xlane.f32.xlu0 %v2364
    %v2430 = vpop.xlane.xlu0 %2429
    %2431 = vmax.xlane.f32.xlu0 %v2365
    %v2432 = vpop.xlane.xlu0 %2431
    %2433 = vmax.xlane.f32.xlu0 %v2366
    %v2434 = vpop.xlane.xlu0 %2433
    %2435 = vmax.xlane.f32.xlu0 %v2367
    %v2436 = vpop.xlane.xlu0 %2435
    %2437 = vmax.xlane.f32.xlu0 %v2368
    %v2438 = vpop.xlane.xlu0 %2437
    %2439 = vmax.xlane.f32.xlu0 %v2369
    %v2440 = vpop.xlane.xlu0 %2439
    %2441 = vmax.xlane.f32.xlu0 %v2370
    %v2442 = vpop.xlane.xlu0 %2441
    %2443 = vmax.xlane.f32.xlu0 %v2371
    %v2444 = vpop.xlane.xlu0 %2443
    %2445 = vmax.xlane.f32.xlu0 %v2372
    %v2446 = vpop.xlane.xlu0 %2445
    %2447 = vmax.xlane.f32.xlu0 %v2373
    %v2448 = vpop.xlane.xlu0 %2447
    %2449 = vmax.xlane.f32.xlu0 %v2374
    %v2450 = vpop.xlane.xlu0 %2449
    %2451 = vmax.xlane.f32.xlu0 %v2375
    %v2452 = vpop.xlane.xlu0 %2451
    %2453 = vmax.xlane.f32.xlu0 %v2376
    %v2454 = vpop.xlane.xlu0 %2453
    %2455 = vmax.xlane.f32.xlu0 %v2377
    %v2456 = vpop.xlane.xlu0 %2455
    %2457 = vmax.xlane.f32.xlu0 %v2378
    %v2458 = vpop.xlane.xlu0 %2457
    %2459 = vmax.xlane.f32.xlu0 %v2379
    %v2460 = vpop.xlane.xlu0 %2459
    %2461 = vmax.xlane.f32.xlu0 %v2380
    %v2462 = vpop.xlane.xlu0 %2461
    %2463 = vmax.xlane.f32.xlu0 %v2381
    %v2464 = vpop.xlane.xlu0 %2463
    %2465 = vmax.xlane.f32.xlu0 %v2382
    %v2466 = vpop.xlane.xlu0 %2465
    %2467 = vmax.xlane.f32.xlu0 %v2383
    %v2468 = vpop.xlane.xlu0 %2467
    %2469 = vmax.xlane.f32.xlu0 %v2384
    %v2470 = vpop.xlane.xlu0 %2469
    %2471 = vmax.xlane.f32.xlu0 %v2385
    %v2472 = vpop.xlane.xlu0 %2471
    %2473 = vmax.xlane.f32.xlu0 %v2386
    %v2474 = vpop.xlane.xlu0 %2473
    %2475 = vmax.xlane.f32.xlu0 %v2387
    %v2476 = vpop.xlane.xlu0 %2475
    %2477 = vmax.xlane.f32.xlu0 %v2388
    %v2478 = vpop.xlane.xlu0 %2477
    %2479 = vmax.xlane.f32.xlu0 %v2389
    %v2480 = vpop.xlane.xlu0 %2479
    %2481 = vmax.xlane.f32.xlu0 %v2390
    %v2482 = vpop.xlane.xlu0 %2481
    %2483 = vmax.xlane.f32.xlu0 %v2391
    %v2484 = vpop.xlane.xlu0 %2483
    %2485 = vmax.xlane.f32.xlu0 %v2392
    %v2486 = vpop.xlane.xlu0 %2485
    %2487 = vmax.xlane.f32.xlu0 %v2393
    %v2488 = vpop.xlane.xlu0 %2487
    %2489 = vmax.xlane.f32.xlu0 %v2394
    %v2490 = vpop.xlane.xlu0 %2489
    %2491 = vmax.xlane.f32.xlu0 %v2395
    %v2492 = vpop.xlane.xlu0 %2491
    %2493 = vmax.xlane.f32.xlu0 %v2396
    %v2494 = vpop.xlane.xlu0 %2493
    %2495 = vmax.xlane.f32.xlu0 %v2397
    %v2496 = vpop.xlane.xlu0 %2495
    %2497 = vmax.xlane.f32.xlu0 %v2398
    %v2498 = vpop.xlane.xlu0 %2497
    %2499 = vmax.xlane.f32.xlu0 %v2399
    %v2500 = vpop.xlane.xlu0 %2499
    %2501 = vmax.xlane.f32.xlu0 %v2400
    %v2502 = vpop.xlane.xlu0 %2501
    %2503 = vmax.xlane.f32.xlu0 %v2401
    %v2504 = vpop.xlane.xlu0 %2503
    %2505 = vmax.xlane.f32.xlu0 %v2402
    %v2506 = vpop.xlane.xlu0 %2505
    %2507 = vmax.xlane.f32.xlu0 %v2403
    %v2508 = vpop.xlane.xlu0 %2507
    %2509 = vmax.xlane.f32.xlu0 %v2404
    %v2510 = vpop.xlane.xlu0 %2509
    %2511 = vmax.xlane.f32.xlu0 %v2405
    %v2512 = vpop.xlane.xlu0 %2511
    %2513 = vmax.xlane.f32.xlu0 %v2406
    %v2514 = vpop.xlane.xlu0 %2513
    %2515 = vmax.xlane.f32.xlu0 %v2407
    %v2516 = vpop.xlane.xlu0 %2515
    %2517 = vmax.xlane.f32.xlu0 %v2408
    %v2518 = vpop.xlane.xlu0 %2517
    %2519 = vmax.xlane.f32.xlu0 %v2409
    %v2520 = vpop.xlane.xlu0 %2519
    %2521 = vmax.xlane.f32.xlu0 %v2410
    %v2522 = vpop.xlane.xlu0 %2521
    %2523 = vmax.xlane.f32.xlu0 %v2411
    %v2524 = vpop.xlane.xlu0 %2523
    %2525 = vmax.xlane.f32.xlu0 %v2412
    %v2526 = vpop.xlane.xlu0 %2525
    %2527 = vmax.xlane.f32.xlu0 %v2413
    %v2528 = vpop.xlane.xlu0 %2527
    %2529 = vmax.xlane.f32.xlu0 %v2414
    %v2530 = vpop.xlane.xlu0 %2529
    %2531 = vmax.xlane.f32.xlu0 %v2415
    %v2532 = vpop.xlane.xlu0 %2531
    %2533 = vmax.xlane.f32.xlu0 %v2416
    %v2534 = vpop.xlane.xlu0 %2533
    %2535 = vmax.xlane.f32.xlu0 %v2417
    %v2536 = vpop.xlane.xlu0 %2535
    %2537 = vmax.xlane.f32.xlu0 %v2418
    %v2538 = vpop.xlane.xlu0 %2537
    %2539 = vmax.xlane.f32.xlu0 %v2419
    %v2540 = vpop.xlane.xlu0 %2539
    %2541 = vmax.xlane.f32.xlu0 %v2420
    %v2542 = vpop.xlane.xlu0 %2541
    %2543 = vmax.xlane.f32.xlu0 %v2421
    %v2544 = vpop.xlane.xlu0 %2543
    %2545 = vmax.xlane.f32.xlu0 %v2422
    %v2546 = vpop.xlane.xlu0 %2545
    %2547 = vmax.xlane.f32.xlu0 %v2423
    %v2548 = vpop.xlane.xlu0 %2547
    %2549 = vmax.xlane.f32.xlu0 %v2424
    %v2550 = vpop.xlane.xlu0 %2549
    %2551 = vmax.xlane.f32.xlu0 %v2425
    %v2552 = vpop.xlane.xlu0 %2551
    %2553 = vmax.xlane.f32.xlu0 %v2426
    %v2554 = vpop.xlane.xlu0 %2553
    %v2555 = vsub.f32 %v2363, %v2428
    %v2556 = vsub.f32 %v2364, %v2430
    %v2557 = vsub.f32 %v2365, %v2432
    %v2558 = vsub.f32 %v2366, %v2434
    %v2559 = vsub.f32 %v2367, %v2436
    %v2560 = vsub.f32 %v2368, %v2438
    %v2561 = vsub.f32 %v2369, %v2440
    %v2562 = vsub.f32 %v2370, %v2442
    %v2563 = vsub.f32 %v2371, %v2444
    %v2564 = vsub.f32 %v2372, %v2446
    %v2565 = vsub.f32 %v2373, %v2448
    %v2566 = vsub.f32 %v2374, %v2450
    %v2567 = vsub.f32 %v2375, %v2452
    %v2568 = vsub.f32 %v2376, %v2454
    %v2569 = vsub.f32 %v2377, %v2456
    %v2570 = vsub.f32 %v2378, %v2458
    %v2571 = vsub.f32 %v2379, %v2460
    %v2572 = vsub.f32 %v2380, %v2462
    %v2573 = vsub.f32 %v2381, %v2464
    %v2574 = vsub.f32 %v2382, %v2466
    %v2575 = vsub.f32 %v2383, %v2468
    %v2576 = vsub.f32 %v2384, %v2470
    %v2577 = vsub.f32 %v2385, %v2472
    %v2578 = vsub.f32 %v2386, %v2474
    %v2579 = vsub.f32 %v2387, %v2476
    %v2580 = vsub.f32 %v2388, %v2478
    %v2581 = vsub.f32 %v2389, %v2480
    %v2582 = vsub.f32 %v2390, %v2482
    %v2583 = vsub.f32 %v2391, %v2484
    %v2584 = vsub.f32 %v2392, %v2486
    %v2585 = vsub.f32 %v2393, %v2488
    %v2586 = vsub.f32 %v2394, %v2490
    %v2587 = vsub.f32 %v2395, %v2492
    %v2588 = vsub.f32 %v2396, %v2494
    %v2589 = vsub.f32 %v2397, %v2496
    %v2590 = vsub.f32 %v2398, %v2498
    %v2591 = vsub.f32 %v2399, %v2500
    %v2592 = vsub.f32 %v2400, %v2502
    %v2593 = vsub.f32 %v2401, %v2504
    %v2594 = vsub.f32 %v2402, %v2506
    %v2595 = vsub.f32 %v2403, %v2508
    %v2596 = vsub.f32 %v2404, %v2510
    %v2597 = vsub.f32 %v2405, %v2512
    %v2598 = vsub.f32 %v2406, %v2514
    %v2599 = vsub.f32 %v2407, %v2516
    %v2600 = vsub.f32 %v2408, %v2518
    %v2601 = vsub.f32 %v2409, %v2520
    %v2602 = vsub.f32 %v2410, %v2522
    %v2603 = vsub.f32 %v2411, %v2524
    %v2604 = vsub.f32 %v2412, %v2526
    %v2605 = vsub.f32 %v2413, %v2528
    %v2606 = vsub.f32 %v2414, %v2530
    %v2607 = vsub.f32 %v2415, %v2532
    %v2608 = vsub.f32 %v2416, %v2534
    %v2609 = vsub.f32 %v2417, %v2536
    %v2610 = vsub.f32 %v2418, %v2538
    %v2611 = vsub.f32 %v2419, %v2540
    %v2612 = vsub.f32 %v2420, %v2542
    %v2613 = vsub.f32 %v2421, %v2544
    %v2614 = vsub.f32 %v2422, %v2546
    %v2615 = vsub.f32 %v2423, %v2548
    %v2616 = vsub.f32 %v2424, %v2550
    %v2617 = vsub.f32 %v2425, %v2552
    %v2618 = vsub.f32 %v2426, %v2554
    %v2619 = vmul.f32 %v2555, 1.442695
    %v2620 = vpow.pop %v2619
    %v2621 = vmul.f32 %v2556, 1.442695
    %v2622 = vpow.pop %v2621
    %v2623 = vmul.f32 %v2557, 1.442695
    %v2624 = vpow.pop %v2623
    %v2625 = vmul.f32 %v2558, 1.442695
    %v2626 = vpow.pop %v2625
    %v2627 = vmul.f32 %v2559, 1.442695
    %v2628 = vpow.pop %v2627
    %v2629 = vmul.f32 %v2560, 1.442695
    %v2630 = vpow.pop %v2629
    %v2631 = vmul.f32 %v2561, 1.442695
    %v2632 = vpow.pop %v2631
    %v2633 = vmul.f32 %v2562, 1.442695
    %v2634 = vpow.pop %v2633
    %v2635 = vmul.f32 %v2563, 1.442695
    %v2636 = vpow.pop %v2635
    %v2637 = vmul.f32 %v2564, 1.442695
    %v2638 = vpow.pop %v2637
    %v2639 = vmul.f32 %v2565, 1.442695
    %v2640 = vpow.pop %v2639
    %v2641 = vmul.f32 %v2566, 1.442695
    %v2642 = vpow.pop %v2641
    %v2643 = vmul.f32 %v2567, 1.442695
    %v2644 = vpow.pop %v2643
    %v2645 = vmul.f32 %v2568, 1.442695
    %v2646 = vpow.pop %v2645
    %v2647 = vmul.f32 %v2569, 1.442695
    %v2648 = vpow.pop %v2647
    %v2649 = vmul.f32 %v2570, 1.442695
    %v2650 = vpow.pop %v2649
    %v2651 = vmul.f32 %v2571, 1.442695
    %v2652 = vpow.pop %v2651
    %v2653 = vmul.f32 %v2572, 1.442695
    %v2654 = vpow.pop %v2653
    %v2655 = vmul.f32 %v2573, 1.442695
    %v2656 = vpow.pop %v2655
    %v2657 = vmul.f32 %v2574, 1.442695
    %v2658 = vpow.pop %v2657
    %v2659 = vmul.f32 %v2575, 1.442695
    %v2660 = vpow.pop %v2659
    %v2661 = vmul.f32 %v2576, 1.442695
    %v2662 = vpow.pop %v2661
    %v2663 = vmul.f32 %v2577, 1.442695
    %v2664 = vpow.pop %v2663
    %v2665 = vmul.f32 %v2578, 1.442695
    %v2666 = vpow.pop %v2665
    %v2667 = vmul.f32 %v2579, 1.442695
    %v2668 = vpow.pop %v2667
    %v2669 = vmul.f32 %v2580, 1.442695
    %v2670 = vpow.pop %v2669
    %v2671 = vmul.f32 %v2581, 1.442695
    %v2672 = vpow.pop %v2671
    %v2673 = vmul.f32 %v2582, 1.442695
    %v2674 = vpow.pop %v2673
    %v2675 = vmul.f32 %v2583, 1.442695
    %v2676 = vpow.pop %v2675
    %v2677 = vmul.f32 %v2584, 1.442695
    %v2678 = vpow.pop %v2677
    %v2679 = vmul.f32 %v2585, 1.442695
    %v2680 = vpow.pop %v2679
    %v2681 = vmul.f32 %v2586, 1.442695
    %v2682 = vpow.pop %v2681
    %v2683 = vmul.f32 %v2587, 1.442695
    %v2684 = vpow.pop %v2683
    %v2685 = vmul.f32 %v2588, 1.442695
    %v2686 = vpow.pop %v2685
    %v2687 = vmul.f32 %v2589, 1.442695
    %v2688 = vpow.pop %v2687
    %v2689 = vmul.f32 %v2590, 1.442695
    %v2690 = vpow.pop %v2689
    %v2691 = vmul.f32 %v2591, 1.442695
    %v2692 = vpow.pop %v2691
    %v2693 = vmul.f32 %v2592, 1.442695
    %v2694 = vpow.pop %v2693
    %v2695 = vmul.f32 %v2593, 1.442695
    %v2696 = vpow.pop %v2695
    %v2697 = vmul.f32 %v2594, 1.442695
    %v2698 = vpow.pop %v2697
    %v2699 = vmul.f32 %v2595, 1.442695
    %v2700 = vpow.pop %v2699
    %v2701 = vmul.f32 %v2596, 1.442695
    %v2702 = vpow.pop %v2701
    %v2703 = vmul.f32 %v2597, 1.442695
    %v2704 = vpow.pop %v2703
    %v2705 = vmul.f32 %v2598, 1.442695
    %v2706 = vpow.pop %v2705
    %v2707 = vmul.f32 %v2599, 1.442695
    %v2708 = vpow.pop %v2707
    %v2709 = vmul.f32 %v2600, 1.442695
    %v2710 = vpow.pop %v2709
    %v2711 = vmul.f32 %v2601, 1.442695
    %v2712 = vpow.pop %v2711
    %v2713 = vmul.f32 %v2602, 1.442695
    %v2714 = vpow.pop %v2713
    %v2715 = vmul.f32 %v2603, 1.442695
    %v2716 = vpow.pop %v2715
    %v2717 = vmul.f32 %v2604, 1.442695
    %v2718 = vpow.pop %v2717
    %v2719 = vmul.f32 %v2605, 1.442695
    %v2720 = vpow.pop %v2719
    %v2721 = vmul.f32 %v2606, 1.442695
    %v2722 = vpow.pop %v2721
    %v2723 = vmul.f32 %v2607, 1.442695
    %v2724 = vpow.pop %v2723
    %v2725 = vmul.f32 %v2608, 1.442695
    %v2726 = vpow.pop %v2725
    %v2727 = vmul.f32 %v2609, 1.442695
    %v2728 = vpow.pop %v2727
    %v2729 = vmul.f32 %v2610, 1.442695
    %v2730 = vpow.pop %v2729
    %v2731 = vmul.f32 %v2611, 1.442695
    %v2732 = vpow.pop %v2731
    %v2733 = vmul.f32 %v2612, 1.442695
    %v2734 = vpow.pop %v2733
    %v2735 = vmul.f32 %v2613, 1.442695
    %v2736 = vpow.pop %v2735
    %v2737 = vmul.f32 %v2614, 1.442695
    %v2738 = vpow.pop %v2737
    %v2739 = vmul.f32 %v2615, 1.442695
    %v2740 = vpow.pop %v2739
    %v2741 = vmul.f32 %v2616, 1.442695
    %v2742 = vpow.pop %v2741
    %v2743 = vmul.f32 %v2617, 1.442695
    %v2744 = vpow.pop %v2743
    %v2745 = vmul.f32 %v2618, 1.442695
    %v2746 = vpow.pop %v2745
    %2747 = vadd.xlane.f32.xlu0 %v2620
    %v2748 = vpop.xlane.xlu0 %2747
    %2749 = vadd.xlane.f32.xlu0 %v2622
    %v2750 = vpop.xlane.xlu0 %2749
    %2751 = vadd.xlane.f32.xlu0 %v2624
    %v2752 = vpop.xlane.xlu0 %2751
    %2753 = vadd.xlane.f32.xlu0 %v2626
    %v2754 = vpop.xlane.xlu0 %2753
    %2755 = vadd.xlane.f32.xlu0 %v2628
    %v2756 = vpop.xlane.xlu0 %2755
    %2757 = vadd.xlane.f32.xlu0 %v2630
    %v2758 = vpop.xlane.xlu0 %2757
    %2759 = vadd.xlane.f32.xlu0 %v2632
    %v2760 = vpop.xlane.xlu0 %2759
    %2761 = vadd.xlane.f32.xlu0 %v2634
    %v2762 = vpop.xlane.xlu0 %2761
    %2763 = vadd.xlane.f32.xlu0 %v2636
    %v2764 = vpop.xlane.xlu0 %2763
    %2765 = vadd.xlane.f32.xlu0 %v2638
    %v2766 = vpop.xlane.xlu0 %2765
    %2767 = vadd.xlane.f32.xlu0 %v2640
    %v2768 = vpop.xlane.xlu0 %2767
    %2769 = vadd.xlane.f32.xlu0 %v2642
    %v2770 = vpop.xlane.xlu0 %2769
    %2771 = vadd.xlane.f32.xlu0 %v2644
    %v2772 = vpop.xlane.xlu0 %2771
    %2773 = vadd.xlane.f32.xlu0 %v2646
    %v2774 = vpop.xlane.xlu0 %2773
    %2775 = vadd.xlane.f32.xlu0 %v2648
    %v2776 = vpop.xlane.xlu0 %2775
    %2777 = vadd.xlane.f32.xlu0 %v2650
    %v2778 = vpop.xlane.xlu0 %2777
    %2779 = vadd.xlane.f32.xlu0 %v2652
    %v2780 = vpop.xlane.xlu0 %2779
    %2781 = vadd.xlane.f32.xlu0 %v2654
    %v2782 = vpop.xlane.xlu0 %2781
    %2783 = vadd.xlane.f32.xlu0 %v2656
    %v2784 = vpop.xlane.xlu0 %2783
    %2785 = vadd.xlane.f32.xlu0 %v2658
    %v2786 = vpop.xlane.xlu0 %2785
    %2787 = vadd.xlane.f32.xlu0 %v2660
    %v2788 = vpop.xlane.xlu0 %2787
    %2789 = vadd.xlane.f32.xlu0 %v2662
    %v2790 = vpop.xlane.xlu0 %2789
    %2791 = vadd.xlane.f32.xlu0 %v2664
    %v2792 = vpop.xlane.xlu0 %2791
    %2793 = vadd.xlane.f32.xlu0 %v2666
    %v2794 = vpop.xlane.xlu0 %2793
    %2795 = vadd.xlane.f32.xlu0 %v2668
    %v2796 = vpop.xlane.xlu0 %2795
    %2797 = vadd.xlane.f32.xlu0 %v2670
    %v2798 = vpop.xlane.xlu0 %2797
    %2799 = vadd.xlane.f32.xlu0 %v2672
    %v2800 = vpop.xlane.xlu0 %2799
    %2801 = vadd.xlane.f32.xlu0 %v2674
    %v2802 = vpop.xlane.xlu0 %2801
    %2803 = vadd.xlane.f32.xlu0 %v2676
    %v2804 = vpop.xlane.xlu0 %2803
    %2805 = vadd.xlane.f32.xlu0 %v2678
    %v2806 = vpop.xlane.xlu0 %2805
    %2807 = vadd.xlane.f32.xlu0 %v2680
    %v2808 = vpop.xlane.xlu0 %2807
    %2809 = vadd.xlane.f32.xlu0 %v2682
    %v2810 = vpop.xlane.xlu0 %2809
    %2811 = vadd.xlane.f32.xlu0 %v2684
    %v2812 = vpop.xlane.xlu0 %2811
    %2813 = vadd.xlane.f32.xlu0 %v2686
    %v2814 = vpop.xlane.xlu0 %2813
    %2815 = vadd.xlane.f32.xlu0 %v2688
    %v2816 = vpop.xlane.xlu0 %2815
    %2817 = vadd.xlane.f32.xlu0 %v2690
    %v2818 = vpop.xlane.xlu0 %2817
    %2819 = vadd.xlane.f32.xlu0 %v2692
    %v2820 = vpop.xlane.xlu0 %2819
    %2821 = vadd.xlane.f32.xlu0 %v2694
    %v2822 = vpop.xlane.xlu0 %2821
    %2823 = vadd.xlane.f32.xlu0 %v2696
    %v2824 = vpop.xlane.xlu0 %2823
    %2825 = vadd.xlane.f32.xlu0 %v2698
    %v2826 = vpop.xlane.xlu0 %2825
    %2827 = vadd.xlane.f32.xlu0 %v2700
    %v2828 = vpop.xlane.xlu0 %2827
    %2829 = vadd.xlane.f32.xlu0 %v2702
    %v2830 = vpop.xlane.xlu0 %2829
    %2831 = vadd.xlane.f32.xlu0 %v2704
    %v2832 = vpop.xlane.xlu0 %2831
    %2833 = vadd.xlane.f32.xlu0 %v2706
    %v2834 = vpop.xlane.xlu0 %2833
    %2835 = vadd.xlane.f32.xlu0 %v2708
    %v2836 = vpop.xlane.xlu0 %2835
    %2837 = vadd.xlane.f32.xlu0 %v2710
    %v2838 = vpop.xlane.xlu0 %2837
    %2839 = vadd.xlane.f32.xlu0 %v2712
    %v2840 = vpop.xlane.xlu0 %2839
    %2841 = vadd.xlane.f32.xlu0 %v2714
    %v2842 = vpop.xlane.xlu0 %2841
    %2843 = vadd.xlane.f32.xlu0 %v2716
    %v2844 = vpop.xlane.xlu0 %2843
    %2845 = vadd.xlane.f32.xlu0 %v2718
    %v2846 = vpop.xlane.xlu0 %2845
    %2847 = vadd.xlane.f32.xlu0 %v2720
    %v2848 = vpop.xlane.xlu0 %2847
    %2849 = vadd.xlane.f32.xlu0 %v2722
    %v2850 = vpop.xlane.xlu0 %2849
    %2851 = vadd.xlane.f32.xlu0 %v2724
    %v2852 = vpop.xlane.xlu0 %2851
    %2853 = vadd.xlane.f32.xlu0 %v2726
    %v2854 = vpop.xlane.xlu0 %2853
    %2855 = vadd.xlane.f32.xlu0 %v2728
    %v2856 = vpop.xlane.xlu0 %2855
    %2857 = vadd.xlane.f32.xlu0 %v2730
    %v2858 = vpop.xlane.xlu0 %2857
    %2859 = vadd.xlane.f32.xlu0 %v2732
    %v2860 = vpop.xlane.xlu0 %2859
    %2861 = vadd.xlane.f32.xlu0 %v2734
    %v2862 = vpop.xlane.xlu0 %2861
    %2863 = vadd.xlane.f32.xlu0 %v2736
    %v2864 = vpop.xlane.xlu0 %2863
    %2865 = vadd.xlane.f32.xlu0 %v2738
    %v2866 = vpop.xlane.xlu0 %2865
    %2867 = vadd.xlane.f32.xlu0 %v2740
    %v2868 = vpop.xlane.xlu0 %2867
    %2869 = vadd.xlane.f32.xlu0 %v2742
    %v2870 = vpop.xlane.xlu0 %2869
    %2871 = vadd.xlane.f32.xlu0 %v2744
    %v2872 = vpop.xlane.xlu0 %2871
    %2873 = vadd.xlane.f32.xlu0 %v2746
    %v2874 = vpop.xlane.xlu0 %2873
    %v2875 = vlog2.pop %v2748
    %v2876 = vmul.f32 %v2875, 0.6931472
    %v2877 = vlog2.pop %v2750
    %v2878 = vmul.f32 %v2877, 0.6931472
    %v2879 = vlog2.pop %v2752
    %v2880 = vmul.f32 %v2879, 0.6931472
    %v2881 = vlog2.pop %v2754
    %v2882 = vmul.f32 %v2881, 0.6931472
    %v2883 = vlog2.pop %v2756
    %v2884 = vmul.f32 %v2883, 0.6931472
    %v2885 = vlog2.pop %v2758
    %v2886 = vmul.f32 %v2885, 0.6931472
    %v2887 = vlog2.pop %v2760
    %v2888 = vmul.f32 %v2887, 0.6931472
    %v2889 = vlog2.pop %v2762
    %v2890 = vmul.f32 %v2889, 0.6931472
    %v2891 = vlog2.pop %v2764
    %v2892 = vmul.f32 %v2891, 0.6931472
    %v2893 = vlog2.pop %v2766
    %v2894 = vmul.f32 %v2893, 0.6931472
    %v2895 = vlog2.pop %v2768
    %v2896 = vmul.f32 %v2895, 0.6931472
    %v2897 = vlog2.pop %v2770
    %v2898 = vmul.f32 %v2897, 0.6931472
    %v2899 = vlog2.pop %v2772
    %v2900 = vmul.f32 %v2899, 0.6931472
    %v2901 = vlog2.pop %v2774
    %v2902 = vmul.f32 %v2901, 0.6931472
    %v2903 = vlog2.pop %v2776
    %v2904 = vmul.f32 %v2903, 0.6931472
    %v2905 = vlog2.pop %v2778
    %v2906 = vmul.f32 %v2905, 0.6931472
    %v2907 = vlog2.pop %v2780
    %v2908 = vmul.f32 %v2907, 0.6931472
    %v2909 = vlog2.pop %v2782
    %v2910 = vmul.f32 %v2909, 0.6931472
    %v2911 = vlog2.pop %v2784
    %v2912 = vmul.f32 %v2911, 0.6931472
    %v2913 = vlog2.pop %v2786
    %v2914 = vmul.f32 %v2913, 0.6931472
    %v2915 = vlog2.pop %v2788
    %v2916 = vmul.f32 %v2915, 0.6931472
    %v2917 = vlog2.pop %v2790
    %v2918 = vmul.f32 %v2917, 0.6931472
    %v2919 = vlog2.pop %v2792
    %v2920 = vmul.f32 %v2919, 0.6931472
    %v2921 = vlog2.pop %v2794
    %v2922 = vmul.f32 %v2921, 0.6931472
    %v2923 = vlog2.pop %v2796
    %v2924 = vmul.f32 %v2923, 0.6931472
    %v2925 = vlog2.pop %v2798
    %v2926 = vmul.f32 %v2925, 0.6931472
    %v2927 = vlog2.pop %v2800
    %v2928 = vmul.f32 %v2927, 0.6931472
    %v2929 = vlog2.pop %v2802
    %v2930 = vmul.f32 %v2929, 0.6931472
    %v2931 = vlog2.pop %v2804
    %v2932 = vmul.f32 %v2931, 0.6931472
    %v2933 = vlog2.pop %v2806
    %v2934 = vmul.f32 %v2933, 0.6931472
    %v2935 = vlog2.pop %v2808
    %v2936 = vmul.f32 %v2935, 0.6931472
    %v2937 = vlog2.pop %v2810
    %v2938 = vmul.f32 %v2937, 0.6931472
    %v2939 = vlog2.pop %v2812
    %v2940 = vmul.f32 %v2939, 0.6931472
    %v2941 = vlog2.pop %v2814
    %v2942 = vmul.f32 %v2941, 0.6931472
    %v2943 = vlog2.pop %v2816
    %v2944 = vmul.f32 %v2943, 0.6931472
    %v2945 = vlog2.pop %v2818
    %v2946 = vmul.f32 %v2945, 0.6931472
    %v2947 = vlog2.pop %v2820
    %v2948 = vmul.f32 %v2947, 0.6931472
    %v2949 = vlog2.pop %v2822
    %v2950 = vmul.f32 %v2949, 0.6931472
    %v2951 = vlog2.pop %v2824
    %v2952 = vmul.f32 %v2951, 0.6931472
    %v2953 = vlog2.pop %v2826
    %v2954 = vmul.f32 %v2953, 0.6931472
    %v2955 = vlog2.pop %v2828
    %v2956 = vmul.f32 %v2955, 0.6931472
    %v2957 = vlog2.pop %v2830
    %v2958 = vmul.f32 %v2957, 0.6931472
    %v2959 = vlog2.pop %v2832
    %v2960 = vmul.f32 %v2959, 0.6931472
    %v2961 = vlog2.pop %v2834
    %v2962 = vmul.f32 %v2961, 0.6931472
    %v2963 = vlog2.pop %v2836
    %v2964 = vmul.f32 %v2963, 0.6931472
    %v2965 = vlog2.pop %v2838
    %v2966 = vmul.f32 %v2965, 0.6931472
    %v2967 = vlog2.pop %v2840
    %v2968 = vmul.f32 %v2967, 0.6931472
    %v2969 = vlog2.pop %v2842
    %v2970 = vmul.f32 %v2969, 0.6931472
    %v2971 = vlog2.pop %v2844
    %v2972 = vmul.f32 %v2971, 0.6931472
    %v2973 = vlog2.pop %v2846
    %v2974 = vmul.f32 %v2973, 0.6931472
    %v2975 = vlog2.pop %v2848
    %v2976 = vmul.f32 %v2975, 0.6931472
    %v2977 = vlog2.pop %v2850
    %v2978 = vmul.f32 %v2977, 0.6931472
    %v2979 = vlog2.pop %v2852
    %v2980 = vmul.f32 %v2979, 0.6931472
    %v2981 = vlog2.pop %v2854
    %v2982 = vmul.f32 %v2981, 0.6931472
    %v2983 = vlog2.pop %v2856
    %v2984 = vmul.f32 %v2983, 0.6931472
    %v2985 = vlog2.pop %v2858
    %v2986 = vmul.f32 %v2985, 0.6931472
    %v2987 = vlog2.pop %v2860
    %v2988 = vmul.f32 %v2987, 0.6931472
    %v2989 = vlog2.pop %v2862
    %v2990 = vmul.f32 %v2989, 0.6931472
    %v2991 = vlog2.pop %v2864
    %v2992 = vmul.f32 %v2991, 0.6931472
    %v2993 = vlog2.pop %v2866
    %v2994 = vmul.f32 %v2993, 0.6931472
    %v2995 = vlog2.pop %v2868
    %v2996 = vmul.f32 %v2995, 0.6931472
    %v2997 = vlog2.pop %v2870
    %v2998 = vmul.f32 %v2997, 0.6931472
    %v2999 = vlog2.pop %v2872
    %v3000 = vmul.f32 %v2999, 0.6931472
    %v3001 = vlog2.pop %v2874
    %v3002 = vmul.f32 %v3001, 0.6931472
    %v3003 = vsub.f32 %v2555, %v2876
    %v3004 = vsub.f32 %v2556, %v2878
    %v3005 = vsub.f32 %v2557, %v2880
    %v3006 = vsub.f32 %v2558, %v2882
    %v3007 = vsub.f32 %v2559, %v2884
    %v3008 = vsub.f32 %v2560, %v2886
    %v3009 = vsub.f32 %v2561, %v2888
    %v3010 = vsub.f32 %v2562, %v2890
    %v3011 = vsub.f32 %v2563, %v2892
    %v3012 = vsub.f32 %v2564, %v2894
    %v3013 = vsub.f32 %v2565, %v2896
    %v3014 = vsub.f32 %v2566, %v2898
    %v3015 = vsub.f32 %v2567, %v2900
    %v3016 = vsub.f32 %v2568, %v2902
    %v3017 = vsub.f32 %v2569, %v2904
    %v3018 = vsub.f32 %v2570, %v2906
    %v3019 = vsub.f32 %v2571, %v2908
    %v3020 = vsub.f32 %v2572, %v2910
    %v3021 = vsub.f32 %v2573, %v2912
    %v3022 = vsub.f32 %v2574, %v2914
    %v3023 = vsub.f32 %v2575, %v2916
    %v3024 = vsub.f32 %v2576, %v2918
    %v3025 = vsub.f32 %v2577, %v2920
    %v3026 = vsub.f32 %v2578, %v2922
    %v3027 = vsub.f32 %v2579, %v2924
    %v3028 = vsub.f32 %v2580, %v2926
    %v3029 = vsub.f32 %v2581, %v2928
    %v3030 = vsub.f32 %v2582, %v2930
    %v3031 = vsub.f32 %v2583, %v2932
    %v3032 = vsub.f32 %v2584, %v2934
    %v3033 = vsub.f32 %v2585, %v2936
    %v3034 = vsub.f32 %v2586, %v2938
    %v3035 = vsub.f32 %v2587, %v2940
    %v3036 = vsub.f32 %v2588, %v2942
    %v3037 = vsub.f32 %v2589, %v2944
    %v3038 = vsub.f32 %v2590, %v2946
    %v3039 = vsub.f32 %v2591, %v2948
    %v3040 = vsub.f32 %v2592, %v2950
    %v3041 = vsub.f32 %v2593, %v2952
    %v3042 = vsub.f32 %v2594, %v2954
    %v3043 = vsub.f32 %v2595, %v2956
    %v3044 = vsub.f32 %v2596, %v2958
    %v3045 = vsub.f32 %v2597, %v2960
    %v3046 = vsub.f32 %v2598, %v2962
    %v3047 = vsub.f32 %v2599, %v2964
    %v3048 = vsub.f32 %v2600, %v2966
    %v3049 = vsub.f32 %v2601, %v2968
    %v3050 = vsub.f32 %v2602, %v2970
    %v3051 = vsub.f32 %v2603, %v2972
    %v3052 = vsub.f32 %v2604, %v2974
    %v3053 = vsub.f32 %v2605, %v2976
    %v3054 = vsub.f32 %v2606, %v2978
    %v3055 = vsub.f32 %v2607, %v2980
    %v3056 = vsub.f32 %v2608, %v2982
    %v3057 = vsub.f32 %v2609, %v2984
    %v3058 = vsub.f32 %v2610, %v2986
    %v3059 = vsub.f32 %v2611, %v2988
    %v3060 = vsub.f32 %v2612, %v2990
    %v3061 = vsub.f32 %v2613, %v2992
    %v3062 = vsub.f32 %v2614, %v2994
    %v3063 = vsub.f32 %v2615, %v2996
    %v3064 = vsub.f32 %v2616, %v2998
    %v3065 = vsub.f32 %v2617, %v3000
    %v3066 = vsub.f32 %v2618, %v3002
    %3067 = vst [vmem:[%s4] sm:$0xff] %v3003
    %3068 = vst [vmem:[%s4 + $0x8] sm:$0xff] %v3004
    %3069 = vst [vmem:[%s4 + $0x10] sm:$0xff] %v3005
    %3070 = vst [vmem:[%s4 + $0x18] sm:$0xff] %v3006
    %3071 = vst [vmem:[%s4 + $0x20] sm:$0xff] %v3007
    %3072 = vst [vmem:[%s4 + $0x28] sm:$0xff] %v3008
    %3073 = vst [vmem:[%s4 + $0x30] sm:$0xff] %v3009
    %3074 = vst [vmem:[%s4 + $0x38] sm:$0xff] %v3010
    %3075 = vst [vmem:[%s4 + $0x40] sm:$0xff] %v3011
    %3076 = vst [vmem:[%s4 + $0x48] sm:$0xff] %v3012
    %3077 = vst [vmem:[%s4 + $0x50] sm:$0xff] %v3013
    %3078 = vst [vmem:[%s4 + $0x58] sm:$0xff] %v3014
    %3079 = vst [vmem:[%s4 + $0x60] sm:$0xff] %v3015
    %3080 = vst [vmem:[%s4 + $0x68] sm:$0xff] %v3016
    %3081 = vst [vmem:[%s4 + $0x70] sm:$0xff] %v3017
    %3082 = vst [vmem:[%s4 + $0x78] sm:$0xff] %v3018
    %3083 = vst [vmem:[%s4 + $0x80] sm:$0xff] %v3019
    %3084 = vst [vmem:[%s4 + $0x88] sm:$0xff] %v3020
    %3085 = vst [vmem:[%s4 + $0x90] sm:$0xff] %v3021
    %3086 = vst [vmem:[%s4 + $0x98] sm:$0xff] %v3022
    %3087 = vst [vmem:[%s4 + $0xa0] sm:$0xff] %v3023
    %3088 = vst [vmem:[%s4 + $0xa8] sm:$0xff] %v3024
    %3089 = vst [vmem:[%s4 + $0xb0] sm:$0xff] %v3025
    %3090 = vst [vmem:[%s4 + $0xb8] sm:$0xff] %v3026
    %3091 = vst [vmem:[%s4 + $0xc0] sm:$0xff] %v3027
    %3092 = vst [vmem:[%s4 + $0xc8] sm:$0xff] %v3028
    %3093 = vst [vmem:[%s4 + $0xd0] sm:$0xff] %v3029
    %3094 = vst [vmem:[%s4 + $0xd8] sm:$0xff] %v3030
    %3095 = vst [vmem:[%s4 + $0xe0] sm:$0xff] %v3031
    %3096 = vst [vmem:[%s4 + $0xe8] sm:$0xff] %v3032
    %3097 = vst [vmem:[%s4 + $0xf0] sm:$0xff] %v3033
    %3098 = vst [vmem:[%s4 + $0xf8] sm:$0xff] %v3034
    %3099 = vst [vmem:[%s4 + $0x100] sm:$0xff] %v3035
    %3100 = vst [vmem:[%s4 + $0x108] sm:$0xff] %v3036
    %3101 = vst [vmem:[%s4 + $0x110] sm:$0xff] %v3037
    %3102 = vst [vmem:[%s4 + $0x118] sm:$0xff] %v3038
    %3103 = vst [vmem:[%s4 + $0x120] sm:$0xff] %v3039
    %3104 = vst [vmem:[%s4 + $0x128] sm:$0xff] %v3040
    %3105 = vst [vmem:[%s4 + $0x130] sm:$0xff] %v3041
    %3106 = vst [vmem:[%s4 + $0x138] sm:$0xff] %v3042
    %3107 = vst [vmem:[%s4 + $0x140] sm:$0xff] %v3043
    %3108 = vst [vmem:[%s4 + $0x148] sm:$0xff] %v3044
    %3109 = vst [vmem:[%s4 + $0x150] sm:$0xff] %v3045
    %3110 = vst [vmem:[%s4 + $0x158] sm:$0xff] %v3046
    %3111 = vst [vmem:[%s4 + $0x160] sm:$0xff] %v3047
    %3112 = vst [vmem:[%s4 + $0x168] sm:$0xff] %v3048
    %3113 = vst [vmem:[%s4 + $0x170] sm:$0xff] %v3049
    %3114 = vst [vmem:[%s4 + $0x178] sm:$0xff] %v3050
    %3115 = vst [vmem:[%s4 + $0x180] sm:$0xff] %v3051
    %3116 = vst [vmem:[%s4 + $0x188] sm:$0xff] %v3052
    %3117 = vst [vmem:[%s4 + $0x190] sm:$0xff] %v3053
    %3118 = vst [vmem:[%s4 + $0x198] sm:$0xff] %v3054
    %3119 = vst [vmem:[%s4 + $0x1a0] sm:$0xff] %v3055
    %3120 = vst [vmem:[%s4 + $0x1a8] sm:$0xff] %v3056
    %3121 = vst [vmem:[%s4 + $0x1b0] sm:$0xff] %v3057
    %3122 = vst [vmem:[%s4 + $0x1b8] sm:$0xff] %v3058
    %3123 = vst [vmem:[%s4 + $0x1c0] sm:$0xff] %v3059
    %3124 = vst [vmem:[%s4 + $0x1c8] sm:$0xff] %v3060
    %3125 = vst [vmem:[%s4 + $0x1d0] sm:$0xff] %v3061
    %3126 = vst [vmem:[%s4 + $0x1d8] sm:$0xff] %v3062
    %3127 = vst [vmem:[%s4 + $0x1e0] sm:$0xff] %v3063
    %3128 = vst [vmem:[%s4 + $0x1e8] sm:$0xff] %v3064
    %3129 = vst [vmem:[%s4 + $0x1f0] sm:$0xff] %v3065
    %3130 = vst [vmem:[%s4 + $0x1f8] sm:$0xff] %v3066
  $region25: #{gcn_rand_labeled_forward.5} parent=0 // pred_fallthru
    _
  // Predicated region
  $region26: #{gcn_rand_labeled_forward.5} parent=0 // pred_check
    _
  $region27: #{gcn_rand_labeled_forward.5} parent=0 // pred_check_branch
    %3132 = sbr.rel (0) target = $region29
  $region28: #{gcn_rand_labeled_forward.5} parent=0 // pred_region
    _
  $region29: #{gcn_rand_labeled_forward.5} parent=0 // pred_fallthru
    _
  // Predicated region
  $region30: #{gcn_rand_labeled_forward.5} parent=0 // pred_check
    _
  $region31: #{gcn_rand_labeled_forward.5} parent=0 // pred_check_branch
    %3134 = sbr.rel (0) target = $region33
  $region32: #{gcn_rand_labeled_forward.5} parent=0 // pred_region
    _
  $region33: #{gcn_rand_labeled_forward.5} parent=0 // pred_fallthru
    _

</llo_original>
